<compile_context>
chip_gen: v7x
topology: tpu7x:2x2x1
jax: 0.10.0
libtpu: 0.0.40
codegen_flags: <defaults>
</compile_context>

<pallas_src>
import jax
import jax.numpy as jnp
from jax import lax
from jax.experimental import pallas as pl
from jax.experimental.pallas import tpu as pltpu

C_OUT = 6
KH = KW = 3
H_IN = W_IN = 32                      # 32x32 input so that 6*15*15 == 1350
H_CONV = W_CONV = H_IN - KH + 1       # 30
H_POOL = W_POOL = H_CONV // 2         # 15
FC_IN = C_OUT * H_POOL * W_POOL       # 1350
FC_OUT = 10
FC_OUT_PAD = 16                       # FC rows padded 10 -> 16 (unmasked stores)
Q_PAD = 16                            # pooled q-dim padded 15 -> 16 (tile aligned)
FC_IN_PAD = C_OUT * H_POOL * Q_PAD    # 1440
LANE = 128


def _round_up(v, m):
    return ((v + m - 1) // m) * m


def _compute_dtype():
    """bf16 on chips with a bf16 VALU (v6e / v7x); f32 everywhere else (always safe)."""
    try:
        kind = jax.devices()[0].device_kind.lower()
    except Exception:
        return jnp.float32
    if any(tag in kind for tag in ("v6", "v7", "7x", "trillium")):
        return jnp.bfloat16
    return jnp.float32


_CDT = _compute_dtype()


def _cvec(scalar_f32, dt):
    """Lift an f32 SMEM scalar into the compute dtype.

    For bf16 the convert happens on a (1,1) vector value (broadcast the f32 scalar,
    then vector-truncate) so no sub-32-bit scalar types hit the scalar path.
    """
    if dt == jnp.float32:
        return scalar_f32
    return jnp.full((1, 1), scalar_f32, jnp.float32).astype(dt)


def net_kernel(xs_ref, cw_ref, cb_ref, fw_ref, fb_ref, o_ref, act_ref):
    """Fused conv(1->6,3x3) + ReLU + maxpool(2,2) + Linear(1350,10) for one batch block.

    xs_ref : VMEM (8, 16, 16, B) cdt   pre-shifted parity grids:
                                       xs[r*4+t, m, q, b] = img[b, 2m+r, 2q+t]
                                       (zero-padded where 2q+t >= 32)
    cw_ref : SMEM (54,) f32            conv weights flattened as [c*9 + ki*3 + kj]
    cb_ref : SMEM (6,)  f32            conv bias
    fw_ref : VMEM (16, 1440) cdt       FC weight, columns at (c*15+p)*16+q (zero q==15),
                                       rows 10..15 zero
    fb_ref : VMEM (16, 1) f32          FC bias (rows 10..15 zero)
    o_ref  : VMEM (16, B) f32          transposed output block (batch on lanes)
    act_ref: VMEM (1440, B) cdt        pooled activations (feature sublanes / batch lanes)
    """
    cdt = act_ref.dtype

    def row_body(p, carry):
        # Parity-grid rows needed for pooled row p: m = p (oi=0) and m = p+1 (oi=1).
        m_of = (p, p + 1)
        for c in range(C_OUT):
            w = [_cvec(cw_ref[c * KH * KW + t], cdt) for t in range(KH * KW)]
            b = _cvec(cb_ref[c], cdt)
            pooled = None
            # Conv value at (2p+dp, 2q+dq); max over the 4 parities == 2x2 s2 max-pool.
            for dp in range(2):
                for dq in range(2):
                    acc = None
                    for ki in range(KH):
                        r = (dp + ki) % 2
                        m = m_of[(dp + ki) // 2]
                        for kj in range(KW):
                            g = r * 4 + (dq + kj)
                            # load at point of use -> low register pressure, no spills
                            term = xs_ref[g, m, :, :] * w[ki * KW + kj]
                            acc = term if acc is None else acc + term
                    pooled = acc if pooled is None else jnp.maximum(pooled, acc)
            # bias + ReLU (ReLU commutes with max; the post-pool ReLU is a no-op).
            pooled = jnp.maximum(pooled + b, 0.0)                   # (16, B); q==15 is
            # finite garbage killed by the zero FC-weight column -> no init needed.
            row0 = pl.multiple_of((c * H_POOL + p) * Q_PAD, Q_PAD)
            act_ref[pl.ds(row0, Q_PAD), :] = pooled.astype(cdt)     # aligned, unmasked
        return carry

    lax.fori_loop(0, H_POOL, row_body, 0)

    # Fully-connected layer on the MXU: (16,1440) @ (1440,B) + bias -> (16,B) f32.
    o_ref[...] = (
        jnp.dot(fw_ref[...], act_ref[...], preferred_element_type=jnp.float32)
        + fb_ref[...]
    )


@jax.jit
def net_forward(x, conv_w, conv_b, fc_w, fc_b):
    """x: (N, 1, 32, 32) NCHW float32, like the PyTorch module. Returns (N, 10) f32."""
    n = x.shape[0]
    cdt = _CDT

    # Batch (lane) block: 256 lanes when possible (2x amortization vs 128, fits the
    # vreg file and v5e's scoped VMEM); n >= 512 keeps >= 2 grid steps for megacore.
    if n < LANE:
        b_blk = _round_up(max(n, 1), 8)
    elif n < 2 * LANE:
        b_blk = LANE
    else:
        b_blk = 2 * LANE
    n_pad = _round_up(n, b_blk)

    x2 = x[:, 0, :, :].astype(cdt)                                  # (N, 32, 32)
    if n_pad != n:
        x2 = jnp.pad(x2, ((0, n_pad - n), (0, 0), (0, 0)))

    # 8 pre-shifted parity grids, batch-last:
    #   xs[r*4 + t, m, q, b] = img[b, 2m + r, 2q + t]   (zero where 2q+t >= 32)
    x2p = jnp.pad(x2, ((0, 0), (0, 0), (0, 2)))                     # (N, 32, 34)
    sh = jnp.stack([x2p[:, :, t:t + 31:2] for t in range(4)], axis=0)   # (4, N, 32, 16)
    xs = (sh.reshape(4, n_pad, H_IN // 2, 2, W_IN // 2)
            .transpose(3, 0, 2, 4, 1)                               # (r, t, m, q, b)
            .reshape(8, H_IN // 2, W_IN // 2, n_pad))

    # FC weight in the kernel's activation layout: col = (c*15+p)*16 + q, zero column
    # at q == 15, rows padded 10 -> 16.  Matches torch's x.view(N,-1) flatten order.
    fw_pad = jnp.pad(
        fc_w.astype(jnp.float32).reshape(FC_OUT, C_OUT, H_POOL, W_POOL),
        ((0, FC_OUT_PAD - FC_OUT), (0, 0), (0, 0), (0, 1)),
    ).reshape(FC_OUT_PAD, FC_IN_PAD).astype(cdt)
    fb_pad = jnp.pad(fc_b.astype(jnp.float32).reshape(FC_OUT, 1),
                     ((0, FC_OUT_PAD - FC_OUT), (0, 0)))

    item = jnp.dtype(cdt).itemsize
    flops = (2 * KH * KW * 4 * C_OUT * H_POOL * W_POOL
             + 2 * FC_OUT_PAD * FC_IN_PAD) * n_pad
    bytes_accessed = (8 * (H_IN // 2) * (W_IN // 2) * n_pad * item
                      + FC_OUT_PAD * FC_IN_PAD * item
                      + FC_OUT_PAD * n_pad * 4)

    out_t = pl.pallas_call(
        net_kernel,
        out_shape=jax.ShapeDtypeStruct((FC_OUT_PAD, n_pad), jnp.float32),
        grid=(n_pad // b_blk,),
        in_specs=[
            pl.BlockSpec((8, H_IN // 2, W_IN // 2, b_blk), lambda i: (0, 0, 0, i)),
            pl.BlockSpec(memory_space=pltpu.MemorySpace.SMEM),      # conv weights (54,)
            pl.BlockSpec(memory_space=pltpu.MemorySpace.SMEM),      # conv bias (6,)
            pl.BlockSpec((FC_OUT_PAD, FC_IN_PAD), lambda i: (0, 0)),  # FC weight
            pl.BlockSpec((FC_OUT_PAD, 1), lambda i: (0, 0)),          # FC bias
        ],
        out_specs=pl.BlockSpec((FC_OUT_PAD, b_blk), lambda i: (0, i)),
        scratch_shapes=[pltpu.VMEM((FC_IN_PAD, b_blk), cdt)],
        compiler_params=pltpu.CompilerParams(dimension_semantics=("parallel",)),
        cost_estimate=pl.CostEstimate(flops=flops, transcendentals=0,
                                      bytes_accessed=bytes_accessed),
    )(xs,
      conv_w.reshape(-1).astype(jnp.float32),
      conv_b.astype(jnp.float32),
      fw_pad,
      fb_pad)

    return out_t[:FC_OUT, :n].T                                     # (N, 10)


def reference_forward(x, conv_w, conv_b, fc_w, fc_b):
    """Pure-JAX f32 reference matching the PyTorch module."""
    y = jax.lax.conv_general_dilated(
        x.astype(jnp.float32), conv_w.astype(jnp.float32),
        window_strides=(1, 1), padding="VALID",
        dimension_numbers=("NCHW", "OIHW", "NCHW"))
    y = jnp.maximum(y + conv_b.reshape(1, C_OUT, 1, 1), 0.0)
    y = jax.lax.reduce_window(y, -jnp.inf, jax.lax.max,
                              (1, 1, 2, 2), (1, 1, 2, 2), "VALID")
    y = jnp.maximum(y, 0.0)
    flat = y.reshape(x.shape[0], -1)
    return flat @ fc_w.T.astype(jnp.float32) + fc_b.astype(jnp.float32)


if __name__ == "__main__":
    key = jax.random.PRNGKey(0)
    k1, k2, k3, k4, k5 = jax.random.split(key, 5)

    N = 2
    x = jax.random.normal(k1, (N, 1, H_IN, W_IN), dtype=jnp.float32)

    # Deterministic parameter init (PyTorch-style uniform(-1/sqrt(fan_in), ...)).
    conv_bound = 1.0 / (1 * KH * KW) ** 0.5
    conv_w = jax.random.uniform(k2, (C_OUT, 1, KH, KW), jnp.float32,
                                -conv_bound, conv_bound)
    conv_b = jax.random.uniform(k3, (C_OUT,), jnp.float32, -conv_bound, conv_bound)

    fc_bound = 1.0 / FC_IN ** 0.5
    fc_w = jax.random.uniform(k4, (FC_OUT, FC_IN), jnp.float32, -fc_bound, fc_bound)
    fc_b = jax.random.uniform(k5, (FC_OUT,), jnp.float32, -fc_bound, fc_bound)

    out = net_forward(x, conv_w, conv_b, fc_w, fc_b)
    jax.block_until_ready(out)
    assert out.shape == (N, FC_OUT) and out.dtype == jnp.float32

    ref = reference_forward(x, conv_w, conv_b, fc_w, fc_b)
    max_err = float(jnp.max(jnp.abs(out - ref)))
    # bf16 internal compute (v6e/v7x) is compared against the exact f32 reference.
    tol = 5e-2 if _CDT == jnp.bfloat16 else 1e-3
    assert max_err < tol, f"mismatch vs reference, max abs err = {max_err}"

    print("KERNEL_OK")
</pallas_src>

<mosaic_0001>
module attributes {stable_mosaic.version = 11 : i64} {
  func.func @net_kernel(%arg0: i32, %arg1: memref<8x16x16x8xf32, #tpu.memory_space<vmem>>, %arg2: memref<54xf32, #tpu.memory_space<smem>>, %arg3: memref<6xf32, #tpu.memory_space<smem>>, %arg4: memref<16x1440xf32, #tpu.memory_space<vmem>>, %arg5: memref<16x1xf32, #tpu.memory_space<vmem>>, %arg6: memref<16x8xf32, #tpu.memory_space<vmem>>, %arg7: memref<1440x8xf32, #tpu.memory_space<vmem>>) attributes {dimension_semantics = [#tpu.dimension_semantics<parallel>], iteration_bounds = array<i64: 1>, scalar_prefetch = 0 : i64, scratch_operands = 1 : i64, tpu.core_type = #tpu.core_type<tc>, window_params = [{transform_indices = @transform_0, window_bounds = array<i64: 8, 16, 16, 8>}, {transform_indices = @transform_1, window_bounds = array<i64: 54>}, {transform_indices = @transform_2, window_bounds = array<i64: 6>}, {pipeline_mode = #tpu.pipeline_mode<synchronous>, transform_indices = @transform_3, window_bounds = array<i64: 16, 1440>}, {pipeline_mode = #tpu.pipeline_mode<synchronous>, transform_indices = @transform_4, window_bounds = array<i64: 16, 1>}, {transform_indices = @transform_5, window_bounds = array<i64: 16, 8>}]} {
    %c0_i32 = arith.constant 0 : i32
    %c15_i32 = arith.constant 15 : i32
    %0 = arith.addi %c0_i32, %c15_i32 : i32
    %c1_i32 = arith.constant 1 : i32
    scf.for %arg8 = %c0_i32 to %0 step %c1_i32  : i32 {
      %c1_i32_8 = arith.constant 1 : i32
      %8 = arith.addi %arg8, %c1_i32_8 : i32
      %c0_9 = arith.constant 0 : index
      %9 = memref.load %arg2[%c0_9] : memref<54xf32, #tpu.memory_space<smem>>
      %c1 = arith.constant 1 : index
      %10 = memref.load %arg2[%c1] : memref<54xf32, #tpu.memory_space<smem>>
      %c2 = arith.constant 2 : index
      %11 = memref.load %arg2[%c2] : memref<54xf32, #tpu.memory_space<smem>>
      %c3 = arith.constant 3 : index
      %12 = memref.load %arg2[%c3] : memref<54xf32, #tpu.memory_space<smem>>
      %c4 = arith.constant 4 : index
      %13 = memref.load %arg2[%c4] : memref<54xf32, #tpu.memory_space<smem>>
      %c5 = arith.constant 5 : index
      %14 = memref.load %arg2[%c5] : memref<54xf32, #tpu.memory_space<smem>>
      %c6 = arith.constant 6 : index
      %15 = memref.load %arg2[%c6] : memref<54xf32, #tpu.memory_space<smem>>
      %c7 = arith.constant 7 : index
      %16 = memref.load %arg2[%c7] : memref<54xf32, #tpu.memory_space<smem>>
      %c8 = arith.constant 8 : index
      %17 = memref.load %arg2[%c8] : memref<54xf32, #tpu.memory_space<smem>>
      %c0_10 = arith.constant 0 : index
      %18 = memref.load %arg3[%c0_10] : memref<6xf32, #tpu.memory_space<smem>>
      %c0_11 = arith.constant 0 : index
      %19 = arith.index_cast %arg8 : i32 to index
      %c0_12 = arith.constant 0 : index
      %c0_13 = arith.constant 0 : index
      %20 = vector.load %arg1[%c0_11, %19, %c0_12, %c0_13] : memref<8x16x16x8xf32, #tpu.memory_space<vmem>>, vector<1x1x16x8xf32>
      %21 = vector.shape_cast %20 : vector<1x1x16x8xf32> to vector<16x8xf32>
      %22 = vector.broadcast %9 : f32 to vector<16x8xf32>
      %23 = arith.mulf %21, %22 : vector<16x8xf32>
      %c1_14 = arith.constant 1 : index
      %24 = arith.index_cast %arg8 : i32 to index
      %c0_15 = arith.constant 0 : index
      %c0_16 = arith.constant 0 : index
      %25 = vector.load %arg1[%c1_14, %24, %c0_15, %c0_16] : memref<8x16x16x8xf32, #tpu.memory_space<vmem>>, vector<1x1x16x8xf32>
      %26 = vector.shape_cast %25 : vector<1x1x16x8xf32> to vector<16x8xf32>
      %27 = vector.broadcast %10 : f32 to vector<16x8xf32>
      %28 = arith.mulf %26, %27 : vector<16x8xf32>
      %29 = arith.addf %23, %28 : vector<16x8xf32>
      %c2_17 = arith.constant 2 : index
      %30 = arith.index_cast %arg8 : i32 to index
      %c0_18 = arith.constant 0 : index
      %c0_19 = arith.constant 0 : index
      %31 = vector.load %arg1[%c2_17, %30, %c0_18, %c0_19] : memref<8x16x16x8xf32, #tpu.memory_space<vmem>>, vector<1x1x16x8xf32>
      %32 = vector.shape_cast %31 : vector<1x1x16x8xf32> to vector<16x8xf32>
      %33 = vector.broadcast %11 : f32 to vector<16x8xf32>
      %34 = arith.mulf %32, %33 : vector<16x8xf32>
      %35 = arith.addf %29, %34 : vector<16x8xf32>
      %c4_20 = arith.constant 4 : index
      %36 = arith.index_cast %arg8 : i32 to index
      %c0_21 = arith.constant 0 : index
      %c0_22 = arith.constant 0 : index
      %37 = vector.load %arg1[%c4_20, %36, %c0_21, %c0_22] : memref<8x16x16x8xf32, #tpu.memory_space<vmem>>, vector<1x1x16x8xf32>
      %38 = vector.shape_cast %37 : vector<1x1x16x8xf32> to vector<16x8xf32>
      %39 = vector.broadcast %12 : f32 to vector<16x8xf32>
      %40 = arith.mulf %38, %39 : vector<16x8xf32>
      %41 = arith.addf %35, %40 : vector<16x8xf32>
      %c5_23 = arith.constant 5 : index
      %42 = arith.index_cast %arg8 : i32 to index
      %c0_24 = arith.constant 0 : index
      %c0_25 = arith.constant 0 : index
      %43 = vector.load %arg1[%c5_23, %42, %c0_24, %c0_25] : memref<8x16x16x8xf32, #tpu.memory_space<vmem>>, vector<1x1x16x8xf32>
      %44 = vector.shape_cast %43 : vector<1x1x16x8xf32> to vector<16x8xf32>
      %45 = vector.broadcast %13 : f32 to vector<16x8xf32>
      %46 = arith.mulf %44, %45 : vector<16x8xf32>
      %47 = arith.addf %41, %46 : vector<16x8xf32>
      %c6_26 = arith.constant 6 : index
      %48 = arith.index_cast %arg8 : i32 to index
      %c0_27 = arith.constant 0 : index
      %c0_28 = arith.constant 0 : index
      %49 = vector.load %arg1[%c6_26, %48, %c0_27, %c0_28] : memref<8x16x16x8xf32, #tpu.memory_space<vmem>>, vector<1x1x16x8xf32>
      %50 = vector.shape_cast %49 : vector<1x1x16x8xf32> to vector<16x8xf32>
      %51 = vector.broadcast %14 : f32 to vector<16x8xf32>
      %52 = arith.mulf %50, %51 : vector<16x8xf32>
      %53 = arith.addf %47, %52 : vector<16x8xf32>
      %c0_29 = arith.constant 0 : index
      %54 = arith.index_cast %8 : i32 to index
      %c0_30 = arith.constant 0 : index
      %c0_31 = arith.constant 0 : index
      %55 = vector.load %arg1[%c0_29, %54, %c0_30, %c0_31] : memref<8x16x16x8xf32, #tpu.memory_space<vmem>>, vector<1x1x16x8xf32>
      %56 = vector.shape_cast %55 : vector<1x1x16x8xf32> to vector<16x8xf32>
      %57 = vector.broadcast %15 : f32 to vector<16x8xf32>
      %58 = arith.mulf %56, %57 : vector<16x8xf32>
      %59 = arith.addf %53, %58 : vector<16x8xf32>
      %c1_32 = arith.constant 1 : index
      %60 = arith.index_cast %8 : i32 to index
      %c0_33 = arith.constant 0 : index
      %c0_34 = arith.constant 0 : index
      %61 = vector.load %arg1[%c1_32, %60, %c0_33, %c0_34] : memref<8x16x16x8xf32, #tpu.memory_space<vmem>>, vector<1x1x16x8xf32>
      %62 = vector.shape_cast %61 : vector<1x1x16x8xf32> to vector<16x8xf32>
      %63 = vector.broadcast %16 : f32 to vector<16x8xf32>
      %64 = arith.mulf %62, %63 : vector<16x8xf32>
      %65 = arith.addf %59, %64 : vector<16x8xf32>
      %c2_35 = arith.constant 2 : index
      %66 = arith.index_cast %8 : i32 to index
      %c0_36 = arith.constant 0 : index
      %c0_37 = arith.constant 0 : index
      %67 = vector.load %arg1[%c2_35, %66, %c0_36, %c0_37] : memref<8x16x16x8xf32, #tpu.memory_space<vmem>>, vector<1x1x16x8xf32>
      %68 = vector.shape_cast %67 : vector<1x1x16x8xf32> to vector<16x8xf32>
      %69 = vector.broadcast %17 : f32 to vector<16x8xf32>
      %70 = arith.mulf %68, %69 : vector<16x8xf32>
      %71 = arith.addf %65, %70 : vector<16x8xf32>
      %c1_38 = arith.constant 1 : index
      %72 = arith.index_cast %arg8 : i32 to index
      %c0_39 = arith.constant 0 : index
      %c0_40 = arith.constant 0 : index
      %73 = vector.load %arg1[%c1_38, %72, %c0_39, %c0_40] : memref<8x16x16x8xf32, #tpu.memory_space<vmem>>, vector<1x1x16x8xf32>
      %74 = vector.shape_cast %73 : vector<1x1x16x8xf32> to vector<16x8xf32>
      %75 = vector.broadcast %9 : f32 to vector<16x8xf32>
      %76 = arith.mulf %74, %75 : vector<16x8xf32>
      %c2_41 = arith.constant 2 : index
      %77 = arith.index_cast %arg8 : i32 to index
      %c0_42 = arith.constant 0 : index
      %c0_43 = arith.constant 0 : index
      %78 = vector.load %arg1[%c2_41, %77, %c0_42, %c0_43] : memref<8x16x16x8xf32, #tpu.memory_space<vmem>>, vector<1x1x16x8xf32>
      %79 = vector.shape_cast %78 : vector<1x1x16x8xf32> to vector<16x8xf32>
      %80 = vector.broadcast %10 : f32 to vector<16x8xf32>
      %81 = arith.mulf %79, %80 : vector<16x8xf32>
      %82 = arith.addf %76, %81 : vector<16x8xf32>
      %c3_44 = arith.constant 3 : index
      %83 = arith.index_cast %arg8 : i32 to index
      %c0_45 = arith.constant 0 : index
      %c0_46 = arith.constant 0 : index
      %84 = vector.load %arg1[%c3_44, %83, %c0_45, %c0_46] : memref<8x16x16x8xf32, #tpu.memory_space<vmem>>, vector<1x1x16x8xf32>
      %85 = vector.shape_cast %84 : vector<1x1x16x8xf32> to vector<16x8xf32>
      %86 = vector.broadcast %11 : f32 to vector<16x8xf32>
      %87 = arith.mulf %85, %86 : vector<16x8xf32>
      %88 = arith.addf %82, %87 : vector<16x8xf32>
      %c5_47 = arith.constant 5 : index
      %89 = arith.index_cast %arg8 : i32 to index
      %c0_48 = arith.constant 0 : index
      %c0_49 = arith.constant 0 : index
      %90 = vector.load %arg1[%c5_47, %89, %c0_48, %c0_49] : memref<8x16x16x8xf32, #tpu.memory_space<vmem>>, vector<1x1x16x8xf32>
      %91 = vector.shape_cast %90 : vector<1x1x16x8xf32> to vector<16x8xf32>
      %92 = vector.broadcast %12 : f32 to vector<16x8xf32>
      %93 = arith.mulf %91, %92 : vector<16x8xf32>
      %94 = arith.addf %88, %93 : vector<16x8xf32>
      %c6_50 = arith.constant 6 : index
      %95 = arith.index_cast %arg8 : i32 to index
      %c0_51 = arith.constant 0 : index
      %c0_52 = arith.constant 0 : index
      %96 = vector.load %arg1[%c6_50, %95, %c0_51, %c0_52] : memref<8x16x16x8xf32, #tpu.memory_space<vmem>>, vector<1x1x16x8xf32>
      %97 = vector.shape_cast %96 : vector<1x1x16x8xf32> to vector<16x8xf32>
      %98 = vector.broadcast %13 : f32 to vector<16x8xf32>
      %99 = arith.mulf %97, %98 : vector<16x8xf32>
      %100 = arith.addf %94, %99 : vector<16x8xf32>
      %c7_53 = arith.constant 7 : index
      %101 = arith.index_cast %arg8 : i32 to index
      %c0_54 = arith.constant 0 : index
      %c0_55 = arith.constant 0 : index
      %102 = vector.load %arg1[%c7_53, %101, %c0_54, %c0_55] : memref<8x16x16x8xf32, #tpu.memory_space<vmem>>, vector<1x1x16x8xf32>
      %103 = vector.shape_cast %102 : vector<1x1x16x8xf32> to vector<16x8xf32>
      %104 = vector.broadcast %14 : f32 to vector<16x8xf32>
      %105 = arith.mulf %103, %104 : vector<16x8xf32>
      %106 = arith.addf %100, %105 : vector<16x8xf32>
      %c1_56 = arith.constant 1 : index
      %107 = arith.index_cast %8 : i32 to index
      %c0_57 = arith.constant 0 : index
      %c0_58 = arith.constant 0 : index
      %108 = vector.load %arg1[%c1_56, %107, %c0_57, %c0_58] : memref<8x16x16x8xf32, #tpu.memory_space<vmem>>, vector<1x1x16x8xf32>
      %109 = vector.shape_cast %108 : vector<1x1x16x8xf32> to vector<16x8xf32>
      %110 = vector.broadcast %15 : f32 to vector<16x8xf32>
      %111 = arith.mulf %109, %110 : vector<16x8xf32>
      %112 = arith.addf %106, %111 : vector<16x8xf32>
      %c2_59 = arith.constant 2 : index
      %113 = arith.index_cast %8 : i32 to index
      %c0_60 = arith.constant 0 : index
      %c0_61 = arith.constant 0 : index
      %114 = vector.load %arg1[%c2_59, %113, %c0_60, %c0_61] : memref<8x16x16x8xf32, #tpu.memory_space<vmem>>, vector<1x1x16x8xf32>
      %115 = vector.shape_cast %114 : vector<1x1x16x8xf32> to vector<16x8xf32>
      %116 = vector.broadcast %16 : f32 to vector<16x8xf32>
      %117 = arith.mulf %115, %116 : vector<16x8xf32>
      %118 = arith.addf %112, %117 : vector<16x8xf32>
      %c3_62 = arith.constant 3 : index
      %119 = arith.index_cast %8 : i32 to index
      %c0_63 = arith.constant 0 : index
      %c0_64 = arith.constant 0 : index
      %120 = vector.load %arg1[%c3_62, %119, %c0_63, %c0_64] : memref<8x16x16x8xf32, #tpu.memory_space<vmem>>, vector<1x1x16x8xf32>
      %121 = vector.shape_cast %120 : vector<1x1x16x8xf32> to vector<16x8xf32>
      %122 = vector.broadcast %17 : f32 to vector<16x8xf32>
      %123 = arith.mulf %121, %122 : vector<16x8xf32>
      %124 = arith.addf %118, %123 : vector<16x8xf32>
      %125 = arith.maximumf %71, %124 : vector<16x8xf32>
      %c4_65 = arith.constant 4 : index
      %126 = arith.index_cast %arg8 : i32 to index
      %c0_66 = arith.constant 0 : index
      %c0_67 = arith.constant 0 : index
      %127 = vector.load %arg1[%c4_65, %126, %c0_66, %c0_67] : memref<8x16x16x8xf32, #tpu.memory_space<vmem>>, vector<1x1x16x8xf32>
      %128 = vector.shape_cast %127 : vector<1x1x16x8xf32> to vector<16x8xf32>
      %129 = vector.broadcast %9 : f32 to vector<16x8xf32>
      %130 = arith.mulf %128, %129 : vector<16x8xf32>
      %c5_68 = arith.constant 5 : index
      %131 = arith.index_cast %arg8 : i32 to index
      %c0_69 = arith.constant 0 : index
      %c0_70 = arith.constant 0 : index
      %132 = vector.load %arg1[%c5_68, %131, %c0_69, %c0_70] : memref<8x16x16x8xf32, #tpu.memory_space<vmem>>, vector<1x1x16x8xf32>
      %133 = vector.shape_cast %132 : vector<1x1x16x8xf32> to vector<16x8xf32>
      %134 = vector.broadcast %10 : f32 to vector<16x8xf32>
      %135 = arith.mulf %133, %134 : vector<16x8xf32>
      %136 = arith.addf %130, %135 : vector<16x8xf32>
      %c6_71 = arith.constant 6 : index
      %137 = arith.index_cast %arg8 : i32 to index
      %c0_72 = arith.constant 0 : index
      %c0_73 = arith.constant 0 : index
      %138 = vector.load %arg1[%c6_71, %137, %c0_72, %c0_73] : memref<8x16x16x8xf32, #tpu.memory_space<vmem>>, vector<1x1x16x8xf32>
      %139 = vector.shape_cast %138 : vector<1x1x16x8xf32> to vector<16x8xf32>
      %140 = vector.broadcast %11 : f32 to vector<16x8xf32>
      %141 = arith.mulf %139, %140 : vector<16x8xf32>
      %142 = arith.addf %136, %141 : vector<16x8xf32>
      %c0_74 = arith.constant 0 : index
      %143 = arith.index_cast %8 : i32 to index
      %c0_75 = arith.constant 0 : index
      %c0_76 = arith.constant 0 : index
      %144 = vector.load %arg1[%c0_74, %143, %c0_75, %c0_76] : memref<8x16x16x8xf32, #tpu.memory_space<vmem>>, vector<1x1x16x8xf32>
      %145 = vector.shape_cast %144 : vector<1x1x16x8xf32> to vector<16x8xf32>
      %146 = vector.broadcast %12 : f32 to vector<16x8xf32>
      %147 = arith.mulf %145, %146 : vector<16x8xf32>
      %148 = arith.addf %142, %147 : vector<16x8xf32>
      %c1_77 = arith.constant 1 : index
      %149 = arith.index_cast %8 : i32 to index
      %c0_78 = arith.constant 0 : index
      %c0_79 = arith.constant 0 : index
      %150 = vector.load %arg1[%c1_77, %149, %c0_78, %c0_79] : memref<8x16x16x8xf32, #tpu.memory_space<vmem>>, vector<1x1x16x8xf32>
      %151 = vector.shape_cast %150 : vector<1x1x16x8xf32> to vector<16x8xf32>
      %152 = vector.broadcast %13 : f32 to vector<16x8xf32>
      %153 = arith.mulf %151, %152 : vector<16x8xf32>
      %154 = arith.addf %148, %153 : vector<16x8xf32>
      %c2_80 = arith.constant 2 : index
      %155 = arith.index_cast %8 : i32 to index
      %c0_81 = arith.constant 0 : index
      %c0_82 = arith.constant 0 : index
      %156 = vector.load %arg1[%c2_80, %155, %c0_81, %c0_82] : memref<8x16x16x8xf32, #tpu.memory_space<vmem>>, vector<1x1x16x8xf32>
      %157 = vector.shape_cast %156 : vector<1x1x16x8xf32> to vector<16x8xf32>
      %158 = vector.broadcast %14 : f32 to vector<16x8xf32>
      %159 = arith.mulf %157, %158 : vector<16x8xf32>
      %160 = arith.addf %154, %159 : vector<16x8xf32>
      %c4_83 = arith.constant 4 : index
      %161 = arith.index_cast %8 : i32 to index
      %c0_84 = arith.constant 0 : index
      %c0_85 = arith.constant 0 : index
      %162 = vector.load %arg1[%c4_83, %161, %c0_84, %c0_85] : memref<8x16x16x8xf32, #tpu.memory_space<vmem>>, vector<1x1x16x8xf32>
      %163 = vector.shape_cast %162 : vector<1x1x16x8xf32> to vector<16x8xf32>
      %164 = vector.broadcast %15 : f32 to vector<16x8xf32>
      %165 = arith.mulf %163, %164 : vector<16x8xf32>
      %166 = arith.addf %160, %165 : vector<16x8xf32>
      %c5_86 = arith.constant 5 : index
      %167 = arith.index_cast %8 : i32 to index
      %c0_87 = arith.constant 0 : index
      %c0_88 = arith.constant 0 : index
      %168 = vector.load %arg1[%c5_86, %167, %c0_87, %c0_88] : memref<8x16x16x8xf32, #tpu.memory_space<vmem>>, vector<1x1x16x8xf32>
      %169 = vector.shape_cast %168 : vector<1x1x16x8xf32> to vector<16x8xf32>
      %170 = vector.broadcast %16 : f32 to vector<16x8xf32>
      %171 = arith.mulf %169, %170 : vector<16x8xf32>
      %172 = arith.addf %166, %171 : vector<16x8xf32>
      %c6_89 = arith.constant 6 : index
      %173 = arith.index_cast %8 : i32 to index
      %c0_90 = arith.constant 0 : index
      %c0_91 = arith.constant 0 : index
      %174 = vector.load %arg1[%c6_89, %173, %c0_90, %c0_91] : memref<8x16x16x8xf32, #tpu.memory_space<vmem>>, vector<1x1x16x8xf32>
      %175 = vector.shape_cast %174 : vector<1x1x16x8xf32> to vector<16x8xf32>
      %176 = vector.broadcast %17 : f32 to vector<16x8xf32>
      %177 = arith.mulf %175, %176 : vector<16x8xf32>
      %178 = arith.addf %172, %177 : vector<16x8xf32>
      %179 = arith.maximumf %125, %178 : vector<16x8xf32>
      %c5_92 = arith.constant 5 : index
      %180 = arith.index_cast %arg8 : i32 to index
      %c0_93 = arith.constant 0 : index
      %c0_94 = arith.constant 0 : index
      %181 = vector.load %arg1[%c5_92, %180, %c0_93, %c0_94] : memref<8x16x16x8xf32, #tpu.memory_space<vmem>>, vector<1x1x16x8xf32>
      %182 = vector.shape_cast %181 : vector<1x1x16x8xf32> to vector<16x8xf32>
      %183 = vector.broadcast %9 : f32 to vector<16x8xf32>
      %184 = arith.mulf %182, %183 : vector<16x8xf32>
      %c6_95 = arith.constant 6 : index
      %185 = arith.index_cast %arg8 : i32 to index
      %c0_96 = arith.constant 0 : index
      %c0_97 = arith.constant 0 : index
      %186 = vector.load %arg1[%c6_95, %185, %c0_96, %c0_97] : memref<8x16x16x8xf32, #tpu.memory_space<vmem>>, vector<1x1x16x8xf32>
      %187 = vector.shape_cast %186 : vector<1x1x16x8xf32> to vector<16x8xf32>
      %188 = vector.broadcast %10 : f32 to vector<16x8xf32>
      %189 = arith.mulf %187, %188 : vector<16x8xf32>
      %190 = arith.addf %184, %189 : vector<16x8xf32>
      %c7_98 = arith.constant 7 : index
      %191 = arith.index_cast %arg8 : i32 to index
      %c0_99 = arith.constant 0 : index
      %c0_100 = arith.constant 0 : index
      %192 = vector.load %arg1[%c7_98, %191, %c0_99, %c0_100] : memref<8x16x16x8xf32, #tpu.memory_space<vmem>>, vector<1x1x16x8xf32>
      %193 = vector.shape_cast %192 : vector<1x1x16x8xf32> to vector<16x8xf32>
      %194 = vector.broadcast %11 : f32 to vector<16x8xf32>
      %195 = arith.mulf %193, %194 : vector<16x8xf32>
      %196 = arith.addf %190, %195 : vector<16x8xf32>
      %c1_101 = arith.constant 1 : index
      %197 = arith.index_cast %8 : i32 to index
      %c0_102 = arith.constant 0 : index
      %c0_103 = arith.constant 0 : index
      %198 = vector.load %arg1[%c1_101, %197, %c0_102, %c0_103] : memref<8x16x16x8xf32, #tpu.memory_space<vmem>>, vector<1x1x16x8xf32>
      %199 = vector.shape_cast %198 : vector<1x1x16x8xf32> to vector<16x8xf32>
      %200 = vector.broadcast %12 : f32 to vector<16x8xf32>
      %201 = arith.mulf %199, %200 : vector<16x8xf32>
      %202 = arith.addf %196, %201 : vector<16x8xf32>
      %c2_104 = arith.constant 2 : index
      %203 = arith.index_cast %8 : i32 to index
      %c0_105 = arith.constant 0 : index
      %c0_106 = arith.constant 0 : index
      %204 = vector.load %arg1[%c2_104, %203, %c0_105, %c0_106] : memref<8x16x16x8xf32, #tpu.memory_space<vmem>>, vector<1x1x16x8xf32>
      %205 = vector.shape_cast %204 : vector<1x1x16x8xf32> to vector<16x8xf32>
      %206 = vector.broadcast %13 : f32 to vector<16x8xf32>
      %207 = arith.mulf %205, %206 : vector<16x8xf32>
      %208 = arith.addf %202, %207 : vector<16x8xf32>
      %c3_107 = arith.constant 3 : index
      %209 = arith.index_cast %8 : i32 to index
      %c0_108 = arith.constant 0 : index
      %c0_109 = arith.constant 0 : index
      %210 = vector.load %arg1[%c3_107, %209, %c0_108, %c0_109] : memref<8x16x16x8xf32, #tpu.memory_space<vmem>>, vector<1x1x16x8xf32>
      %211 = vector.shape_cast %210 : vector<1x1x16x8xf32> to vector<16x8xf32>
      %212 = vector.broadcast %14 : f32 to vector<16x8xf32>
      %213 = arith.mulf %211, %212 : vector<16x8xf32>
      %214 = arith.addf %208, %213 : vector<16x8xf32>
      %c5_110 = arith.constant 5 : index
      %215 = arith.index_cast %8 : i32 to index
      %c0_111 = arith.constant 0 : index
      %c0_112 = arith.constant 0 : index
      %216 = vector.load %arg1[%c5_110, %215, %c0_111, %c0_112] : memref<8x16x16x8xf32, #tpu.memory_space<vmem>>, vector<1x1x16x8xf32>
      %217 = vector.shape_cast %216 : vector<1x1x16x8xf32> to vector<16x8xf32>
      %218 = vector.broadcast %15 : f32 to vector<16x8xf32>
      %219 = arith.mulf %217, %218 : vector<16x8xf32>
      %220 = arith.addf %214, %219 : vector<16x8xf32>
      %c6_113 = arith.constant 6 : index
      %221 = arith.index_cast %8 : i32 to index
      %c0_114 = arith.constant 0 : index
      %c0_115 = arith.constant 0 : index
      %222 = vector.load %arg1[%c6_113, %221, %c0_114, %c0_115] : memref<8x16x16x8xf32, #tpu.memory_space<vmem>>, vector<1x1x16x8xf32>
      %223 = vector.shape_cast %222 : vector<1x1x16x8xf32> to vector<16x8xf32>
      %224 = vector.broadcast %16 : f32 to vector<16x8xf32>
      %225 = arith.mulf %223, %224 : vector<16x8xf32>
      %226 = arith.addf %220, %225 : vector<16x8xf32>
      %c7_116 = arith.constant 7 : index
      %227 = arith.index_cast %8 : i32 to index
      %c0_117 = arith.constant 0 : index
      %c0_118 = arith.constant 0 : index
      %228 = vector.load %arg1[%c7_116, %227, %c0_117, %c0_118] : memref<8x16x16x8xf32, #tpu.memory_space<vmem>>, vector<1x1x16x8xf32>
      %229 = vector.shape_cast %228 : vector<1x1x16x8xf32> to vector<16x8xf32>
      %230 = vector.broadcast %17 : f32 to vector<16x8xf32>
      %231 = arith.mulf %229, %230 : vector<16x8xf32>
      %232 = arith.addf %226, %231 : vector<16x8xf32>
      %233 = arith.maximumf %179, %232 : vector<16x8xf32>
      %234 = vector.broadcast %18 : f32 to vector<16x8xf32>
      %235 = arith.addf %233, %234 : vector<16x8xf32>
      %cst_119 = arith.constant 0.000000e+00 : f32
      %236 = vector.broadcast %cst_119 : f32 to vector<16x8xf32>
      %237 = arith.maximumf %235, %236 : vector<16x8xf32>
      %c0_i32_120 = arith.constant 0 : i32
      %238 = arith.addi %c0_i32_120, %arg8 : i32
      %c16_i32 = arith.constant 16 : i32
      %239 = arith.muli %238, %c16_i32 : i32
      %240 = tpu.assume_multiple %239, 16 : i32
      %241 = arith.index_cast %240 : i32 to index
      %c0_121 = arith.constant 0 : index
      %242 = vector.load %arg7[%241, %c0_121] : memref<1440x8xf32, #tpu.memory_space<vmem>>, vector<16x8xf32>
      tpu.vector_store %arg7[%241, %c0_121], %237 {strides = array<i32>} : memref<1440x8xf32, #tpu.memory_space<vmem>>, vector<16x8xf32>,
      %c9 = arith.constant 9 : index
      %243 = memref.load %arg2[%c9] : memref<54xf32, #tpu.memory_space<smem>>
      %c10 = arith.constant 10 : index
      %244 = memref.load %arg2[%c10] : memref<54xf32, #tpu.memory_space<smem>>
      %c11 = arith.constant 11 : index
      %245 = memref.load %arg2[%c11] : memref<54xf32, #tpu.memory_space<smem>>
      %c12 = arith.constant 12 : index
      %246 = memref.load %arg2[%c12] : memref<54xf32, #tpu.memory_space<smem>>
      %c13 = arith.constant 13 : index
      %247 = memref.load %arg2[%c13] : memref<54xf32, #tpu.memory_space<smem>>
      %c14 = arith.constant 14 : index
      %248 = memref.load %arg2[%c14] : memref<54xf32, #tpu.memory_space<smem>>
      %c15 = arith.constant 15 : index
      %249 = memref.load %arg2[%c15] : memref<54xf32, #tpu.memory_space<smem>>
      %c16 = arith.constant 16 : index
      %250 = memref.load %arg2[%c16] : memref<54xf32, #tpu.memory_space<smem>>
      %c17 = arith.constant 17 : index
      %251 = memref.load %arg2[%c17] : memref<54xf32, #tpu.memory_space<smem>>
      %c1_122 = arith.constant 1 : index
      %252 = memref.load %arg3[%c1_122] : memref<6xf32, #tpu.memory_space<smem>>
      %c0_123 = arith.constant 0 : index
      %253 = arith.index_cast %arg8 : i32 to index
      %c0_124 = arith.constant 0 : index
      %c0_125 = arith.constant 0 : index
      %254 = vector.load %arg1[%c0_123, %253, %c0_124, %c0_125] : memref<8x16x16x8xf32, #tpu.memory_space<vmem>>, vector<1x1x16x8xf32>
      %255 = vector.shape_cast %254 : vector<1x1x16x8xf32> to vector<16x8xf32>
      %256 = vector.broadcast %243 : f32 to vector<16x8xf32>
      %257 = arith.mulf %255, %256 : vector<16x8xf32>
      %c1_126 = arith.constant 1 : index
      %258 = arith.index_cast %arg8 : i32 to index
      %c0_127 = arith.constant 0 : index
      %c0_128 = arith.constant 0 : index
      %259 = vector.load %arg1[%c1_126, %258, %c0_127, %c0_128] : memref<8x16x16x8xf32, #tpu.memory_space<vmem>>, vector<1x1x16x8xf32>
      %260 = vector.shape_cast %259 : vector<1x1x16x8xf32> to vector<16x8xf32>
      %261 = vector.broadcast %244 : f32 to vector<16x8xf32>
      %262 = arith.mulf %260, %261 : vector<16x8xf32>
      %263 = arith.addf %257, %262 : vector<16x8xf32>
      %c2_129 = arith.constant 2 : index
      %264 = arith.index_cast %arg8 : i32 to index
      %c0_130 = arith.constant 0 : index
      %c0_131 = arith.constant 0 : index
      %265 = vector.load %arg1[%c2_129, %264, %c0_130, %c0_131] : memref<8x16x16x8xf32, #tpu.memory_space<vmem>>, vector<1x1x16x8xf32>
      %266 = vector.shape_cast %265 : vector<1x1x16x8xf32> to vector<16x8xf32>
      %267 = vector.broadcast %245 : f32 to vector<16x8xf32>
      %268 = arith.mulf %266, %267 : vector<16x8xf32>
      %269 = arith.addf %263, %268 : vector<16x8xf32>
      %c4_132 = arith.constant 4 : index
      %270 = arith.index_cast %arg8 : i32 to index
      %c0_133 = arith.constant 0 : index
      %c0_134 = arith.constant 0 : index
      %271 = vector.load %arg1[%c4_132, %270, %c0_133, %c0_134] : memref<8x16x16x8xf32, #tpu.memory_space<vmem>>, vector<1x1x16x8xf32>
      %272 = vector.shape_cast %271 : vector<1x1x16x8xf32> to vector<16x8xf32>
      %273 = vector.broadcast %246 : f32 to vector<16x8xf32>
      %274 = arith.mulf %272, %273 : vector<16x8xf32>
      %275 = arith.addf %269, %274 : vector<16x8xf32>
      %c5_135 = arith.constant 5 : index
      %276 = arith.index_cast %arg8 : i32 to index
      %c0_136 = arith.constant 0 : index
      %c0_137 = arith.constant 0 : index
      %277 = vector.load %arg1[%c5_135, %276, %c0_136, %c0_137] : memref<8x16x16x8xf32, #tpu.memory_space<vmem>>, vector<1x1x16x8xf32>
      %278 = vector.shape_cast %277 : vector<1x1x16x8xf32> to vector<16x8xf32>
      %279 = vector.broadcast %247 : f32 to vector<16x8xf32>
      %280 = arith.mulf %278, %279 : vector<16x8xf32>
      %281 = arith.addf %275, %280 : vector<16x8xf32>
      %c6_138 = arith.constant 6 : index
      %282 = arith.index_cast %arg8 : i32 to index
      %c0_139 = arith.constant 0 : index
      %c0_140 = arith.constant 0 : index
      %283 = vector.load %arg1[%c6_138, %282, %c0_139, %c0_140] : memref<8x16x16x8xf32, #tpu.memory_space<vmem>>, vector<1x1x16x8xf32>
      %284 = vector.shape_cast %283 : vector<1x1x16x8xf32> to vector<16x8xf32>
      %285 = vector.broadcast %248 : f32 to vector<16x8xf32>
      %286 = arith.mulf %284, %285 : vector<16x8xf32>
      %287 = arith.addf %281, %286 : vector<16x8xf32>
      %c0_141 = arith.constant 0 : index
      %288 = arith.index_cast %8 : i32 to index
      %c0_142 = arith.constant 0 : index
      %c0_143 = arith.constant 0 : index
      %289 = vector.load %arg1[%c0_141, %288, %c0_142, %c0_143] : memref<8x16x16x8xf32, #tpu.memory_space<vmem>>, vector<1x1x16x8xf32>
      %290 = vector.shape_cast %289 : vector<1x1x16x8xf32> to vector<16x8xf32>
      %291 = vector.broadcast %249 : f32 to vector<16x8xf32>
      %292 = arith.mulf %290, %291 : vector<16x8xf32>
      %293 = arith.addf %287, %292 : vector<16x8xf32>
      %c1_144 = arith.constant 1 : index
      %294 = arith.index_cast %8 : i32 to index
      %c0_145 = arith.constant 0 : index
      %c0_146 = arith.constant 0 : index
      %295 = vector.load %arg1[%c1_144, %294, %c0_145, %c0_146] : memref<8x16x16x8xf32, #tpu.memory_space<vmem>>, vector<1x1x16x8xf32>
      %296 = vector.shape_cast %295 : vector<1x1x16x8xf32> to vector<16x8xf32>
      %297 = vector.broadcast %250 : f32 to vector<16x8xf32>
      %298 = arith.mulf %296, %297 : vector<16x8xf32>
      %299 = arith.addf %293, %298 : vector<16x8xf32>
      %c2_147 = arith.constant 2 : index
      %300 = arith.index_cast %8 : i32 to index
      %c0_148 = arith.constant 0 : index
      %c0_149 = arith.constant 0 : index
      %301 = vector.load %arg1[%c2_147, %300, %c0_148, %c0_149] : memref<8x16x16x8xf32, #tpu.memory_space<vmem>>, vector<1x1x16x8xf32>
      %302 = vector.shape_cast %301 : vector<1x1x16x8xf32> to vector<16x8xf32>
      %303 = vector.broadcast %251 : f32 to vector<16x8xf32>
      %304 = arith.mulf %302, %303 : vector<16x8xf32>
      %305 = arith.addf %299, %304 : vector<16x8xf32>
      %c1_150 = arith.constant 1 : index
      %306 = arith.index_cast %arg8 : i32 to index
      %c0_151 = arith.constant 0 : index
      %c0_152 = arith.constant 0 : index
      %307 = vector.load %arg1[%c1_150, %306, %c0_151, %c0_152] : memref<8x16x16x8xf32, #tpu.memory_space<vmem>>, vector<1x1x16x8xf32>
      %308 = vector.shape_cast %307 : vector<1x1x16x8xf32> to vector<16x8xf32>
      %309 = vector.broadcast %243 : f32 to vector<16x8xf32>
      %310 = arith.mulf %308, %309 : vector<16x8xf32>
      %c2_153 = arith.constant 2 : index
      %311 = arith.index_cast %arg8 : i32 to index
      %c0_154 = arith.constant 0 : index
      %c0_155 = arith.constant 0 : index
      %312 = vector.load %arg1[%c2_153, %311, %c0_154, %c0_155] : memref<8x16x16x8xf32, #tpu.memory_space<vmem>>, vector<1x1x16x8xf32>
      %313 = vector.shape_cast %312 : vector<1x1x16x8xf32> to vector<16x8xf32>
      %314 = vector.broadcast %244 : f32 to vector<16x8xf32>
      %315 = arith.mulf %313, %314 : vector<16x8xf32>
      %316 = arith.addf %310, %315 : vector<16x8xf32>
      %c3_156 = arith.constant 3 : index
      %317 = arith.index_cast %arg8 : i32 to index
      %c0_157 = arith.constant 0 : index
      %c0_158 = arith.constant 0 : index
      %318 = vector.load %arg1[%c3_156, %317, %c0_157, %c0_158] : memref<8x16x16x8xf32, #tpu.memory_space<vmem>>, vector<1x1x16x8xf32>
      %319 = vector.shape_cast %318 : vector<1x1x16x8xf32> to vector<16x8xf32>
      %320 = vector.broadcast %245 : f32 to vector<16x8xf32>
      %321 = arith.mulf %319, %320 : vector<16x8xf32>
      %322 = arith.addf %316, %321 : vector<16x8xf32>
      %c5_159 = arith.constant 5 : index
      %323 = arith.index_cast %arg8 : i32 to index
      %c0_160 = arith.constant 0 : index
      %c0_161 = arith.constant 0 : index
      %324 = vector.load %arg1[%c5_159, %323, %c0_160, %c0_161] : memref<8x16x16x8xf32, #tpu.memory_space<vmem>>, vector<1x1x16x8xf32>
      %325 = vector.shape_cast %324 : vector<1x1x16x8xf32> to vector<16x8xf32>
      %326 = vector.broadcast %246 : f32 to vector<16x8xf32>
      %327 = arith.mulf %325, %326 : vector<16x8xf32>
      %328 = arith.addf %322, %327 : vector<16x8xf32>
      %c6_162 = arith.constant 6 : index
      %329 = arith.index_cast %arg8 : i32 to index
      %c0_163 = arith.constant 0 : index
      %c0_164 = arith.constant 0 : index
      %330 = vector.load %arg1[%c6_162, %329, %c0_163, %c0_164] : memref<8x16x16x8xf32, #tpu.memory_space<vmem>>, vector<1x1x16x8xf32>
      %331 = vector.shape_cast %330 : vector<1x1x16x8xf32> to vector<16x8xf32>
      %332 = vector.broadcast %247 : f32 to vector<16x8xf32>
      %333 = arith.mulf %331, %332 : vector<16x8xf32>
      %334 = arith.addf %328, %333 : vector<16x8xf32>
      %c7_165 = arith.constant 7 : index
      %335 = arith.index_cast %arg8 : i32 to index
      %c0_166 = arith.constant 0 : index
      %c0_167 = arith.constant 0 : index
      %336 = vector.load %arg1[%c7_165, %335, %c0_166, %c0_167] : memref<8x16x16x8xf32, #tpu.memory_space<vmem>>, vector<1x1x16x8xf32>
      %337 = vector.shape_cast %336 : vector<1x1x16x8xf32> to vector<16x8xf32>
      %338 = vector.broadcast %248 : f32 to vector<16x8xf32>
      %339 = arith.mulf %337, %338 : vector<16x8xf32>
      %340 = arith.addf %334, %339 : vector<16x8xf32>
      %c1_168 = arith.constant 1 : index
      %341 = arith.index_cast %8 : i32 to index
      %c0_169 = arith.constant 0 : index
      %c0_170 = arith.constant 0 : index
      %342 = vector.load %arg1[%c1_168, %341, %c0_169, %c0_170] : memref<8x16x16x8xf32, #tpu.memory_space<vmem>>, vector<1x1x16x8xf32>
      %343 = vector.shape_cast %342 : vector<1x1x16x8xf32> to vector<16x8xf32>
      %344 = vector.broadcast %249 : f32 to vector<16x8xf32>
      %345 = arith.mulf %343, %344 : vector<16x8xf32>
      %346 = arith.addf %340, %345 : vector<16x8xf32>
      %c2_171 = arith.constant 2 : index
      %347 = arith.index_cast %8 : i32 to index
      %c0_172 = arith.constant 0 : index
      %c0_173 = arith.constant 0 : index
      %348 = vector.load %arg1[%c2_171, %347, %c0_172, %c0_173] : memref<8x16x16x8xf32, #tpu.memory_space<vmem>>, vector<1x1x16x8xf32>
      %349 = vector.shape_cast %348 : vector<1x1x16x8xf32> to vector<16x8xf32>
      %350 = vector.broadcast %250 : f32 to vector<16x8xf32>
      %351 = arith.mulf %349, %350 : vector<16x8xf32>
      %352 = arith.addf %346, %351 : vector<16x8xf32>
      %c3_174 = arith.constant 3 : index
      %353 = arith.index_cast %8 : i32 to index
      %c0_175 = arith.constant 0 : index
      %c0_176 = arith.constant 0 : index
      %354 = vector.load %arg1[%c3_174, %353, %c0_175, %c0_176] : memref<8x16x16x8xf32, #tpu.memory_space<vmem>>, vector<1x1x16x8xf32>
      %355 = vector.shape_cast %354 : vector<1x1x16x8xf32> to vector<16x8xf32>
      %356 = vector.broadcast %251 : f32 to vector<16x8xf32>
      %357 = arith.mulf %355, %356 : vector<16x8xf32>
      %358 = arith.addf %352, %357 : vector<16x8xf32>
      %359 = arith.maximumf %305, %358 : vector<16x8xf32>
      %c4_177 = arith.constant 4 : index
      %360 = arith.index_cast %arg8 : i32 to index
      %c0_178 = arith.constant 0 : index
      %c0_179 = arith.constant 0 : index
      %361 = vector.load %arg1[%c4_177, %360, %c0_178, %c0_179] : memref<8x16x16x8xf32, #tpu.memory_space<vmem>>, vector<1x1x16x8xf32>
      %362 = vector.shape_cast %361 : vector<1x1x16x8xf32> to vector<16x8xf32>
      %363 = vector.broadcast %243 : f32 to vector<16x8xf32>
      %364 = arith.mulf %362, %363 : vector<16x8xf32>
      %c5_180 = arith.constant 5 : index
      %365 = arith.index_cast %arg8 : i32 to index
      %c0_181 = arith.constant 0 : index
      %c0_182 = arith.constant 0 : index
      %366 = vector.load %arg1[%c5_180, %365, %c0_181, %c0_182] : memref<8x16x16x8xf32, #tpu.memory_space<vmem>>, vector<1x1x16x8xf32>
      %367 = vector.shape_cast %366 : vector<1x1x16x8xf32> to vector<16x8xf32>
      %368 = vector.broadcast %244 : f32 to vector<16x8xf32>
      %369 = arith.mulf %367, %368 : vector<16x8xf32>
      %370 = arith.addf %364, %369 : vector<16x8xf32>
      %c6_183 = arith.constant 6 : index
      %371 = arith.index_cast %arg8 : i32 to index
      %c0_184 = arith.constant 0 : index
      %c0_185 = arith.constant 0 : index
      %372 = vector.load %arg1[%c6_183, %371, %c0_184, %c0_185] : memref<8x16x16x8xf32, #tpu.memory_space<vmem>>, vector<1x1x16x8xf32>
      %373 = vector.shape_cast %372 : vector<1x1x16x8xf32> to vector<16x8xf32>
      %374 = vector.broadcast %245 : f32 to vector<16x8xf32>
      %375 = arith.mulf %373, %374 : vector<16x8xf32>
      %376 = arith.addf %370, %375 : vector<16x8xf32>
      %c0_186 = arith.constant 0 : index
      %377 = arith.index_cast %8 : i32 to index
      %c0_187 = arith.constant 0 : index
      %c0_188 = arith.constant 0 : index
      %378 = vector.load %arg1[%c0_186, %377, %c0_187, %c0_188] : memref<8x16x16x8xf32, #tpu.memory_space<vmem>>, vector<1x1x16x8xf32>
      %379 = vector.shape_cast %378 : vector<1x1x16x8xf32> to vector<16x8xf32>
      %380 = vector.broadcast %246 : f32 to vector<16x8xf32>
      %381 = arith.mulf %379, %380 : vector<16x8xf32>
      %382 = arith.addf %376, %381 : vector<16x8xf32>
      %c1_189 = arith.constant 1 : index
      %383 = arith.index_cast %8 : i32 to index
      %c0_190 = arith.constant 0 : index
      %c0_191 = arith.constant 0 : index
      %384 = vector.load %arg1[%c1_189, %383, %c0_190, %c0_191] : memref<8x16x16x8xf32, #tpu.memory_space<vmem>>, vector<1x1x16x8xf32>
      %385 = vector.shape_cast %384 : vector<1x1x16x8xf32> to vector<16x8xf32>
      %386 = vector.broadcast %247 : f32 to vector<16x8xf32>
      %387 = arith.mulf %385, %386 : vector<16x8xf32>
      %388 = arith.addf %382, %387 : vector<16x8xf32>
      %c2_192 = arith.constant 2 : index
      %389 = arith.index_cast %8 : i32 to index
      %c0_193 = arith.constant 0 : index
      %c0_194 = arith.constant 0 : index
      %390 = vector.load %arg1[%c2_192, %389, %c0_193, %c0_194] : memref<8x16x16x8xf32, #tpu.memory_space<vmem>>, vector<1x1x16x8xf32>
      %391 = vector.shape_cast %390 : vector<1x1x16x8xf32> to vector<16x8xf32>
      %392 = vector.broadcast %248 : f32 to vector<16x8xf32>
      %393 = arith.mulf %391, %392 : vector<16x8xf32>
      %394 = arith.addf %388, %393 : vector<16x8xf32>
      %c4_195 = arith.constant 4 : index
      %395 = arith.index_cast %8 : i32 to index
      %c0_196 = arith.constant 0 : index
      %c0_197 = arith.constant 0 : index
      %396 = vector.load %arg1[%c4_195, %395, %c0_196, %c0_197] : memref<8x16x16x8xf32, #tpu.memory_space<vmem>>, vector<1x1x16x8xf32>
      %397 = vector.shape_cast %396 : vector<1x1x16x8xf32> to vector<16x8xf32>
      %398 = vector.broadcast %249 : f32 to vector<16x8xf32>
      %399 = arith.mulf %397, %398 : vector<16x8xf32>
      %400 = arith.addf %394, %399 : vector<16x8xf32>
      %c5_198 = arith.constant 5 : index
      %401 = arith.index_cast %8 : i32 to index
      %c0_199 = arith.constant 0 : index
      %c0_200 = arith.constant 0 : index
      %402 = vector.load %arg1[%c5_198, %401, %c0_199, %c0_200] : memref<8x16x16x8xf32, #tpu.memory_space<vmem>>, vector<1x1x16x8xf32>
      %403 = vector.shape_cast %402 : vector<1x1x16x8xf32> to vector<16x8xf32>
      %404 = vector.broadcast %250 : f32 to vector<16x8xf32>
      %405 = arith.mulf %403, %404 : vector<16x8xf32>
      %406 = arith.addf %400, %405 : vector<16x8xf32>
      %c6_201 = arith.constant 6 : index
      %407 = arith.index_cast %8 : i32 to index
      %c0_202 = arith.constant 0 : index
      %c0_203 = arith.constant 0 : index
      %408 = vector.load %arg1[%c6_201, %407, %c0_202, %c0_203] : memref<8x16x16x8xf32, #tpu.memory_space<vmem>>, vector<1x1x16x8xf32>
      %409 = vector.shape_cast %408 : vector<1x1x16x8xf32> to vector<16x8xf32>
      %410 = vector.broadcast %251 : f32 to vector<16x8xf32>
      %411 = arith.mulf %409, %410 : vector<16x8xf32>
      %412 = arith.addf %406, %411 : vector<16x8xf32>
      %413 = arith.maximumf %359, %412 : vector<16x8xf32>
      %c5_204 = arith.constant 5 : index
      %414 = arith.index_cast %arg8 : i32 to index
      %c0_205 = arith.constant 0 : index
      %c0_206 = arith.constant 0 : index
      %415 = vector.load %arg1[%c5_204, %414, %c0_205, %c0_206] : memref<8x16x16x8xf32, #tpu.memory_space<vmem>>, vector<1x1x16x8xf32>
      %416 = vector.shape_cast %415 : vector<1x1x16x8xf32> to vector<16x8xf32>
      %417 = vector.broadcast %243 : f32 to vector<16x8xf32>
      %418 = arith.mulf %416, %417 : vector<16x8xf32>
      %c6_207 = arith.constant 6 : index
      %419 = arith.index_cast %arg8 : i32 to index
      %c0_208 = arith.constant 0 : index
      %c0_209 = arith.constant 0 : index
      %420 = vector.load %arg1[%c6_207, %419, %c0_208, %c0_209] : memref<8x16x16x8xf32, #tpu.memory_space<vmem>>, vector<1x1x16x8xf32>
      %421 = vector.shape_cast %420 : vector<1x1x16x8xf32> to vector<16x8xf32>
      %422 = vector.broadcast %244 : f32 to vector<16x8xf32>
      %423 = arith.mulf %421, %422 : vector<16x8xf32>
      %424 = arith.addf %418, %423 : vector<16x8xf32>
      %c7_210 = arith.constant 7 : index
      %425 = arith.index_cast %arg8 : i32 to index
      %c0_211 = arith.constant 0 : index
      %c0_212 = arith.constant 0 : index
      %426 = vector.load %arg1[%c7_210, %425, %c0_211, %c0_212] : memref<8x16x16x8xf32, #tpu.memory_space<vmem>>, vector<1x1x16x8xf32>
      %427 = vector.shape_cast %426 : vector<1x1x16x8xf32> to vector<16x8xf32>
      %428 = vector.broadcast %245 : f32 to vector<16x8xf32>
      %429 = arith.mulf %427, %428 : vector<16x8xf32>
      %430 = arith.addf %424, %429 : vector<16x8xf32>
      %c1_213 = arith.constant 1 : index
      %431 = arith.index_cast %8 : i32 to index
      %c0_214 = arith.constant 0 : index
      %c0_215 = arith.constant 0 : index
      %432 = vector.load %arg1[%c1_213, %431, %c0_214, %c0_215] : memref<8x16x16x8xf32, #tpu.memory_space<vmem>>, vector<1x1x16x8xf32>
      %433 = vector.shape_cast %432 : vector<1x1x16x8xf32> to vector<16x8xf32>
      %434 = vector.broadcast %246 : f32 to vector<16x8xf32>
      %435 = arith.mulf %433, %434 : vector<16x8xf32>
      %436 = arith.addf %430, %435 : vector<16x8xf32>
      %c2_216 = arith.constant 2 : index
      %437 = arith.index_cast %8 : i32 to index
      %c0_217 = arith.constant 0 : index
      %c0_218 = arith.constant 0 : index
      %438 = vector.load %arg1[%c2_216, %437, %c0_217, %c0_218] : memref<8x16x16x8xf32, #tpu.memory_space<vmem>>, vector<1x1x16x8xf32>
      %439 = vector.shape_cast %438 : vector<1x1x16x8xf32> to vector<16x8xf32>
      %440 = vector.broadcast %247 : f32 to vector<16x8xf32>
      %441 = arith.mulf %439, %440 : vector<16x8xf32>
      %442 = arith.addf %436, %441 : vector<16x8xf32>
      %c3_219 = arith.constant 3 : index
      %443 = arith.index_cast %8 : i32 to index
      %c0_220 = arith.constant 0 : index
      %c0_221 = arith.constant 0 : index
      %444 = vector.load %arg1[%c3_219, %443, %c0_220, %c0_221] : memref<8x16x16x8xf32, #tpu.memory_space<vmem>>, vector<1x1x16x8xf32>
      %445 = vector.shape_cast %444 : vector<1x1x16x8xf32> to vector<16x8xf32>
      %446 = vector.broadcast %248 : f32 to vector<16x8xf32>
      %447 = arith.mulf %445, %446 : vector<16x8xf32>
      %448 = arith.addf %442, %447 : vector<16x8xf32>
      %c5_222 = arith.constant 5 : index
      %449 = arith.index_cast %8 : i32 to index
      %c0_223 = arith.constant 0 : index
      %c0_224 = arith.constant 0 : index
      %450 = vector.load %arg1[%c5_222, %449, %c0_223, %c0_224] : memref<8x16x16x8xf32, #tpu.memory_space<vmem>>, vector<1x1x16x8xf32>
      %451 = vector.shape_cast %450 : vector<1x1x16x8xf32> to vector<16x8xf32>
      %452 = vector.broadcast %249 : f32 to vector<16x8xf32>
      %453 = arith.mulf %451, %452 : vector<16x8xf32>
      %454 = arith.addf %448, %453 : vector<16x8xf32>
      %c6_225 = arith.constant 6 : index
      %455 = arith.index_cast %8 : i32 to index
      %c0_226 = arith.constant 0 : index
      %c0_227 = arith.constant 0 : index
      %456 = vector.load %arg1[%c6_225, %455, %c0_226, %c0_227] : memref<8x16x16x8xf32, #tpu.memory_space<vmem>>, vector<1x1x16x8xf32>
      %457 = vector.shape_cast %456 : vector<1x1x16x8xf32> to vector<16x8xf32>
      %458 = vector.broadcast %250 : f32 to vector<16x8xf32>
      %459 = arith.mulf %457, %458 : vector<16x8xf32>
      %460 = arith.addf %454, %459 : vector<16x8xf32>
      %c7_228 = arith.constant 7 : index
      %461 = arith.index_cast %8 : i32 to index
      %c0_229 = arith.constant 0 : index
      %c0_230 = arith.constant 0 : index
      %462 = vector.load %arg1[%c7_228, %461, %c0_229, %c0_230] : memref<8x16x16x8xf32, #tpu.memory_space<vmem>>, vector<1x1x16x8xf32>
      %463 = vector.shape_cast %462 : vector<1x1x16x8xf32> to vector<16x8xf32>
      %464 = vector.broadcast %251 : f32 to vector<16x8xf32>
      %465 = arith.mulf %463, %464 : vector<16x8xf32>
      %466 = arith.addf %460, %465 : vector<16x8xf32>
      %467 = arith.maximumf %413, %466 : vector<16x8xf32>
      %468 = vector.broadcast %252 : f32 to vector<16x8xf32>
      %469 = arith.addf %467, %468 : vector<16x8xf32>
      %cst_231 = arith.constant 0.000000e+00 : f32
      %470 = vector.broadcast %cst_231 : f32 to vector<16x8xf32>
      %471 = arith.maximumf %469, %470 : vector<16x8xf32>
      %c15_i32_232 = arith.constant 15 : i32
      %472 = arith.addi %c15_i32_232, %arg8 : i32
      %c16_i32_233 = arith.constant 16 : i32
      %473 = arith.muli %472, %c16_i32_233 : i32
      %474 = tpu.assume_multiple %473, 16 : i32
      %475 = arith.index_cast %474 : i32 to index
      %c0_234 = arith.constant 0 : index
      %476 = vector.load %arg7[%475, %c0_234] : memref<1440x8xf32, #tpu.memory_space<vmem>>, vector<16x8xf32>
      tpu.vector_store %arg7[%475, %c0_234], %471 {strides = array<i32>} : memref<1440x8xf32, #tpu.memory_space<vmem>>, vector<16x8xf32>,
      %c18 = arith.constant 18 : index
      %477 = memref.load %arg2[%c18] : memref<54xf32, #tpu.memory_space<smem>>
      %c19 = arith.constant 19 : index
      %478 = memref.load %arg2[%c19] : memref<54xf32, #tpu.memory_space<smem>>
      %c20 = arith.constant 20 : index
      %479 = memref.load %arg2[%c20] : memref<54xf32, #tpu.memory_space<smem>>
      %c21 = arith.constant 21 : index
      %480 = memref.load %arg2[%c21] : memref<54xf32, #tpu.memory_space<smem>>
      %c22 = arith.constant 22 : index
      %481 = memref.load %arg2[%c22] : memref<54xf32, #tpu.memory_space<smem>>
      %c23 = arith.constant 23 : index
      %482 = memref.load %arg2[%c23] : memref<54xf32, #tpu.memory_space<smem>>
      %c24 = arith.constant 24 : index
      %483 = memref.load %arg2[%c24] : memref<54xf32, #tpu.memory_space<smem>>
      %c25 = arith.constant 25 : index
      %484 = memref.load %arg2[%c25] : memref<54xf32, #tpu.memory_space<smem>>
      %c26 = arith.constant 26 : index
      %485 = memref.load %arg2[%c26] : memref<54xf32, #tpu.memory_space<smem>>
      %c2_235 = arith.constant 2 : index
      %486 = memref.load %arg3[%c2_235] : memref<6xf32, #tpu.memory_space<smem>>
      %c0_236 = arith.constant 0 : index
      %487 = arith.index_cast %arg8 : i32 to index
      %c0_237 = arith.constant 0 : index
      %c0_238 = arith.constant 0 : index
      %488 = vector.load %arg1[%c0_236, %487, %c0_237, %c0_238] : memref<8x16x16x8xf32, #tpu.memory_space<vmem>>, vector<1x1x16x8xf32>
      %489 = vector.shape_cast %488 : vector<1x1x16x8xf32> to vector<16x8xf32>
      %490 = vector.broadcast %477 : f32 to vector<16x8xf32>
      %491 = arith.mulf %489, %490 : vector<16x8xf32>
      %c1_239 = arith.constant 1 : index
      %492 = arith.index_cast %arg8 : i32 to index
      %c0_240 = arith.constant 0 : index
      %c0_241 = arith.constant 0 : index
      %493 = vector.load %arg1[%c1_239, %492, %c0_240, %c0_241] : memref<8x16x16x8xf32, #tpu.memory_space<vmem>>, vector<1x1x16x8xf32>
      %494 = vector.shape_cast %493 : vector<1x1x16x8xf32> to vector<16x8xf32>
      %495 = vector.broadcast %478 : f32 to vector<16x8xf32>
      %496 = arith.mulf %494, %495 : vector<16x8xf32>
      %497 = arith.addf %491, %496 : vector<16x8xf32>
      %c2_242 = arith.constant 2 : index
      %498 = arith.index_cast %arg8 : i32 to index
      %c0_243 = arith.constant 0 : index
      %c0_244 = arith.constant 0 : index
      %499 = vector.load %arg1[%c2_242, %498, %c0_243, %c0_244] : memref<8x16x16x8xf32, #tpu.memory_space<vmem>>, vector<1x1x16x8xf32>
      %500 = vector.shape_cast %499 : vector<1x1x16x8xf32> to vector<16x8xf32>
      %501 = vector.broadcast %479 : f32 to vector<16x8xf32>
      %502 = arith.mulf %500, %501 : vector<16x8xf32>
      %503 = arith.addf %497, %502 : vector<16x8xf32>
      %c4_245 = arith.constant 4 : index
      %504 = arith.index_cast %arg8 : i32 to index
      %c0_246 = arith.constant 0 : index
      %c0_247 = arith.constant 0 : index
      %505 = vector.load %arg1[%c4_245, %504, %c0_246, %c0_247] : memref<8x16x16x8xf32, #tpu.memory_space<vmem>>, vector<1x1x16x8xf32>
      %506 = vector.shape_cast %505 : vector<1x1x16x8xf32> to vector<16x8xf32>
      %507 = vector.broadcast %480 : f32 to vector<16x8xf32>
      %508 = arith.mulf %506, %507 : vector<16x8xf32>
      %509 = arith.addf %503, %508 : vector<16x8xf32>
      %c5_248 = arith.constant 5 : index
      %510 = arith.index_cast %arg8 : i32 to index
      %c0_249 = arith.constant 0 : index
      %c0_250 = arith.constant 0 : index
      %511 = vector.load %arg1[%c5_248, %510, %c0_249, %c0_250] : memref<8x16x16x8xf32, #tpu.memory_space<vmem>>, vector<1x1x16x8xf32>
      %512 = vector.shape_cast %511 : vector<1x1x16x8xf32> to vector<16x8xf32>
      %513 = vector.broadcast %481 : f32 to vector<16x8xf32>
      %514 = arith.mulf %512, %513 : vector<16x8xf32>
      %515 = arith.addf %509, %514 : vector<16x8xf32>
      %c6_251 = arith.constant 6 : index
      %516 = arith.index_cast %arg8 : i32 to index
      %c0_252 = arith.constant 0 : index
      %c0_253 = arith.constant 0 : index
      %517 = vector.load %arg1[%c6_251, %516, %c0_252, %c0_253] : memref<8x16x16x8xf32, #tpu.memory_space<vmem>>, vector<1x1x16x8xf32>
      %518 = vector.shape_cast %517 : vector<1x1x16x8xf32> to vector<16x8xf32>
      %519 = vector.broadcast %482 : f32 to vector<16x8xf32>
      %520 = arith.mulf %518, %519 : vector<16x8xf32>
      %521 = arith.addf %515, %520 : vector<16x8xf32>
      %c0_254 = arith.constant 0 : index
      %522 = arith.index_cast %8 : i32 to index
      %c0_255 = arith.constant 0 : index
      %c0_256 = arith.constant 0 : index
      %523 = vector.load %arg1[%c0_254, %522, %c0_255, %c0_256] : memref<8x16x16x8xf32, #tpu.memory_space<vmem>>, vector<1x1x16x8xf32>
      %524 = vector.shape_cast %523 : vector<1x1x16x8xf32> to vector<16x8xf32>
      %525 = vector.broadcast %483 : f32 to vector<16x8xf32>
      %526 = arith.mulf %524, %525 : vector<16x8xf32>
      %527 = arith.addf %521, %526 : vector<16x8xf32>
      %c1_257 = arith.constant 1 : index
      %528 = arith.index_cast %8 : i32 to index
      %c0_258 = arith.constant 0 : index
      %c0_259 = arith.constant 0 : index
      %529 = vector.load %arg1[%c1_257, %528, %c0_258, %c0_259] : memref<8x16x16x8xf32, #tpu.memory_space<vmem>>, vector<1x1x16x8xf32>
      %530 = vector.shape_cast %529 : vector<1x1x16x8xf32> to vector<16x8xf32>
      %531 = vector.broadcast %484 : f32 to vector<16x8xf32>
      %532 = arith.mulf %530, %531 : vector<16x8xf32>
      %533 = arith.addf %527, %532 : vector<16x8xf32>
      %c2_260 = arith.constant 2 : index
      %534 = arith.index_cast %8 : i32 to index
      %c0_261 = arith.constant 0 : index
      %c0_262 = arith.constant 0 : index
      %535 = vector.load %arg1[%c2_260, %534, %c0_261, %c0_262] : memref<8x16x16x8xf32, #tpu.memory_space<vmem>>, vector<1x1x16x8xf32>
      %536 = vector.shape_cast %535 : vector<1x1x16x8xf32> to vector<16x8xf32>
      %537 = vector.broadcast %485 : f32 to vector<16x8xf32>
      %538 = arith.mulf %536, %537 : vector<16x8xf32>
      %539 = arith.addf %533, %538 : vector<16x8xf32>
      %c1_263 = arith.constant 1 : index
      %540 = arith.index_cast %arg8 : i32 to index
      %c0_264 = arith.constant 0 : index
      %c0_265 = arith.constant 0 : index
      %541 = vector.load %arg1[%c1_263, %540, %c0_264, %c0_265] : memref<8x16x16x8xf32, #tpu.memory_space<vmem>>, vector<1x1x16x8xf32>
      %542 = vector.shape_cast %541 : vector<1x1x16x8xf32> to vector<16x8xf32>
      %543 = vector.broadcast %477 : f32 to vector<16x8xf32>
      %544 = arith.mulf %542, %543 : vector<16x8xf32>
      %c2_266 = arith.constant 2 : index
      %545 = arith.index_cast %arg8 : i32 to index
      %c0_267 = arith.constant 0 : index
      %c0_268 = arith.constant 0 : index
      %546 = vector.load %arg1[%c2_266, %545, %c0_267, %c0_268] : memref<8x16x16x8xf32, #tpu.memory_space<vmem>>, vector<1x1x16x8xf32>
      %547 = vector.shape_cast %546 : vector<1x1x16x8xf32> to vector<16x8xf32>
      %548 = vector.broadcast %478 : f32 to vector<16x8xf32>
      %549 = arith.mulf %547, %548 : vector<16x8xf32>
      %550 = arith.addf %544, %549 : vector<16x8xf32>
      %c3_269 = arith.constant 3 : index
      %551 = arith.index_cast %arg8 : i32 to index
      %c0_270 = arith.constant 0 : index
      %c0_271 = arith.constant 0 : index
      %552 = vector.load %arg1[%c3_269, %551, %c0_270, %c0_271] : memref<8x16x16x8xf32, #tpu.memory_space<vmem>>, vector<1x1x16x8xf32>
      %553 = vector.shape_cast %552 : vector<1x1x16x8xf32> to vector<16x8xf32>
      %554 = vector.broadcast %479 : f32 to vector<16x8xf32>
      %555 = arith.mulf %553, %554 : vector<16x8xf32>
      %556 = arith.addf %550, %555 : vector<16x8xf32>
      %c5_272 = arith.constant 5 : index
      %557 = arith.index_cast %arg8 : i32 to index
      %c0_273 = arith.constant 0 : index
      %c0_274 = arith.constant 0 : index
      %558 = vector.load %arg1[%c5_272, %557, %c0_273, %c0_274] : memref<8x16x16x8xf32, #tpu.memory_space<vmem>>, vector<1x1x16x8xf32>
      %559 = vector.shape_cast %558 : vector<1x1x16x8xf32> to vector<16x8xf32>
      %560 = vector.broadcast %480 : f32 to vector<16x8xf32>
      %561 = arith.mulf %559, %560 : vector<16x8xf32>
      %562 = arith.addf %556, %561 : vector<16x8xf32>
      %c6_275 = arith.constant 6 : index
      %563 = arith.index_cast %arg8 : i32 to index
      %c0_276 = arith.constant 0 : index
      %c0_277 = arith.constant 0 : index
      %564 = vector.load %arg1[%c6_275, %563, %c0_276, %c0_277] : memref<8x16x16x8xf32, #tpu.memory_space<vmem>>, vector<1x1x16x8xf32>
      %565 = vector.shape_cast %564 : vector<1x1x16x8xf32> to vector<16x8xf32>
      %566 = vector.broadcast %481 : f32 to vector<16x8xf32>
      %567 = arith.mulf %565, %566 : vector<16x8xf32>
      %568 = arith.addf %562, %567 : vector<16x8xf32>
      %c7_278 = arith.constant 7 : index
      %569 = arith.index_cast %arg8 : i32 to index
      %c0_279 = arith.constant 0 : index
      %c0_280 = arith.constant 0 : index
      %570 = vector.load %arg1[%c7_278, %569, %c0_279, %c0_280] : memref<8x16x16x8xf32, #tpu.memory_space<vmem>>, vector<1x1x16x8xf32>
      %571 = vector.shape_cast %570 : vector<1x1x16x8xf32> to vector<16x8xf32>
      %572 = vector.broadcast %482 : f32 to vector<16x8xf32>
      %573 = arith.mulf %571, %572 : vector<16x8xf32>
      %574 = arith.addf %568, %573 : vector<16x8xf32>
      %c1_281 = arith.constant 1 : index
      %575 = arith.index_cast %8 : i32 to index
      %c0_282 = arith.constant 0 : index
      %c0_283 = arith.constant 0 : index
      %576 = vector.load %arg1[%c1_281, %575, %c0_282, %c0_283] : memref<8x16x16x8xf32, #tpu.memory_space<vmem>>, vector<1x1x16x8xf32>
      %577 = vector.shape_cast %576 : vector<1x1x16x8xf32> to vector<16x8xf32>
      %578 = vector.broadcast %483 : f32 to vector<16x8xf32>
      %579 = arith.mulf %577, %578 : vector<16x8xf32>
      %580 = arith.addf %574, %579 : vector<16x8xf32>
      %c2_284 = arith.constant 2 : index
      %581 = arith.index_cast %8 : i32 to index
      %c0_285 = arith.constant 0 : index
      %c0_286 = arith.constant 0 : index
      %582 = vector.load %arg1[%c2_284, %581, %c0_285, %c0_286] : memref<8x16x16x8xf32, #tpu.memory_space<vmem>>, vector<1x1x16x8xf32>
      %583 = vector.shape_cast %582 : vector<1x1x16x8xf32> to vector<16x8xf32>
      %584 = vector.broadcast %484 : f32 to vector<16x8xf32>
      %585 = arith.mulf %583, %584 : vector<16x8xf32>
      %586 = arith.addf %580, %585 : vector<16x8xf32>
      %c3_287 = arith.constant 3 : index
      %587 = arith.index_cast %8 : i32 to index
      %c0_288 = arith.constant 0 : index
      %c0_289 = arith.constant 0 : index
      %588 = vector.load %arg1[%c3_287, %587, %c0_288, %c0_289] : memref<8x16x16x8xf32, #tpu.memory_space<vmem>>, vector<1x1x16x8xf32>
      %589 = vector.shape_cast %588 : vector<1x1x16x8xf32> to vector<16x8xf32>
      %590 = vector.broadcast %485 : f32 to vector<16x8xf32>
      %591 = arith.mulf %589, %590 : vector<16x8xf32>
      %592 = arith.addf %586, %591 : vector<16x8xf32>
      %593 = arith.maximumf %539, %592 : vector<16x8xf32>
      %c4_290 = arith.constant 4 : index
      %594 = arith.index_cast %arg8 : i32 to index
      %c0_291 = arith.constant 0 : index
      %c0_292 = arith.constant 0 : index
      %595 = vector.load %arg1[%c4_290, %594, %c0_291, %c0_292] : memref<8x16x16x8xf32, #tpu.memory_space<vmem>>, vector<1x1x16x8xf32>
      %596 = vector.shape_cast %595 : vector<1x1x16x8xf32> to vector<16x8xf32>
      %597 = vector.broadcast %477 : f32 to vector<16x8xf32>
      %598 = arith.mulf %596, %597 : vector<16x8xf32>
      %c5_293 = arith.constant 5 : index
      %599 = arith.index_cast %arg8 : i32 to index
      %c0_294 = arith.constant 0 : index
      %c0_295 = arith.constant 0 : index
      %600 = vector.load %arg1[%c5_293, %599, %c0_294, %c0_295] : memref<8x16x16x8xf32, #tpu.memory_space<vmem>>, vector<1x1x16x8xf32>
      %601 = vector.shape_cast %600 : vector<1x1x16x8xf32> to vector<16x8xf32>
      %602 = vector.broadcast %478 : f32 to vector<16x8xf32>
      %603 = arith.mulf %601, %602 : vector<16x8xf32>
      %604 = arith.addf %598, %603 : vector<16x8xf32>
      %c6_296 = arith.constant 6 : index
      %605 = arith.index_cast %arg8 : i32 to index
      %c0_297 = arith.constant 0 : index
      %c0_298 = arith.constant 0 : index
      %606 = vector.load %arg1[%c6_296, %605, %c0_297, %c0_298] : memref<8x16x16x8xf32, #tpu.memory_space<vmem>>, vector<1x1x16x8xf32>
      %607 = vector.shape_cast %606 : vector<1x1x16x8xf32> to vector<16x8xf32>
      %608 = vector.broadcast %479 : f32 to vector<16x8xf32>
      %609 = arith.mulf %607, %608 : vector<16x8xf32>
      %610 = arith.addf %604, %609 : vector<16x8xf32>
      %c0_299 = arith.constant 0 : index
      %611 = arith.index_cast %8 : i32 to index
      %c0_300 = arith.constant 0 : index
      %c0_301 = arith.constant 0 : index
      %612 = vector.load %arg1[%c0_299, %611, %c0_300, %c0_301] : memref<8x16x16x8xf32, #tpu.memory_space<vmem>>, vector<1x1x16x8xf32>
      %613 = vector.shape_cast %612 : vector<1x1x16x8xf32> to vector<16x8xf32>
      %614 = vector.broadcast %480 : f32 to vector<16x8xf32>
      %615 = arith.mulf %613, %614 : vector<16x8xf32>
      %616 = arith.addf %610, %615 : vector<16x8xf32>
      %c1_302 = arith.constant 1 : index
      %617 = arith.index_cast %8 : i32 to index
      %c0_303 = arith.constant 0 : index
      %c0_304 = arith.constant 0 : index
      %618 = vector.load %arg1[%c1_302, %617, %c0_303, %c0_304] : memref<8x16x16x8xf32, #tpu.memory_space<vmem>>, vector<1x1x16x8xf32>
      %619 = vector.shape_cast %618 : vector<1x1x16x8xf32> to vector<16x8xf32>
      %620 = vector.broadcast %481 : f32 to vector<16x8xf32>
      %621 = arith.mulf %619, %620 : vector<16x8xf32>
      %622 = arith.addf %616, %621 : vector<16x8xf32>
      %c2_305 = arith.constant 2 : index
      %623 = arith.index_cast %8 : i32 to index
      %c0_306 = arith.constant 0 : index
      %c0_307 = arith.constant 0 : index
      %624 = vector.load %arg1[%c2_305, %623, %c0_306, %c0_307] : memref<8x16x16x8xf32, #tpu.memory_space<vmem>>, vector<1x1x16x8xf32>
      %625 = vector.shape_cast %624 : vector<1x1x16x8xf32> to vector<16x8xf32>
      %626 = vector.broadcast %482 : f32 to vector<16x8xf32>
      %627 = arith.mulf %625, %626 : vector<16x8xf32>
      %628 = arith.addf %622, %627 : vector<16x8xf32>
      %c4_308 = arith.constant 4 : index
      %629 = arith.index_cast %8 : i32 to index
      %c0_309 = arith.constant 0 : index
      %c0_310 = arith.constant 0 : index
      %630 = vector.load %arg1[%c4_308, %629, %c0_309, %c0_310] : memref<8x16x16x8xf32, #tpu.memory_space<vmem>>, vector<1x1x16x8xf32>
      %631 = vector.shape_cast %630 : vector<1x1x16x8xf32> to vector<16x8xf32>
      %632 = vector.broadcast %483 : f32 to vector<16x8xf32>
      %633 = arith.mulf %631, %632 : vector<16x8xf32>
      %634 = arith.addf %628, %633 : vector<16x8xf32>
      %c5_311 = arith.constant 5 : index
      %635 = arith.index_cast %8 : i32 to index
      %c0_312 = arith.constant 0 : index
      %c0_313 = arith.constant 0 : index
      %636 = vector.load %arg1[%c5_311, %635, %c0_312, %c0_313] : memref<8x16x16x8xf32, #tpu.memory_space<vmem>>, vector<1x1x16x8xf32>
      %637 = vector.shape_cast %636 : vector<1x1x16x8xf32> to vector<16x8xf32>
      %638 = vector.broadcast %484 : f32 to vector<16x8xf32>
      %639 = arith.mulf %637, %638 : vector<16x8xf32>
      %640 = arith.addf %634, %639 : vector<16x8xf32>
      %c6_314 = arith.constant 6 : index
      %641 = arith.index_cast %8 : i32 to index
      %c0_315 = arith.constant 0 : index
      %c0_316 = arith.constant 0 : index
      %642 = vector.load %arg1[%c6_314, %641, %c0_315, %c0_316] : memref<8x16x16x8xf32, #tpu.memory_space<vmem>>, vector<1x1x16x8xf32>
      %643 = vector.shape_cast %642 : vector<1x1x16x8xf32> to vector<16x8xf32>
      %644 = vector.broadcast %485 : f32 to vector<16x8xf32>
      %645 = arith.mulf %643, %644 : vector<16x8xf32>
      %646 = arith.addf %640, %645 : vector<16x8xf32>
      %647 = arith.maximumf %593, %646 : vector<16x8xf32>
      %c5_317 = arith.constant 5 : index
      %648 = arith.index_cast %arg8 : i32 to index
      %c0_318 = arith.constant 0 : index
      %c0_319 = arith.constant 0 : index
      %649 = vector.load %arg1[%c5_317, %648, %c0_318, %c0_319] : memref<8x16x16x8xf32, #tpu.memory_space<vmem>>, vector<1x1x16x8xf32>
      %650 = vector.shape_cast %649 : vector<1x1x16x8xf32> to vector<16x8xf32>
      %651 = vector.broadcast %477 : f32 to vector<16x8xf32>
      %652 = arith.mulf %650, %651 : vector<16x8xf32>
      %c6_320 = arith.constant 6 : index
      %653 = arith.index_cast %arg8 : i32 to index
      %c0_321 = arith.constant 0 : index
      %c0_322 = arith.constant 0 : index
      %654 = vector.load %arg1[%c6_320, %653, %c0_321, %c0_322] : memref<8x16x16x8xf32, #tpu.memory_space<vmem>>, vector<1x1x16x8xf32>
      %655 = vector.shape_cast %654 : vector<1x1x16x8xf32> to vector<16x8xf32>
      %656 = vector.broadcast %478 : f32 to vector<16x8xf32>
      %657 = arith.mulf %655, %656 : vector<16x8xf32>
      %658 = arith.addf %652, %657 : vector<16x8xf32>
      %c7_323 = arith.constant 7 : index
      %659 = arith.index_cast %arg8 : i32 to index
      %c0_324 = arith.constant 0 : index
      %c0_325 = arith.constant 0 : index
      %660 = vector.load %arg1[%c7_323, %659, %c0_324, %c0_325] : memref<8x16x16x8xf32, #tpu.memory_space<vmem>>, vector<1x1x16x8xf32>
      %661 = vector.shape_cast %660 : vector<1x1x16x8xf32> to vector<16x8xf32>
      %662 = vector.broadcast %479 : f32 to vector<16x8xf32>
      %663 = arith.mulf %661, %662 : vector<16x8xf32>
      %664 = arith.addf %658, %663 : vector<16x8xf32>
      %c1_326 = arith.constant 1 : index
      %665 = arith.index_cast %8 : i32 to index
      %c0_327 = arith.constant 0 : index
      %c0_328 = arith.constant 0 : index
      %666 = vector.load %arg1[%c1_326, %665, %c0_327, %c0_328] : memref<8x16x16x8xf32, #tpu.memory_space<vmem>>, vector<1x1x16x8xf32>
      %667 = vector.shape_cast %666 : vector<1x1x16x8xf32> to vector<16x8xf32>
      %668 = vector.broadcast %480 : f32 to vector<16x8xf32>
      %669 = arith.mulf %667, %668 : vector<16x8xf32>
      %670 = arith.addf %664, %669 : vector<16x8xf32>
      %c2_329 = arith.constant 2 : index
      %671 = arith.index_cast %8 : i32 to index
      %c0_330 = arith.constant 0 : index
      %c0_331 = arith.constant 0 : index
      %672 = vector.load %arg1[%c2_329, %671, %c0_330, %c0_331] : memref<8x16x16x8xf32, #tpu.memory_space<vmem>>, vector<1x1x16x8xf32>
      %673 = vector.shape_cast %672 : vector<1x1x16x8xf32> to vector<16x8xf32>
      %674 = vector.broadcast %481 : f32 to vector<16x8xf32>
      %675 = arith.mulf %673, %674 : vector<16x8xf32>
      %676 = arith.addf %670, %675 : vector<16x8xf32>
      %c3_332 = arith.constant 3 : index
      %677 = arith.index_cast %8 : i32 to index
      %c0_333 = arith.constant 0 : index
      %c0_334 = arith.constant 0 : index
      %678 = vector.load %arg1[%c3_332, %677, %c0_333, %c0_334] : memref<8x16x16x8xf32, #tpu.memory_space<vmem>>, vector<1x1x16x8xf32>
      %679 = vector.shape_cast %678 : vector<1x1x16x8xf32> to vector<16x8xf32>
      %680 = vector.broadcast %482 : f32 to vector<16x8xf32>
      %681 = arith.mulf %679, %680 : vector<16x8xf32>
      %682 = arith.addf %676, %681 : vector<16x8xf32>
      %c5_335 = arith.constant 5 : index
      %683 = arith.index_cast %8 : i32 to index
      %c0_336 = arith.constant 0 : index
      %c0_337 = arith.constant 0 : index
      %684 = vector.load %arg1[%c5_335, %683, %c0_336, %c0_337] : memref<8x16x16x8xf32, #tpu.memory_space<vmem>>, vector<1x1x16x8xf32>
      %685 = vector.shape_cast %684 : vector<1x1x16x8xf32> to vector<16x8xf32>
      %686 = vector.broadcast %483 : f32 to vector<16x8xf32>
      %687 = arith.mulf %685, %686 : vector<16x8xf32>
      %688 = arith.addf %682, %687 : vector<16x8xf32>
      %c6_338 = arith.constant 6 : index
      %689 = arith.index_cast %8 : i32 to index
      %c0_339 = arith.constant 0 : index
      %c0_340 = arith.constant 0 : index
      %690 = vector.load %arg1[%c6_338, %689, %c0_339, %c0_340] : memref<8x16x16x8xf32, #tpu.memory_space<vmem>>, vector<1x1x16x8xf32>
      %691 = vector.shape_cast %690 : vector<1x1x16x8xf32> to vector<16x8xf32>
      %692 = vector.broadcast %484 : f32 to vector<16x8xf32>
      %693 = arith.mulf %691, %692 : vector<16x8xf32>
      %694 = arith.addf %688, %693 : vector<16x8xf32>
      %c7_341 = arith.constant 7 : index
      %695 = arith.index_cast %8 : i32 to index
      %c0_342 = arith.constant 0 : index
      %c0_343 = arith.constant 0 : index
      %696 = vector.load %arg1[%c7_341, %695, %c0_342, %c0_343] : memref<8x16x16x8xf32, #tpu.memory_space<vmem>>, vector<1x1x16x8xf32>
      %697 = vector.shape_cast %696 : vector<1x1x16x8xf32> to vector<16x8xf32>
      %698 = vector.broadcast %485 : f32 to vector<16x8xf32>
      %699 = arith.mulf %697, %698 : vector<16x8xf32>
      %700 = arith.addf %694, %699 : vector<16x8xf32>
      %701 = arith.maximumf %647, %700 : vector<16x8xf32>
      %702 = vector.broadcast %486 : f32 to vector<16x8xf32>
      %703 = arith.addf %701, %702 : vector<16x8xf32>
      %cst_344 = arith.constant 0.000000e+00 : f32
      %704 = vector.broadcast %cst_344 : f32 to vector<16x8xf32>
      %705 = arith.maximumf %703, %704 : vector<16x8xf32>
      %c30_i32 = arith.constant 30 : i32
      %706 = arith.addi %c30_i32, %arg8 : i32
      %c16_i32_345 = arith.constant 16 : i32
      %707 = arith.muli %706, %c16_i32_345 : i32
      %708 = tpu.assume_multiple %707, 16 : i32
      %709 = arith.index_cast %708 : i32 to index
      %c0_346 = arith.constant 0 : index
      %710 = vector.load %arg7[%709, %c0_346] : memref<1440x8xf32, #tpu.memory_space<vmem>>, vector<16x8xf32>
      tpu.vector_store %arg7[%709, %c0_346], %705 {strides = array<i32>} : memref<1440x8xf32, #tpu.memory_space<vmem>>, vector<16x8xf32>,
      %c27 = arith.constant 27 : index
      %711 = memref.load %arg2[%c27] : memref<54xf32, #tpu.memory_space<smem>>
      %c28 = arith.constant 28 : index
      %712 = memref.load %arg2[%c28] : memref<54xf32, #tpu.memory_space<smem>>
      %c29 = arith.constant 29 : index
      %713 = memref.load %arg2[%c29] : memref<54xf32, #tpu.memory_space<smem>>
      %c30 = arith.constant 30 : index
      %714 = memref.load %arg2[%c30] : memref<54xf32, #tpu.memory_space<smem>>
      %c31 = arith.constant 31 : index
      %715 = memref.load %arg2[%c31] : memref<54xf32, #tpu.memory_space<smem>>
      %c32 = arith.constant 32 : index
      %716 = memref.load %arg2[%c32] : memref<54xf32, #tpu.memory_space<smem>>
      %c33 = arith.constant 33 : index
      %717 = memref.load %arg2[%c33] : memref<54xf32, #tpu.memory_space<smem>>
      %c34 = arith.constant 34 : index
      %718 = memref.load %arg2[%c34] : memref<54xf32, #tpu.memory_space<smem>>
      %c35 = arith.constant 35 : index
      %719 = memref.load %arg2[%c35] : memref<54xf32, #tpu.memory_space<smem>>
      %c3_347 = arith.constant 3 : index
      %720 = memref.load %arg3[%c3_347] : memref<6xf32, #tpu.memory_space<smem>>
      %c0_348 = arith.constant 0 : index
      %721 = arith.index_cast %arg8 : i32 to index
      %c0_349 = arith.constant 0 : index
      %c0_350 = arith.constant 0 : index
      %722 = vector.load %arg1[%c0_348, %721, %c0_349, %c0_350] : memref<8x16x16x8xf32, #tpu.memory_space<vmem>>, vector<1x1x16x8xf32>
      %723 = vector.shape_cast %722 : vector<1x1x16x8xf32> to vector<16x8xf32>
      %724 = vector.broadcast %711 : f32 to vector<16x8xf32>
      %725 = arith.mulf %723, %724 : vector<16x8xf32>
      %c1_351 = arith.constant 1 : index
      %726 = arith.index_cast %arg8 : i32 to index
      %c0_352 = arith.constant 0 : index
      %c0_353 = arith.constant 0 : index
      %727 = vector.load %arg1[%c1_351, %726, %c0_352, %c0_353] : memref<8x16x16x8xf32, #tpu.memory_space<vmem>>, vector<1x1x16x8xf32>
      %728 = vector.shape_cast %727 : vector<1x1x16x8xf32> to vector<16x8xf32>
      %729 = vector.broadcast %712 : f32 to vector<16x8xf32>
      %730 = arith.mulf %728, %729 : vector<16x8xf32>
      %731 = arith.addf %725, %730 : vector<16x8xf32>
      %c2_354 = arith.constant 2 : index
      %732 = arith.index_cast %arg8 : i32 to index
      %c0_355 = arith.constant 0 : index
      %c0_356 = arith.constant 0 : index
      %733 = vector.load %arg1[%c2_354, %732, %c0_355, %c0_356] : memref<8x16x16x8xf32, #tpu.memory_space<vmem>>, vector<1x1x16x8xf32>
      %734 = vector.shape_cast %733 : vector<1x1x16x8xf32> to vector<16x8xf32>
      %735 = vector.broadcast %713 : f32 to vector<16x8xf32>
      %736 = arith.mulf %734, %735 : vector<16x8xf32>
      %737 = arith.addf %731, %736 : vector<16x8xf32>
      %c4_357 = arith.constant 4 : index
      %738 = arith.index_cast %arg8 : i32 to index
      %c0_358 = arith.constant 0 : index
      %c0_359 = arith.constant 0 : index
      %739 = vector.load %arg1[%c4_357, %738, %c0_358, %c0_359] : memref<8x16x16x8xf32, #tpu.memory_space<vmem>>, vector<1x1x16x8xf32>
      %740 = vector.shape_cast %739 : vector<1x1x16x8xf32> to vector<16x8xf32>
      %741 = vector.broadcast %714 : f32 to vector<16x8xf32>
      %742 = arith.mulf %740, %741 : vector<16x8xf32>
      %743 = arith.addf %737, %742 : vector<16x8xf32>
      %c5_360 = arith.constant 5 : index
      %744 = arith.index_cast %arg8 : i32 to index
      %c0_361 = arith.constant 0 : index
      %c0_362 = arith.constant 0 : index
      %745 = vector.load %arg1[%c5_360, %744, %c0_361, %c0_362] : memref<8x16x16x8xf32, #tpu.memory_space<vmem>>, vector<1x1x16x8xf32>
      %746 = vector.shape_cast %745 : vector<1x1x16x8xf32> to vector<16x8xf32>
      %747 = vector.broadcast %715 : f32 to vector<16x8xf32>
      %748 = arith.mulf %746, %747 : vector<16x8xf32>
      %749 = arith.addf %743, %748 : vector<16x8xf32>
      %c6_363 = arith.constant 6 : index
      %750 = arith.index_cast %arg8 : i32 to index
      %c0_364 = arith.constant 0 : index
      %c0_365 = arith.constant 0 : index
      %751 = vector.load %arg1[%c6_363, %750, %c0_364, %c0_365] : memref<8x16x16x8xf32, #tpu.memory_space<vmem>>, vector<1x1x16x8xf32>
      %752 = vector.shape_cast %751 : vector<1x1x16x8xf32> to vector<16x8xf32>
      %753 = vector.broadcast %716 : f32 to vector<16x8xf32>
      %754 = arith.mulf %752, %753 : vector<16x8xf32>
      %755 = arith.addf %749, %754 : vector<16x8xf32>
      %c0_366 = arith.constant 0 : index
      %756 = arith.index_cast %8 : i32 to index
      %c0_367 = arith.constant 0 : index
      %c0_368 = arith.constant 0 : index
      %757 = vector.load %arg1[%c0_366, %756, %c0_367, %c0_368] : memref<8x16x16x8xf32, #tpu.memory_space<vmem>>, vector<1x1x16x8xf32>
      %758 = vector.shape_cast %757 : vector<1x1x16x8xf32> to vector<16x8xf32>
      %759 = vector.broadcast %717 : f32 to vector<16x8xf32>
      %760 = arith.mulf %758, %759 : vector<16x8xf32>
      %761 = arith.addf %755, %760 : vector<16x8xf32>
      %c1_369 = arith.constant 1 : index
      %762 = arith.index_cast %8 : i32 to index
      %c0_370 = arith.constant 0 : index
      %c0_371 = arith.constant 0 : index
      %763 = vector.load %arg1[%c1_369, %762, %c0_370, %c0_371] : memref<8x16x16x8xf32, #tpu.memory_space<vmem>>, vector<1x1x16x8xf32>
      %764 = vector.shape_cast %763 : vector<1x1x16x8xf32> to vector<16x8xf32>
      %765 = vector.broadcast %718 : f32 to vector<16x8xf32>
      %766 = arith.mulf %764, %765 : vector<16x8xf32>
      %767 = arith.addf %761, %766 : vector<16x8xf32>
      %c2_372 = arith.constant 2 : index
      %768 = arith.index_cast %8 : i32 to index
      %c0_373 = arith.constant 0 : index
      %c0_374 = arith.constant 0 : index
      %769 = vector.load %arg1[%c2_372, %768, %c0_373, %c0_374] : memref<8x16x16x8xf32, #tpu.memory_space<vmem>>, vector<1x1x16x8xf32>
      %770 = vector.shape_cast %769 : vector<1x1x16x8xf32> to vector<16x8xf32>
      %771 = vector.broadcast %719 : f32 to vector<16x8xf32>
      %772 = arith.mulf %770, %771 : vector<16x8xf32>
      %773 = arith.addf %767, %772 : vector<16x8xf32>
      %c1_375 = arith.constant 1 : index
      %774 = arith.index_cast %arg8 : i32 to index
      %c0_376 = arith.constant 0 : index
      %c0_377 = arith.constant 0 : index
      %775 = vector.load %arg1[%c1_375, %774, %c0_376, %c0_377] : memref<8x16x16x8xf32, #tpu.memory_space<vmem>>, vector<1x1x16x8xf32>
      %776 = vector.shape_cast %775 : vector<1x1x16x8xf32> to vector<16x8xf32>
      %777 = vector.broadcast %711 : f32 to vector<16x8xf32>
      %778 = arith.mulf %776, %777 : vector<16x8xf32>
      %c2_378 = arith.constant 2 : index
      %779 = arith.index_cast %arg8 : i32 to index
      %c0_379 = arith.constant 0 : index
      %c0_380 = arith.constant 0 : index
      %780 = vector.load %arg1[%c2_378, %779, %c0_379, %c0_380] : memref<8x16x16x8xf32, #tpu.memory_space<vmem>>, vector<1x1x16x8xf32>
      %781 = vector.shape_cast %780 : vector<1x1x16x8xf32> to vector<16x8xf32>
      %782 = vector.broadcast %712 : f32 to vector<16x8xf32>
      %783 = arith.mulf %781, %782 : vector<16x8xf32>
      %784 = arith.addf %778, %783 : vector<16x8xf32>
      %c3_381 = arith.constant 3 : index
      %785 = arith.index_cast %arg8 : i32 to index
      %c0_382 = arith.constant 0 : index
      %c0_383 = arith.constant 0 : index
      %786 = vector.load %arg1[%c3_381, %785, %c0_382, %c0_383] : memref<8x16x16x8xf32, #tpu.memory_space<vmem>>, vector<1x1x16x8xf32>
      %787 = vector.shape_cast %786 : vector<1x1x16x8xf32> to vector<16x8xf32>
      %788 = vector.broadcast %713 : f32 to vector<16x8xf32>
      %789 = arith.mulf %787, %788 : vector<16x8xf32>
      %790 = arith.addf %784, %789 : vector<16x8xf32>
      %c5_384 = arith.constant 5 : index
      %791 = arith.index_cast %arg8 : i32 to index
      %c0_385 = arith.constant 0 : index
      %c0_386 = arith.constant 0 : index
      %792 = vector.load %arg1[%c5_384, %791, %c0_385, %c0_386] : memref<8x16x16x8xf32, #tpu.memory_space<vmem>>, vector<1x1x16x8xf32>
      %793 = vector.shape_cast %792 : vector<1x1x16x8xf32> to vector<16x8xf32>
      %794 = vector.broadcast %714 : f32 to vector<16x8xf32>
      %795 = arith.mulf %793, %794 : vector<16x8xf32>
      %796 = arith.addf %790, %795 : vector<16x8xf32>
      %c6_387 = arith.constant 6 : index
      %797 = arith.index_cast %arg8 : i32 to index
      %c0_388 = arith.constant 0 : index
      %c0_389 = arith.constant 0 : index
      %798 = vector.load %arg1[%c6_387, %797, %c0_388, %c0_389] : memref<8x16x16x8xf32, #tpu.memory_space<vmem>>, vector<1x1x16x8xf32>
      %799 = vector.shape_cast %798 : vector<1x1x16x8xf32> to vector<16x8xf32>
      %800 = vector.broadcast %715 : f32 to vector<16x8xf32>
      %801 = arith.mulf %799, %800 : vector<16x8xf32>
      %802 = arith.addf %796, %801 : vector<16x8xf32>
      %c7_390 = arith.constant 7 : index
      %803 = arith.index_cast %arg8 : i32 to index
      %c0_391 = arith.constant 0 : index
      %c0_392 = arith.constant 0 : index
      %804 = vector.load %arg1[%c7_390, %803, %c0_391, %c0_392] : memref<8x16x16x8xf32, #tpu.memory_space<vmem>>, vector<1x1x16x8xf32>
      %805 = vector.shape_cast %804 : vector<1x1x16x8xf32> to vector<16x8xf32>
      %806 = vector.broadcast %716 : f32 to vector<16x8xf32>
      %807 = arith.mulf %805, %806 : vector<16x8xf32>
      %808 = arith.addf %802, %807 : vector<16x8xf32>
      %c1_393 = arith.constant 1 : index
      %809 = arith.index_cast %8 : i32 to index
      %c0_394 = arith.constant 0 : index
      %c0_395 = arith.constant 0 : index
      %810 = vector.load %arg1[%c1_393, %809, %c0_394, %c0_395] : memref<8x16x16x8xf32, #tpu.memory_space<vmem>>, vector<1x1x16x8xf32>
      %811 = vector.shape_cast %810 : vector<1x1x16x8xf32> to vector<16x8xf32>
      %812 = vector.broadcast %717 : f32 to vector<16x8xf32>
      %813 = arith.mulf %811, %812 : vector<16x8xf32>
      %814 = arith.addf %808, %813 : vector<16x8xf32>
      %c2_396 = arith.constant 2 : index
      %815 = arith.index_cast %8 : i32 to index
      %c0_397 = arith.constant 0 : index
      %c0_398 = arith.constant 0 : index
      %816 = vector.load %arg1[%c2_396, %815, %c0_397, %c0_398] : memref<8x16x16x8xf32, #tpu.memory_space<vmem>>, vector<1x1x16x8xf32>
      %817 = vector.shape_cast %816 : vector<1x1x16x8xf32> to vector<16x8xf32>
      %818 = vector.broadcast %718 : f32 to vector<16x8xf32>
      %819 = arith.mulf %817, %818 : vector<16x8xf32>
      %820 = arith.addf %814, %819 : vector<16x8xf32>
      %c3_399 = arith.constant 3 : index
      %821 = arith.index_cast %8 : i32 to index
      %c0_400 = arith.constant 0 : index
      %c0_401 = arith.constant 0 : index
      %822 = vector.load %arg1[%c3_399, %821, %c0_400, %c0_401] : memref<8x16x16x8xf32, #tpu.memory_space<vmem>>, vector<1x1x16x8xf32>
      %823 = vector.shape_cast %822 : vector<1x1x16x8xf32> to vector<16x8xf32>
      %824 = vector.broadcast %719 : f32 to vector<16x8xf32>
      %825 = arith.mulf %823, %824 : vector<16x8xf32>
      %826 = arith.addf %820, %825 : vector<16x8xf32>
      %827 = arith.maximumf %773, %826 : vector<16x8xf32>
      %c4_402 = arith.constant 4 : index
      %828 = arith.index_cast %arg8 : i32 to index
      %c0_403 = arith.constant 0 : index
      %c0_404 = arith.constant 0 : index
      %829 = vector.load %arg1[%c4_402, %828, %c0_403, %c0_404] : memref<8x16x16x8xf32, #tpu.memory_space<vmem>>, vector<1x1x16x8xf32>
      %830 = vector.shape_cast %829 : vector<1x1x16x8xf32> to vector<16x8xf32>
      %831 = vector.broadcast %711 : f32 to vector<16x8xf32>
      %832 = arith.mulf %830, %831 : vector<16x8xf32>
      %c5_405 = arith.constant 5 : index
      %833 = arith.index_cast %arg8 : i32 to index
      %c0_406 = arith.constant 0 : index
      %c0_407 = arith.constant 0 : index
      %834 = vector.load %arg1[%c5_405, %833, %c0_406, %c0_407] : memref<8x16x16x8xf32, #tpu.memory_space<vmem>>, vector<1x1x16x8xf32>
      %835 = vector.shape_cast %834 : vector<1x1x16x8xf32> to vector<16x8xf32>
      %836 = vector.broadcast %712 : f32 to vector<16x8xf32>
      %837 = arith.mulf %835, %836 : vector<16x8xf32>
      %838 = arith.addf %832, %837 : vector<16x8xf32>
      %c6_408 = arith.constant 6 : index
      %839 = arith.index_cast %arg8 : i32 to index
      %c0_409 = arith.constant 0 : index
      %c0_410 = arith.constant 0 : index
      %840 = vector.load %arg1[%c6_408, %839, %c0_409, %c0_410] : memref<8x16x16x8xf32, #tpu.memory_space<vmem>>, vector<1x1x16x8xf32>
      %841 = vector.shape_cast %840 : vector<1x1x16x8xf32> to vector<16x8xf32>
      %842 = vector.broadcast %713 : f32 to vector<16x8xf32>
      %843 = arith.mulf %841, %842 : vector<16x8xf32>
      %844 = arith.addf %838, %843 : vector<16x8xf32>
      %c0_411 = arith.constant 0 : index
      %845 = arith.index_cast %8 : i32 to index
      %c0_412 = arith.constant 0 : index
      %c0_413 = arith.constant 0 : index
      %846 = vector.load %arg1[%c0_411, %845, %c0_412, %c0_413] : memref<8x16x16x8xf32, #tpu.memory_space<vmem>>, vector<1x1x16x8xf32>
      %847 = vector.shape_cast %846 : vector<1x1x16x8xf32> to vector<16x8xf32>
      %848 = vector.broadcast %714 : f32 to vector<16x8xf32>
      %849 = arith.mulf %847, %848 : vector<16x8xf32>
      %850 = arith.addf %844, %849 : vector<16x8xf32>
      %c1_414 = arith.constant 1 : index
      %851 = arith.index_cast %8 : i32 to index
      %c0_415 = arith.constant 0 : index
      %c0_416 = arith.constant 0 : index
      %852 = vector.load %arg1[%c1_414, %851, %c0_415, %c0_416] : memref<8x16x16x8xf32, #tpu.memory_space<vmem>>, vector<1x1x16x8xf32>
      %853 = vector.shape_cast %852 : vector<1x1x16x8xf32> to vector<16x8xf32>
      %854 = vector.broadcast %715 : f32 to vector<16x8xf32>
      %855 = arith.mulf %853, %854 : vector<16x8xf32>
      %856 = arith.addf %850, %855 : vector<16x8xf32>
      %c2_417 = arith.constant 2 : index
      %857 = arith.index_cast %8 : i32 to index
      %c0_418 = arith.constant 0 : index
      %c0_419 = arith.constant 0 : index
      %858 = vector.load %arg1[%c2_417, %857, %c0_418, %c0_419] : memref<8x16x16x8xf32, #tpu.memory_space<vmem>>, vector<1x1x16x8xf32>
      %859 = vector.shape_cast %858 : vector<1x1x16x8xf32> to vector<16x8xf32>
      %860 = vector.broadcast %716 : f32 to vector<16x8xf32>
      %861 = arith.mulf %859, %860 : vector<16x8xf32>
      %862 = arith.addf %856, %861 : vector<16x8xf32>
      %c4_420 = arith.constant 4 : index
      %863 = arith.index_cast %8 : i32 to index
      %c0_421 = arith.constant 0 : index
      %c0_422 = arith.constant 0 : index
      %864 = vector.load %arg1[%c4_420, %863, %c0_421, %c0_422] : memref<8x16x16x8xf32, #tpu.memory_space<vmem>>, vector<1x1x16x8xf32>
      %865 = vector.shape_cast %864 : vector<1x1x16x8xf32> to vector<16x8xf32>
      %866 = vector.broadcast %717 : f32 to vector<16x8xf32>
      %867 = arith.mulf %865, %866 : vector<16x8xf32>
      %868 = arith.addf %862, %867 : vector<16x8xf32>
      %c5_423 = arith.constant 5 : index
      %869 = arith.index_cast %8 : i32 to index
      %c0_424 = arith.constant 0 : index
      %c0_425 = arith.constant 0 : index
      %870 = vector.load %arg1[%c5_423, %869, %c0_424, %c0_425] : memref<8x16x16x8xf32, #tpu.memory_space<vmem>>, vector<1x1x16x8xf32>
      %871 = vector.shape_cast %870 : vector<1x1x16x8xf32> to vector<16x8xf32>
      %872 = vector.broadcast %718 : f32 to vector<16x8xf32>
      %873 = arith.mulf %871, %872 : vector<16x8xf32>
      %874 = arith.addf %868, %873 : vector<16x8xf32>
      %c6_426 = arith.constant 6 : index
      %875 = arith.index_cast %8 : i32 to index
      %c0_427 = arith.constant 0 : index
      %c0_428 = arith.constant 0 : index
      %876 = vector.load %arg1[%c6_426, %875, %c0_427, %c0_428] : memref<8x16x16x8xf32, #tpu.memory_space<vmem>>, vector<1x1x16x8xf32>
      %877 = vector.shape_cast %876 : vector<1x1x16x8xf32> to vector<16x8xf32>
      %878 = vector.broadcast %719 : f32 to vector<16x8xf32>
      %879 = arith.mulf %877, %878 : vector<16x8xf32>
      %880 = arith.addf %874, %879 : vector<16x8xf32>
      %881 = arith.maximumf %827, %880 : vector<16x8xf32>
      %c5_429 = arith.constant 5 : index
      %882 = arith.index_cast %arg8 : i32 to index
      %c0_430 = arith.constant 0 : index
      %c0_431 = arith.constant 0 : index
      %883 = vector.load %arg1[%c5_429, %882, %c0_430, %c0_431] : memref<8x16x16x8xf32, #tpu.memory_space<vmem>>, vector<1x1x16x8xf32>
      %884 = vector.shape_cast %883 : vector<1x1x16x8xf32> to vector<16x8xf32>
      %885 = vector.broadcast %711 : f32 to vector<16x8xf32>
      %886 = arith.mulf %884, %885 : vector<16x8xf32>
      %c6_432 = arith.constant 6 : index
      %887 = arith.index_cast %arg8 : i32 to index
      %c0_433 = arith.constant 0 : index
      %c0_434 = arith.constant 0 : index
      %888 = vector.load %arg1[%c6_432, %887, %c0_433, %c0_434] : memref<8x16x16x8xf32, #tpu.memory_space<vmem>>, vector<1x1x16x8xf32>
      %889 = vector.shape_cast %888 : vector<1x1x16x8xf32> to vector<16x8xf32>
      %890 = vector.broadcast %712 : f32 to vector<16x8xf32>
      %891 = arith.mulf %889, %890 : vector<16x8xf32>
      %892 = arith.addf %886, %891 : vector<16x8xf32>
      %c7_435 = arith.constant 7 : index
      %893 = arith.index_cast %arg8 : i32 to index
      %c0_436 = arith.constant 0 : index
      %c0_437 = arith.constant 0 : index
      %894 = vector.load %arg1[%c7_435, %893, %c0_436, %c0_437] : memref<8x16x16x8xf32, #tpu.memory_space<vmem>>, vector<1x1x16x8xf32>
      %895 = vector.shape_cast %894 : vector<1x1x16x8xf32> to vector<16x8xf32>
      %896 = vector.broadcast %713 : f32 to vector<16x8xf32>
      %897 = arith.mulf %895, %896 : vector<16x8xf32>
      %898 = arith.addf %892, %897 : vector<16x8xf32>
      %c1_438 = arith.constant 1 : index
      %899 = arith.index_cast %8 : i32 to index
      %c0_439 = arith.constant 0 : index
      %c0_440 = arith.constant 0 : index
      %900 = vector.load %arg1[%c1_438, %899, %c0_439, %c0_440] : memref<8x16x16x8xf32, #tpu.memory_space<vmem>>, vector<1x1x16x8xf32>
      %901 = vector.shape_cast %900 : vector<1x1x16x8xf32> to vector<16x8xf32>
      %902 = vector.broadcast %714 : f32 to vector<16x8xf32>
      %903 = arith.mulf %901, %902 : vector<16x8xf32>
      %904 = arith.addf %898, %903 : vector<16x8xf32>
      %c2_441 = arith.constant 2 : index
      %905 = arith.index_cast %8 : i32 to index
      %c0_442 = arith.constant 0 : index
      %c0_443 = arith.constant 0 : index
      %906 = vector.load %arg1[%c2_441, %905, %c0_442, %c0_443] : memref<8x16x16x8xf32, #tpu.memory_space<vmem>>, vector<1x1x16x8xf32>
      %907 = vector.shape_cast %906 : vector<1x1x16x8xf32> to vector<16x8xf32>
      %908 = vector.broadcast %715 : f32 to vector<16x8xf32>
      %909 = arith.mulf %907, %908 : vector<16x8xf32>
      %910 = arith.addf %904, %909 : vector<16x8xf32>
      %c3_444 = arith.constant 3 : index
      %911 = arith.index_cast %8 : i32 to index
      %c0_445 = arith.constant 0 : index
      %c0_446 = arith.constant 0 : index
      %912 = vector.load %arg1[%c3_444, %911, %c0_445, %c0_446] : memref<8x16x16x8xf32, #tpu.memory_space<vmem>>, vector<1x1x16x8xf32>
      %913 = vector.shape_cast %912 : vector<1x1x16x8xf32> to vector<16x8xf32>
      %914 = vector.broadcast %716 : f32 to vector<16x8xf32>
      %915 = arith.mulf %913, %914 : vector<16x8xf32>
      %916 = arith.addf %910, %915 : vector<16x8xf32>
      %c5_447 = arith.constant 5 : index
      %917 = arith.index_cast %8 : i32 to index
      %c0_448 = arith.constant 0 : index
      %c0_449 = arith.constant 0 : index
      %918 = vector.load %arg1[%c5_447, %917, %c0_448, %c0_449] : memref<8x16x16x8xf32, #tpu.memory_space<vmem>>, vector<1x1x16x8xf32>
      %919 = vector.shape_cast %918 : vector<1x1x16x8xf32> to vector<16x8xf32>
      %920 = vector.broadcast %717 : f32 to vector<16x8xf32>
      %921 = arith.mulf %919, %920 : vector<16x8xf32>
      %922 = arith.addf %916, %921 : vector<16x8xf32>
      %c6_450 = arith.constant 6 : index
      %923 = arith.index_cast %8 : i32 to index
      %c0_451 = arith.constant 0 : index
      %c0_452 = arith.constant 0 : index
      %924 = vector.load %arg1[%c6_450, %923, %c0_451, %c0_452] : memref<8x16x16x8xf32, #tpu.memory_space<vmem>>, vector<1x1x16x8xf32>
      %925 = vector.shape_cast %924 : vector<1x1x16x8xf32> to vector<16x8xf32>
      %926 = vector.broadcast %718 : f32 to vector<16x8xf32>
      %927 = arith.mulf %925, %926 : vector<16x8xf32>
      %928 = arith.addf %922, %927 : vector<16x8xf32>
      %c7_453 = arith.constant 7 : index
      %929 = arith.index_cast %8 : i32 to index
      %c0_454 = arith.constant 0 : index
      %c0_455 = arith.constant 0 : index
      %930 = vector.load %arg1[%c7_453, %929, %c0_454, %c0_455] : memref<8x16x16x8xf32, #tpu.memory_space<vmem>>, vector<1x1x16x8xf32>
      %931 = vector.shape_cast %930 : vector<1x1x16x8xf32> to vector<16x8xf32>
      %932 = vector.broadcast %719 : f32 to vector<16x8xf32>
      %933 = arith.mulf %931, %932 : vector<16x8xf32>
      %934 = arith.addf %928, %933 : vector<16x8xf32>
      %935 = arith.maximumf %881, %934 : vector<16x8xf32>
      %936 = vector.broadcast %720 : f32 to vector<16x8xf32>
      %937 = arith.addf %935, %936 : vector<16x8xf32>
      %cst_456 = arith.constant 0.000000e+00 : f32
      %938 = vector.broadcast %cst_456 : f32 to vector<16x8xf32>
      %939 = arith.maximumf %937, %938 : vector<16x8xf32>
      %c45_i32 = arith.constant 45 : i32
      %940 = arith.addi %c45_i32, %arg8 : i32
      %c16_i32_457 = arith.constant 16 : i32
      %941 = arith.muli %940, %c16_i32_457 : i32
      %942 = tpu.assume_multiple %941, 16 : i32
      %943 = arith.index_cast %942 : i32 to index
      %c0_458 = arith.constant 0 : index
      %944 = vector.load %arg7[%943, %c0_458] : memref<1440x8xf32, #tpu.memory_space<vmem>>, vector<16x8xf32>
      tpu.vector_store %arg7[%943, %c0_458], %939 {strides = array<i32>} : memref<1440x8xf32, #tpu.memory_space<vmem>>, vector<16x8xf32>,
      %c36 = arith.constant 36 : index
      %945 = memref.load %arg2[%c36] : memref<54xf32, #tpu.memory_space<smem>>
      %c37 = arith.constant 37 : index
      %946 = memref.load %arg2[%c37] : memref<54xf32, #tpu.memory_space<smem>>
      %c38 = arith.constant 38 : index
      %947 = memref.load %arg2[%c38] : memref<54xf32, #tpu.memory_space<smem>>
      %c39 = arith.constant 39 : index
      %948 = memref.load %arg2[%c39] : memref<54xf32, #tpu.memory_space<smem>>
      %c40 = arith.constant 40 : index
      %949 = memref.load %arg2[%c40] : memref<54xf32, #tpu.memory_space<smem>>
      %c41 = arith.constant 41 : index
      %950 = memref.load %arg2[%c41] : memref<54xf32, #tpu.memory_space<smem>>
      %c42 = arith.constant 42 : index
      %951 = memref.load %arg2[%c42] : memref<54xf32, #tpu.memory_space<smem>>
      %c43 = arith.constant 43 : index
      %952 = memref.load %arg2[%c43] : memref<54xf32, #tpu.memory_space<smem>>
      %c44 = arith.constant 44 : index
      %953 = memref.load %arg2[%c44] : memref<54xf32, #tpu.memory_space<smem>>
      %c4_459 = arith.constant 4 : index
      %954 = memref.load %arg3[%c4_459] : memref<6xf32, #tpu.memory_space<smem>>
      %c0_460 = arith.constant 0 : index
      %955 = arith.index_cast %arg8 : i32 to index
      %c0_461 = arith.constant 0 : index
      %c0_462 = arith.constant 0 : index
      %956 = vector.load %arg1[%c0_460, %955, %c0_461, %c0_462] : memref<8x16x16x8xf32, #tpu.memory_space<vmem>>, vector<1x1x16x8xf32>
      %957 = vector.shape_cast %956 : vector<1x1x16x8xf32> to vector<16x8xf32>
      %958 = vector.broadcast %945 : f32 to vector<16x8xf32>
      %959 = arith.mulf %957, %958 : vector<16x8xf32>
      %c1_463 = arith.constant 1 : index
      %960 = arith.index_cast %arg8 : i32 to index
      %c0_464 = arith.constant 0 : index
      %c0_465 = arith.constant 0 : index
      %961 = vector.load %arg1[%c1_463, %960, %c0_464, %c0_465] : memref<8x16x16x8xf32, #tpu.memory_space<vmem>>, vector<1x1x16x8xf32>
      %962 = vector.shape_cast %961 : vector<1x1x16x8xf32> to vector<16x8xf32>
      %963 = vector.broadcast %946 : f32 to vector<16x8xf32>
      %964 = arith.mulf %962, %963 : vector<16x8xf32>
      %965 = arith.addf %959, %964 : vector<16x8xf32>
      %c2_466 = arith.constant 2 : index
      %966 = arith.index_cast %arg8 : i32 to index
      %c0_467 = arith.constant 0 : index
      %c0_468 = arith.constant 0 : index
      %967 = vector.load %arg1[%c2_466, %966, %c0_467, %c0_468] : memref<8x16x16x8xf32, #tpu.memory_space<vmem>>, vector<1x1x16x8xf32>
      %968 = vector.shape_cast %967 : vector<1x1x16x8xf32> to vector<16x8xf32>
      %969 = vector.broadcast %947 : f32 to vector<16x8xf32>
      %970 = arith.mulf %968, %969 : vector<16x8xf32>
      %971 = arith.addf %965, %970 : vector<16x8xf32>
      %c4_469 = arith.constant 4 : index
      %972 = arith.index_cast %arg8 : i32 to index
      %c0_470 = arith.constant 0 : index
      %c0_471 = arith.constant 0 : index
      %973 = vector.load %arg1[%c4_469, %972, %c0_470, %c0_471] : memref<8x16x16x8xf32, #tpu.memory_space<vmem>>, vector<1x1x16x8xf32>
      %974 = vector.shape_cast %973 : vector<1x1x16x8xf32> to vector<16x8xf32>
      %975 = vector.broadcast %948 : f32 to vector<16x8xf32>
      %976 = arith.mulf %974, %975 : vector<16x8xf32>
      %977 = arith.addf %971, %976 : vector<16x8xf32>
      %c5_472 = arith.constant 5 : index
      %978 = arith.index_cast %arg8 : i32 to index
      %c0_473 = arith.constant 0 : index
      %c0_474 = arith.constant 0 : index
      %979 = vector.load %arg1[%c5_472, %978, %c0_473, %c0_474] : memref<8x16x16x8xf32, #tpu.memory_space<vmem>>, vector<1x1x16x8xf32>
      %980 = vector.shape_cast %979 : vector<1x1x16x8xf32> to vector<16x8xf32>
      %981 = vector.broadcast %949 : f32 to vector<16x8xf32>
      %982 = arith.mulf %980, %981 : vector<16x8xf32>
      %983 = arith.addf %977, %982 : vector<16x8xf32>
      %c6_475 = arith.constant 6 : index
      %984 = arith.index_cast %arg8 : i32 to index
      %c0_476 = arith.constant 0 : index
      %c0_477 = arith.constant 0 : index
      %985 = vector.load %arg1[%c6_475, %984, %c0_476, %c0_477] : memref<8x16x16x8xf32, #tpu.memory_space<vmem>>, vector<1x1x16x8xf32>
      %986 = vector.shape_cast %985 : vector<1x1x16x8xf32> to vector<16x8xf32>
      %987 = vector.broadcast %950 : f32 to vector<16x8xf32>
      %988 = arith.mulf %986, %987 : vector<16x8xf32>
      %989 = arith.addf %983, %988 : vector<16x8xf32>
      %c0_478 = arith.constant 0 : index
      %990 = arith.index_cast %8 : i32 to index
      %c0_479 = arith.constant 0 : index
      %c0_480 = arith.constant 0 : index
      %991 = vector.load %arg1[%c0_478, %990, %c0_479, %c0_480] : memref<8x16x16x8xf32, #tpu.memory_space<vmem>>, vector<1x1x16x8xf32>
      %992 = vector.shape_cast %991 : vector<1x1x16x8xf32> to vector<16x8xf32>
      %993 = vector.broadcast %951 : f32 to vector<16x8xf32>
      %994 = arith.mulf %992, %993 : vector<16x8xf32>
      %995 = arith.addf %989, %994 : vector<16x8xf32>
      %c1_481 = arith.constant 1 : index
      %996 = arith.index_cast %8 : i32 to index
      %c0_482 = arith.constant 0 : index
      %c0_483 = arith.constant 0 : index
      %997 = vector.load %arg1[%c1_481, %996, %c0_482, %c0_483] : memref<8x16x16x8xf32, #tpu.memory_space<vmem>>, vector<1x1x16x8xf32>
      %998 = vector.shape_cast %997 : vector<1x1x16x8xf32> to vector<16x8xf32>
      %999 = vector.broadcast %952 : f32 to vector<16x8xf32>
      %1000 = arith.mulf %998, %999 : vector<16x8xf32>
      %1001 = arith.addf %995, %1000 : vector<16x8xf32>
      %c2_484 = arith.constant 2 : index
      %1002 = arith.index_cast %8 : i32 to index
      %c0_485 = arith.constant 0 : index
      %c0_486 = arith.constant 0 : index
      %1003 = vector.load %arg1[%c2_484, %1002, %c0_485, %c0_486] : memref<8x16x16x8xf32, #tpu.memory_space<vmem>>, vector<1x1x16x8xf32>
      %1004 = vector.shape_cast %1003 : vector<1x1x16x8xf32> to vector<16x8xf32>
      %1005 = vector.broadcast %953 : f32 to vector<16x8xf32>
      %1006 = arith.mulf %1004, %1005 : vector<16x8xf32>
      %1007 = arith.addf %1001, %1006 : vector<16x8xf32>
      %c1_487 = arith.constant 1 : index
      %1008 = arith.index_cast %arg8 : i32 to index
      %c0_488 = arith.constant 0 : index
      %c0_489 = arith.constant 0 : index
      %1009 = vector.load %arg1[%c1_487, %1008, %c0_488, %c0_489] : memref<8x16x16x8xf32, #tpu.memory_space<vmem>>, vector<1x1x16x8xf32>
      %1010 = vector.shape_cast %1009 : vector<1x1x16x8xf32> to vector<16x8xf32>
      %1011 = vector.broadcast %945 : f32 to vector<16x8xf32>
      %1012 = arith.mulf %1010, %1011 : vector<16x8xf32>
      %c2_490 = arith.constant 2 : index
      %1013 = arith.index_cast %arg8 : i32 to index
      %c0_491 = arith.constant 0 : index
      %c0_492 = arith.constant 0 : index
      %1014 = vector.load %arg1[%c2_490, %1013, %c0_491, %c0_492] : memref<8x16x16x8xf32, #tpu.memory_space<vmem>>, vector<1x1x16x8xf32>
      %1015 = vector.shape_cast %1014 : vector<1x1x16x8xf32> to vector<16x8xf32>
      %1016 = vector.broadcast %946 : f32 to vector<16x8xf32>
      %1017 = arith.mulf %1015, %1016 : vector<16x8xf32>
      %1018 = arith.addf %1012, %1017 : vector<16x8xf32>
      %c3_493 = arith.constant 3 : index
      %1019 = arith.index_cast %arg8 : i32 to index
      %c0_494 = arith.constant 0 : index
      %c0_495 = arith.constant 0 : index
      %1020 = vector.load %arg1[%c3_493, %1019, %c0_494, %c0_495] : memref<8x16x16x8xf32, #tpu.memory_space<vmem>>, vector<1x1x16x8xf32>
      %1021 = vector.shape_cast %1020 : vector<1x1x16x8xf32> to vector<16x8xf32>
      %1022 = vector.broadcast %947 : f32 to vector<16x8xf32>
      %1023 = arith.mulf %1021, %1022 : vector<16x8xf32>
      %1024 = arith.addf %1018, %1023 : vector<16x8xf32>
      %c5_496 = arith.constant 5 : index
      %1025 = arith.index_cast %arg8 : i32 to index
      %c0_497 = arith.constant 0 : index
      %c0_498 = arith.constant 0 : index
      %1026 = vector.load %arg1[%c5_496, %1025, %c0_497, %c0_498] : memref<8x16x16x8xf32, #tpu.memory_space<vmem>>, vector<1x1x16x8xf32>
      %1027 = vector.shape_cast %1026 : vector<1x1x16x8xf32> to vector<16x8xf32>
      %1028 = vector.broadcast %948 : f32 to vector<16x8xf32>
      %1029 = arith.mulf %1027, %1028 : vector<16x8xf32>
      %1030 = arith.addf %1024, %1029 : vector<16x8xf32>
      %c6_499 = arith.constant 6 : index
      %1031 = arith.index_cast %arg8 : i32 to index
      %c0_500 = arith.constant 0 : index
      %c0_501 = arith.constant 0 : index
      %1032 = vector.load %arg1[%c6_499, %1031, %c0_500, %c0_501] : memref<8x16x16x8xf32, #tpu.memory_space<vmem>>, vector<1x1x16x8xf32>
      %1033 = vector.shape_cast %1032 : vector<1x1x16x8xf32> to vector<16x8xf32>
      %1034 = vector.broadcast %949 : f32 to vector<16x8xf32>
      %1035 = arith.mulf %1033, %1034 : vector<16x8xf32>
      %1036 = arith.addf %1030, %1035 : vector<16x8xf32>
      %c7_502 = arith.constant 7 : index
      %1037 = arith.index_cast %arg8 : i32 to index
      %c0_503 = arith.constant 0 : index
      %c0_504 = arith.constant 0 : index
      %1038 = vector.load %arg1[%c7_502, %1037, %c0_503, %c0_504] : memref<8x16x16x8xf32, #tpu.memory_space<vmem>>, vector<1x1x16x8xf32>
      %1039 = vector.shape_cast %1038 : vector<1x1x16x8xf32> to vector<16x8xf32>
      %1040 = vector.broadcast %950 : f32 to vector<16x8xf32>
      %1041 = arith.mulf %1039, %1040 : vector<16x8xf32>
      %1042 = arith.addf %1036, %1041 : vector<16x8xf32>
      %c1_505 = arith.constant 1 : index
      %1043 = arith.index_cast %8 : i32 to index
      %c0_506 = arith.constant 0 : index
      %c0_507 = arith.constant 0 : index
      %1044 = vector.load %arg1[%c1_505, %1043, %c0_506, %c0_507] : memref<8x16x16x8xf32, #tpu.memory_space<vmem>>, vector<1x1x16x8xf32>
      %1045 = vector.shape_cast %1044 : vector<1x1x16x8xf32> to vector<16x8xf32>
      %1046 = vector.broadcast %951 : f32 to vector<16x8xf32>
      %1047 = arith.mulf %1045, %1046 : vector<16x8xf32>
      %1048 = arith.addf %1042, %1047 : vector<16x8xf32>
      %c2_508 = arith.constant 2 : index
      %1049 = arith.index_cast %8 : i32 to index
      %c0_509 = arith.constant 0 : index
      %c0_510 = arith.constant 0 : index
      %1050 = vector.load %arg1[%c2_508, %1049, %c0_509, %c0_510] : memref<8x16x16x8xf32, #tpu.memory_space<vmem>>, vector<1x1x16x8xf32>
      %1051 = vector.shape_cast %1050 : vector<1x1x16x8xf32> to vector<16x8xf32>
      %1052 = vector.broadcast %952 : f32 to vector<16x8xf32>
      %1053 = arith.mulf %1051, %1052 : vector<16x8xf32>
      %1054 = arith.addf %1048, %1053 : vector<16x8xf32>
      %c3_511 = arith.constant 3 : index
      %1055 = arith.index_cast %8 : i32 to index
      %c0_512 = arith.constant 0 : index
      %c0_513 = arith.constant 0 : index
      %1056 = vector.load %arg1[%c3_511, %1055, %c0_512, %c0_513] : memref<8x16x16x8xf32, #tpu.memory_space<vmem>>, vector<1x1x16x8xf32>
      %1057 = vector.shape_cast %1056 : vector<1x1x16x8xf32> to vector<16x8xf32>
      %1058 = vector.broadcast %953 : f32 to vector<16x8xf32>
      %1059 = arith.mulf %1057, %1058 : vector<16x8xf32>
      %1060 = arith.addf %1054, %1059 : vector<16x8xf32>
      %1061 = arith.maximumf %1007, %1060 : vector<16x8xf32>
      %c4_514 = arith.constant 4 : index
      %1062 = arith.index_cast %arg8 : i32 to index
      %c0_515 = arith.constant 0 : index
      %c0_516 = arith.constant 0 : index
      %1063 = vector.load %arg1[%c4_514, %1062, %c0_515, %c0_516] : memref<8x16x16x8xf32, #tpu.memory_space<vmem>>, vector<1x1x16x8xf32>
      %1064 = vector.shape_cast %1063 : vector<1x1x16x8xf32> to vector<16x8xf32>
      %1065 = vector.broadcast %945 : f32 to vector<16x8xf32>
      %1066 = arith.mulf %1064, %1065 : vector<16x8xf32>
      %c5_517 = arith.constant 5 : index
      %1067 = arith.index_cast %arg8 : i32 to index
      %c0_518 = arith.constant 0 : index
      %c0_519 = arith.constant 0 : index
      %1068 = vector.load %arg1[%c5_517, %1067, %c0_518, %c0_519] : memref<8x16x16x8xf32, #tpu.memory_space<vmem>>, vector<1x1x16x8xf32>
      %1069 = vector.shape_cast %1068 : vector<1x1x16x8xf32> to vector<16x8xf32>
      %1070 = vector.broadcast %946 : f32 to vector<16x8xf32>
      %1071 = arith.mulf %1069, %1070 : vector<16x8xf32>
      %1072 = arith.addf %1066, %1071 : vector<16x8xf32>
      %c6_520 = arith.constant 6 : index
      %1073 = arith.index_cast %arg8 : i32 to index
      %c0_521 = arith.constant 0 : index
      %c0_522 = arith.constant 0 : index
      %1074 = vector.load %arg1[%c6_520, %1073, %c0_521, %c0_522] : memref<8x16x16x8xf32, #tpu.memory_space<vmem>>, vector<1x1x16x8xf32>
      %1075 = vector.shape_cast %1074 : vector<1x1x16x8xf32> to vector<16x8xf32>
      %1076 = vector.broadcast %947 : f32 to vector<16x8xf32>
      %1077 = arith.mulf %1075, %1076 : vector<16x8xf32>
      %1078 = arith.addf %1072, %1077 : vector<16x8xf32>
      %c0_523 = arith.constant 0 : index
      %1079 = arith.index_cast %8 : i32 to index
      %c0_524 = arith.constant 0 : index
      %c0_525 = arith.constant 0 : index
      %1080 = vector.load %arg1[%c0_523, %1079, %c0_524, %c0_525] : memref<8x16x16x8xf32, #tpu.memory_space<vmem>>, vector<1x1x16x8xf32>
      %1081 = vector.shape_cast %1080 : vector<1x1x16x8xf32> to vector<16x8xf32>
      %1082 = vector.broadcast %948 : f32 to vector<16x8xf32>
      %1083 = arith.mulf %1081, %1082 : vector<16x8xf32>
      %1084 = arith.addf %1078, %1083 : vector<16x8xf32>
      %c1_526 = arith.constant 1 : index
      %1085 = arith.index_cast %8 : i32 to index
      %c0_527 = arith.constant 0 : index
      %c0_528 = arith.constant 0 : index
      %1086 = vector.load %arg1[%c1_526, %1085, %c0_527, %c0_528] : memref<8x16x16x8xf32, #tpu.memory_space<vmem>>, vector<1x1x16x8xf32>
      %1087 = vector.shape_cast %1086 : vector<1x1x16x8xf32> to vector<16x8xf32>
      %1088 = vector.broadcast %949 : f32 to vector<16x8xf32>
      %1089 = arith.mulf %1087, %1088 : vector<16x8xf32>
      %1090 = arith.addf %1084, %1089 : vector<16x8xf32>
      %c2_529 = arith.constant 2 : index
      %1091 = arith.index_cast %8 : i32 to index
      %c0_530 = arith.constant 0 : index
      %c0_531 = arith.constant 0 : index
      %1092 = vector.load %arg1[%c2_529, %1091, %c0_530, %c0_531] : memref<8x16x16x8xf32, #tpu.memory_space<vmem>>, vector<1x1x16x8xf32>
      %1093 = vector.shape_cast %1092 : vector<1x1x16x8xf32> to vector<16x8xf32>
      %1094 = vector.broadcast %950 : f32 to vector<16x8xf32>
      %1095 = arith.mulf %1093, %1094 : vector<16x8xf32>
      %1096 = arith.addf %1090, %1095 : vector<16x8xf32>
      %c4_532 = arith.constant 4 : index
      %1097 = arith.index_cast %8 : i32 to index
      %c0_533 = arith.constant 0 : index
      %c0_534 = arith.constant 0 : index
      %1098 = vector.load %arg1[%c4_532, %1097, %c0_533, %c0_534] : memref<8x16x16x8xf32, #tpu.memory_space<vmem>>, vector<1x1x16x8xf32>
      %1099 = vector.shape_cast %1098 : vector<1x1x16x8xf32> to vector<16x8xf32>
      %1100 = vector.broadcast %951 : f32 to vector<16x8xf32>
      %1101 = arith.mulf %1099, %1100 : vector<16x8xf32>
      %1102 = arith.addf %1096, %1101 : vector<16x8xf32>
      %c5_535 = arith.constant 5 : index
      %1103 = arith.index_cast %8 : i32 to index
      %c0_536 = arith.constant 0 : index
      %c0_537 = arith.constant 0 : index
      %1104 = vector.load %arg1[%c5_535, %1103, %c0_536, %c0_537] : memref<8x16x16x8xf32, #tpu.memory_space<vmem>>, vector<1x1x16x8xf32>
      %1105 = vector.shape_cast %1104 : vector<1x1x16x8xf32> to vector<16x8xf32>
      %1106 = vector.broadcast %952 : f32 to vector<16x8xf32>
      %1107 = arith.mulf %1105, %1106 : vector<16x8xf32>
      %1108 = arith.addf %1102, %1107 : vector<16x8xf32>
      %c6_538 = arith.constant 6 : index
      %1109 = arith.index_cast %8 : i32 to index
      %c0_539 = arith.constant 0 : index
      %c0_540 = arith.constant 0 : index
      %1110 = vector.load %arg1[%c6_538, %1109, %c0_539, %c0_540] : memref<8x16x16x8xf32, #tpu.memory_space<vmem>>, vector<1x1x16x8xf32>
      %1111 = vector.shape_cast %1110 : vector<1x1x16x8xf32> to vector<16x8xf32>
      %1112 = vector.broadcast %953 : f32 to vector<16x8xf32>
      %1113 = arith.mulf %1111, %1112 : vector<16x8xf32>
      %1114 = arith.addf %1108, %1113 : vector<16x8xf32>
      %1115 = arith.maximumf %1061, %1114 : vector<16x8xf32>
      %c5_541 = arith.constant 5 : index
      %1116 = arith.index_cast %arg8 : i32 to index
      %c0_542 = arith.constant 0 : index
      %c0_543 = arith.constant 0 : index
      %1117 = vector.load %arg1[%c5_541, %1116, %c0_542, %c0_543] : memref<8x16x16x8xf32, #tpu.memory_space<vmem>>, vector<1x1x16x8xf32>
      %1118 = vector.shape_cast %1117 : vector<1x1x16x8xf32> to vector<16x8xf32>
      %1119 = vector.broadcast %945 : f32 to vector<16x8xf32>
      %1120 = arith.mulf %1118, %1119 : vector<16x8xf32>
      %c6_544 = arith.constant 6 : index
      %1121 = arith.index_cast %arg8 : i32 to index
      %c0_545 = arith.constant 0 : index
      %c0_546 = arith.constant 0 : index
      %1122 = vector.load %arg1[%c6_544, %1121, %c0_545, %c0_546] : memref<8x16x16x8xf32, #tpu.memory_space<vmem>>, vector<1x1x16x8xf32>
      %1123 = vector.shape_cast %1122 : vector<1x1x16x8xf32> to vector<16x8xf32>
      %1124 = vector.broadcast %946 : f32 to vector<16x8xf32>
      %1125 = arith.mulf %1123, %1124 : vector<16x8xf32>
      %1126 = arith.addf %1120, %1125 : vector<16x8xf32>
      %c7_547 = arith.constant 7 : index
      %1127 = arith.index_cast %arg8 : i32 to index
      %c0_548 = arith.constant 0 : index
      %c0_549 = arith.constant 0 : index
      %1128 = vector.load %arg1[%c7_547, %1127, %c0_548, %c0_549] : memref<8x16x16x8xf32, #tpu.memory_space<vmem>>, vector<1x1x16x8xf32>
      %1129 = vector.shape_cast %1128 : vector<1x1x16x8xf32> to vector<16x8xf32>
      %1130 = vector.broadcast %947 : f32 to vector<16x8xf32>
      %1131 = arith.mulf %1129, %1130 : vector<16x8xf32>
      %1132 = arith.addf %1126, %1131 : vector<16x8xf32>
      %c1_550 = arith.constant 1 : index
      %1133 = arith.index_cast %8 : i32 to index
      %c0_551 = arith.constant 0 : index
      %c0_552 = arith.constant 0 : index
      %1134 = vector.load %arg1[%c1_550, %1133, %c0_551, %c0_552] : memref<8x16x16x8xf32, #tpu.memory_space<vmem>>, vector<1x1x16x8xf32>
      %1135 = vector.shape_cast %1134 : vector<1x1x16x8xf32> to vector<16x8xf32>
      %1136 = vector.broadcast %948 : f32 to vector<16x8xf32>
      %1137 = arith.mulf %1135, %1136 : vector<16x8xf32>
      %1138 = arith.addf %1132, %1137 : vector<16x8xf32>
      %c2_553 = arith.constant 2 : index
      %1139 = arith.index_cast %8 : i32 to index
      %c0_554 = arith.constant 0 : index
      %c0_555 = arith.constant 0 : index
      %1140 = vector.load %arg1[%c2_553, %1139, %c0_554, %c0_555] : memref<8x16x16x8xf32, #tpu.memory_space<vmem>>, vector<1x1x16x8xf32>
      %1141 = vector.shape_cast %1140 : vector<1x1x16x8xf32> to vector<16x8xf32>
      %1142 = vector.broadcast %949 : f32 to vector<16x8xf32>
      %1143 = arith.mulf %1141, %1142 : vector<16x8xf32>
      %1144 = arith.addf %1138, %1143 : vector<16x8xf32>
      %c3_556 = arith.constant 3 : index
      %1145 = arith.index_cast %8 : i32 to index
      %c0_557 = arith.constant 0 : index
      %c0_558 = arith.constant 0 : index
      %1146 = vector.load %arg1[%c3_556, %1145, %c0_557, %c0_558] : memref<8x16x16x8xf32, #tpu.memory_space<vmem>>, vector<1x1x16x8xf32>
      %1147 = vector.shape_cast %1146 : vector<1x1x16x8xf32> to vector<16x8xf32>
      %1148 = vector.broadcast %950 : f32 to vector<16x8xf32>
      %1149 = arith.mulf %1147, %1148 : vector<16x8xf32>
      %1150 = arith.addf %1144, %1149 : vector<16x8xf32>
      %c5_559 = arith.constant 5 : index
      %1151 = arith.index_cast %8 : i32 to index
      %c0_560 = arith.constant 0 : index
      %c0_561 = arith.constant 0 : index
      %1152 = vector.load %arg1[%c5_559, %1151, %c0_560, %c0_561] : memref<8x16x16x8xf32, #tpu.memory_space<vmem>>, vector<1x1x16x8xf32>
      %1153 = vector.shape_cast %1152 : vector<1x1x16x8xf32> to vector<16x8xf32>
      %1154 = vector.broadcast %951 : f32 to vector<16x8xf32>
      %1155 = arith.mulf %1153, %1154 : vector<16x8xf32>
      %1156 = arith.addf %1150, %1155 : vector<16x8xf32>
      %c6_562 = arith.constant 6 : index
      %1157 = arith.index_cast %8 : i32 to index
      %c0_563 = arith.constant 0 : index
      %c0_564 = arith.constant 0 : index
      %1158 = vector.load %arg1[%c6_562, %1157, %c0_563, %c0_564] : memref<8x16x16x8xf32, #tpu.memory_space<vmem>>, vector<1x1x16x8xf32>
      %1159 = vector.shape_cast %1158 : vector<1x1x16x8xf32> to vector<16x8xf32>
      %1160 = vector.broadcast %952 : f32 to vector<16x8xf32>
      %1161 = arith.mulf %1159, %1160 : vector<16x8xf32>
      %1162 = arith.addf %1156, %1161 : vector<16x8xf32>
      %c7_565 = arith.constant 7 : index
      %1163 = arith.index_cast %8 : i32 to index
      %c0_566 = arith.constant 0 : index
      %c0_567 = arith.constant 0 : index
      %1164 = vector.load %arg1[%c7_565, %1163, %c0_566, %c0_567] : memref<8x16x16x8xf32, #tpu.memory_space<vmem>>, vector<1x1x16x8xf32>
      %1165 = vector.shape_cast %1164 : vector<1x1x16x8xf32> to vector<16x8xf32>
      %1166 = vector.broadcast %953 : f32 to vector<16x8xf32>
      %1167 = arith.mulf %1165, %1166 : vector<16x8xf32>
      %1168 = arith.addf %1162, %1167 : vector<16x8xf32>
      %1169 = arith.maximumf %1115, %1168 : vector<16x8xf32>
      %1170 = vector.broadcast %954 : f32 to vector<16x8xf32>
      %1171 = arith.addf %1169, %1170 : vector<16x8xf32>
      %cst_568 = arith.constant 0.000000e+00 : f32
      %1172 = vector.broadcast %cst_568 : f32 to vector<16x8xf32>
      %1173 = arith.maximumf %1171, %1172 : vector<16x8xf32>
      %c60_i32 = arith.constant 60 : i32
      %1174 = arith.addi %c60_i32, %arg8 : i32
      %c16_i32_569 = arith.constant 16 : i32
      %1175 = arith.muli %1174, %c16_i32_569 : i32
      %1176 = tpu.assume_multiple %1175, 16 : i32
      %1177 = arith.index_cast %1176 : i32 to index
      %c0_570 = arith.constant 0 : index
      %1178 = vector.load %arg7[%1177, %c0_570] : memref<1440x8xf32, #tpu.memory_space<vmem>>, vector<16x8xf32>
      tpu.vector_store %arg7[%1177, %c0_570], %1173 {strides = array<i32>} : memref<1440x8xf32, #tpu.memory_space<vmem>>, vector<16x8xf32>,
      %c45 = arith.constant 45 : index
      %1179 = memref.load %arg2[%c45] : memref<54xf32, #tpu.memory_space<smem>>
      %c46 = arith.constant 46 : index
      %1180 = memref.load %arg2[%c46] : memref<54xf32, #tpu.memory_space<smem>>
      %c47 = arith.constant 47 : index
      %1181 = memref.load %arg2[%c47] : memref<54xf32, #tpu.memory_space<smem>>
      %c48 = arith.constant 48 : index
      %1182 = memref.load %arg2[%c48] : memref<54xf32, #tpu.memory_space<smem>>
      %c49 = arith.constant 49 : index
      %1183 = memref.load %arg2[%c49] : memref<54xf32, #tpu.memory_space<smem>>
      %c50 = arith.constant 50 : index
      %1184 = memref.load %arg2[%c50] : memref<54xf32, #tpu.memory_space<smem>>
      %c51 = arith.constant 51 : index
      %1185 = memref.load %arg2[%c51] : memref<54xf32, #tpu.memory_space<smem>>
      %c52 = arith.constant 52 : index
      %1186 = memref.load %arg2[%c52] : memref<54xf32, #tpu.memory_space<smem>>
      %c53 = arith.constant 53 : index
      %1187 = memref.load %arg2[%c53] : memref<54xf32, #tpu.memory_space<smem>>
      %c5_571 = arith.constant 5 : index
      %1188 = memref.load %arg3[%c5_571] : memref<6xf32, #tpu.memory_space<smem>>
      %c0_572 = arith.constant 0 : index
      %1189 = arith.index_cast %arg8 : i32 to index
      %c0_573 = arith.constant 0 : index
      %c0_574 = arith.constant 0 : index
      %1190 = vector.load %arg1[%c0_572, %1189, %c0_573, %c0_574] : memref<8x16x16x8xf32, #tpu.memory_space<vmem>>, vector<1x1x16x8xf32>
      %1191 = vector.shape_cast %1190 : vector<1x1x16x8xf32> to vector<16x8xf32>
      %1192 = vector.broadcast %1179 : f32 to vector<16x8xf32>
      %1193 = arith.mulf %1191, %1192 : vector<16x8xf32>
      %c1_575 = arith.constant 1 : index
      %1194 = arith.index_cast %arg8 : i32 to index
      %c0_576 = arith.constant 0 : index
      %c0_577 = arith.constant 0 : index
      %1195 = vector.load %arg1[%c1_575, %1194, %c0_576, %c0_577] : memref<8x16x16x8xf32, #tpu.memory_space<vmem>>, vector<1x1x16x8xf32>
      %1196 = vector.shape_cast %1195 : vector<1x1x16x8xf32> to vector<16x8xf32>
      %1197 = vector.broadcast %1180 : f32 to vector<16x8xf32>
      %1198 = arith.mulf %1196, %1197 : vector<16x8xf32>
      %1199 = arith.addf %1193, %1198 : vector<16x8xf32>
      %c2_578 = arith.constant 2 : index
      %1200 = arith.index_cast %arg8 : i32 to index
      %c0_579 = arith.constant 0 : index
      %c0_580 = arith.constant 0 : index
      %1201 = vector.load %arg1[%c2_578, %1200, %c0_579, %c0_580] : memref<8x16x16x8xf32, #tpu.memory_space<vmem>>, vector<1x1x16x8xf32>
      %1202 = vector.shape_cast %1201 : vector<1x1x16x8xf32> to vector<16x8xf32>
      %1203 = vector.broadcast %1181 : f32 to vector<16x8xf32>
      %1204 = arith.mulf %1202, %1203 : vector<16x8xf32>
      %1205 = arith.addf %1199, %1204 : vector<16x8xf32>
      %c4_581 = arith.constant 4 : index
      %1206 = arith.index_cast %arg8 : i32 to index
      %c0_582 = arith.constant 0 : index
      %c0_583 = arith.constant 0 : index
      %1207 = vector.load %arg1[%c4_581, %1206, %c0_582, %c0_583] : memref<8x16x16x8xf32, #tpu.memory_space<vmem>>, vector<1x1x16x8xf32>
      %1208 = vector.shape_cast %1207 : vector<1x1x16x8xf32> to vector<16x8xf32>
      %1209 = vector.broadcast %1182 : f32 to vector<16x8xf32>
      %1210 = arith.mulf %1208, %1209 : vector<16x8xf32>
      %1211 = arith.addf %1205, %1210 : vector<16x8xf32>
      %c5_584 = arith.constant 5 : index
      %1212 = arith.index_cast %arg8 : i32 to index
      %c0_585 = arith.constant 0 : index
      %c0_586 = arith.constant 0 : index
      %1213 = vector.load %arg1[%c5_584, %1212, %c0_585, %c0_586] : memref<8x16x16x8xf32, #tpu.memory_space<vmem>>, vector<1x1x16x8xf32>
      %1214 = vector.shape_cast %1213 : vector<1x1x16x8xf32> to vector<16x8xf32>
      %1215 = vector.broadcast %1183 : f32 to vector<16x8xf32>
      %1216 = arith.mulf %1214, %1215 : vector<16x8xf32>
      %1217 = arith.addf %1211, %1216 : vector<16x8xf32>
      %c6_587 = arith.constant 6 : index
      %1218 = arith.index_cast %arg8 : i32 to index
      %c0_588 = arith.constant 0 : index
      %c0_589 = arith.constant 0 : index
      %1219 = vector.load %arg1[%c6_587, %1218, %c0_588, %c0_589] : memref<8x16x16x8xf32, #tpu.memory_space<vmem>>, vector<1x1x16x8xf32>
      %1220 = vector.shape_cast %1219 : vector<1x1x16x8xf32> to vector<16x8xf32>
      %1221 = vector.broadcast %1184 : f32 to vector<16x8xf32>
      %1222 = arith.mulf %1220, %1221 : vector<16x8xf32>
      %1223 = arith.addf %1217, %1222 : vector<16x8xf32>
      %c0_590 = arith.constant 0 : index
      %1224 = arith.index_cast %8 : i32 to index
      %c0_591 = arith.constant 0 : index
      %c0_592 = arith.constant 0 : index
      %1225 = vector.load %arg1[%c0_590, %1224, %c0_591, %c0_592] : memref<8x16x16x8xf32, #tpu.memory_space<vmem>>, vector<1x1x16x8xf32>
      %1226 = vector.shape_cast %1225 : vector<1x1x16x8xf32> to vector<16x8xf32>
      %1227 = vector.broadcast %1185 : f32 to vector<16x8xf32>
      %1228 = arith.mulf %1226, %1227 : vector<16x8xf32>
      %1229 = arith.addf %1223, %1228 : vector<16x8xf32>
      %c1_593 = arith.constant 1 : index
      %1230 = arith.index_cast %8 : i32 to index
      %c0_594 = arith.constant 0 : index
      %c0_595 = arith.constant 0 : index
      %1231 = vector.load %arg1[%c1_593, %1230, %c0_594, %c0_595] : memref<8x16x16x8xf32, #tpu.memory_space<vmem>>, vector<1x1x16x8xf32>
      %1232 = vector.shape_cast %1231 : vector<1x1x16x8xf32> to vector<16x8xf32>
      %1233 = vector.broadcast %1186 : f32 to vector<16x8xf32>
      %1234 = arith.mulf %1232, %1233 : vector<16x8xf32>
      %1235 = arith.addf %1229, %1234 : vector<16x8xf32>
      %c2_596 = arith.constant 2 : index
      %1236 = arith.index_cast %8 : i32 to index
      %c0_597 = arith.constant 0 : index
      %c0_598 = arith.constant 0 : index
      %1237 = vector.load %arg1[%c2_596, %1236, %c0_597, %c0_598] : memref<8x16x16x8xf32, #tpu.memory_space<vmem>>, vector<1x1x16x8xf32>
      %1238 = vector.shape_cast %1237 : vector<1x1x16x8xf32> to vector<16x8xf32>
      %1239 = vector.broadcast %1187 : f32 to vector<16x8xf32>
      %1240 = arith.mulf %1238, %1239 : vector<16x8xf32>
      %1241 = arith.addf %1235, %1240 : vector<16x8xf32>
      %c1_599 = arith.constant 1 : index
      %1242 = arith.index_cast %arg8 : i32 to index
      %c0_600 = arith.constant 0 : index
      %c0_601 = arith.constant 0 : index
      %1243 = vector.load %arg1[%c1_599, %1242, %c0_600, %c0_601] : memref<8x16x16x8xf32, #tpu.memory_space<vmem>>, vector<1x1x16x8xf32>
      %1244 = vector.shape_cast %1243 : vector<1x1x16x8xf32> to vector<16x8xf32>
      %1245 = vector.broadcast %1179 : f32 to vector<16x8xf32>
      %1246 = arith.mulf %1244, %1245 : vector<16x8xf32>
      %c2_602 = arith.constant 2 : index
      %1247 = arith.index_cast %arg8 : i32 to index
      %c0_603 = arith.constant 0 : index
      %c0_604 = arith.constant 0 : index
      %1248 = vector.load %arg1[%c2_602, %1247, %c0_603, %c0_604] : memref<8x16x16x8xf32, #tpu.memory_space<vmem>>, vector<1x1x16x8xf32>
      %1249 = vector.shape_cast %1248 : vector<1x1x16x8xf32> to vector<16x8xf32>
      %1250 = vector.broadcast %1180 : f32 to vector<16x8xf32>
      %1251 = arith.mulf %1249, %1250 : vector<16x8xf32>
      %1252 = arith.addf %1246, %1251 : vector<16x8xf32>
      %c3_605 = arith.constant 3 : index
      %1253 = arith.index_cast %arg8 : i32 to index
      %c0_606 = arith.constant 0 : index
      %c0_607 = arith.constant 0 : index
      %1254 = vector.load %arg1[%c3_605, %1253, %c0_606, %c0_607] : memref<8x16x16x8xf32, #tpu.memory_space<vmem>>, vector<1x1x16x8xf32>
      %1255 = vector.shape_cast %1254 : vector<1x1x16x8xf32> to vector<16x8xf32>
      %1256 = vector.broadcast %1181 : f32 to vector<16x8xf32>
      %1257 = arith.mulf %1255, %1256 : vector<16x8xf32>
      %1258 = arith.addf %1252, %1257 : vector<16x8xf32>
      %c5_608 = arith.constant 5 : index
      %1259 = arith.index_cast %arg8 : i32 to index
      %c0_609 = arith.constant 0 : index
      %c0_610 = arith.constant 0 : index
      %1260 = vector.load %arg1[%c5_608, %1259, %c0_609, %c0_610] : memref<8x16x16x8xf32, #tpu.memory_space<vmem>>, vector<1x1x16x8xf32>
      %1261 = vector.shape_cast %1260 : vector<1x1x16x8xf32> to vector<16x8xf32>
      %1262 = vector.broadcast %1182 : f32 to vector<16x8xf32>
      %1263 = arith.mulf %1261, %1262 : vector<16x8xf32>
      %1264 = arith.addf %1258, %1263 : vector<16x8xf32>
      %c6_611 = arith.constant 6 : index
      %1265 = arith.index_cast %arg8 : i32 to index
      %c0_612 = arith.constant 0 : index
      %c0_613 = arith.constant 0 : index
      %1266 = vector.load %arg1[%c6_611, %1265, %c0_612, %c0_613] : memref<8x16x16x8xf32, #tpu.memory_space<vmem>>, vector<1x1x16x8xf32>
      %1267 = vector.shape_cast %1266 : vector<1x1x16x8xf32> to vector<16x8xf32>
      %1268 = vector.broadcast %1183 : f32 to vector<16x8xf32>
      %1269 = arith.mulf %1267, %1268 : vector<16x8xf32>
      %1270 = arith.addf %1264, %1269 : vector<16x8xf32>
      %c7_614 = arith.constant 7 : index
      %1271 = arith.index_cast %arg8 : i32 to index
      %c0_615 = arith.constant 0 : index
      %c0_616 = arith.constant 0 : index
      %1272 = vector.load %arg1[%c7_614, %1271, %c0_615, %c0_616] : memref<8x16x16x8xf32, #tpu.memory_space<vmem>>, vector<1x1x16x8xf32>
      %1273 = vector.shape_cast %1272 : vector<1x1x16x8xf32> to vector<16x8xf32>
      %1274 = vector.broadcast %1184 : f32 to vector<16x8xf32>
      %1275 = arith.mulf %1273, %1274 : vector<16x8xf32>
      %1276 = arith.addf %1270, %1275 : vector<16x8xf32>
      %c1_617 = arith.constant 1 : index
      %1277 = arith.index_cast %8 : i32 to index
      %c0_618 = arith.constant 0 : index
      %c0_619 = arith.constant 0 : index
      %1278 = vector.load %arg1[%c1_617, %1277, %c0_618, %c0_619] : memref<8x16x16x8xf32, #tpu.memory_space<vmem>>, vector<1x1x16x8xf32>
      %1279 = vector.shape_cast %1278 : vector<1x1x16x8xf32> to vector<16x8xf32>
      %1280 = vector.broadcast %1185 : f32 to vector<16x8xf32>
      %1281 = arith.mulf %1279, %1280 : vector<16x8xf32>
      %1282 = arith.addf %1276, %1281 : vector<16x8xf32>
      %c2_620 = arith.constant 2 : index
      %1283 = arith.index_cast %8 : i32 to index
      %c0_621 = arith.constant 0 : index
      %c0_622 = arith.constant 0 : index
      %1284 = vector.load %arg1[%c2_620, %1283, %c0_621, %c0_622] : memref<8x16x16x8xf32, #tpu.memory_space<vmem>>, vector<1x1x16x8xf32>
      %1285 = vector.shape_cast %1284 : vector<1x1x16x8xf32> to vector<16x8xf32>
      %1286 = vector.broadcast %1186 : f32 to vector<16x8xf32>
      %1287 = arith.mulf %1285, %1286 : vector<16x8xf32>
      %1288 = arith.addf %1282, %1287 : vector<16x8xf32>
      %c3_623 = arith.constant 3 : index
      %1289 = arith.index_cast %8 : i32 to index
      %c0_624 = arith.constant 0 : index
      %c0_625 = arith.constant 0 : index
      %1290 = vector.load %arg1[%c3_623, %1289, %c0_624, %c0_625] : memref<8x16x16x8xf32, #tpu.memory_space<vmem>>, vector<1x1x16x8xf32>
      %1291 = vector.shape_cast %1290 : vector<1x1x16x8xf32> to vector<16x8xf32>
      %1292 = vector.broadcast %1187 : f32 to vector<16x8xf32>
      %1293 = arith.mulf %1291, %1292 : vector<16x8xf32>
      %1294 = arith.addf %1288, %1293 : vector<16x8xf32>
      %1295 = arith.maximumf %1241, %1294 : vector<16x8xf32>
      %c4_626 = arith.constant 4 : index
      %1296 = arith.index_cast %arg8 : i32 to index
      %c0_627 = arith.constant 0 : index
      %c0_628 = arith.constant 0 : index
      %1297 = vector.load %arg1[%c4_626, %1296, %c0_627, %c0_628] : memref<8x16x16x8xf32, #tpu.memory_space<vmem>>, vector<1x1x16x8xf32>
      %1298 = vector.shape_cast %1297 : vector<1x1x16x8xf32> to vector<16x8xf32>
      %1299 = vector.broadcast %1179 : f32 to vector<16x8xf32>
      %1300 = arith.mulf %1298, %1299 : vector<16x8xf32>
      %c5_629 = arith.constant 5 : index
      %1301 = arith.index_cast %arg8 : i32 to index
      %c0_630 = arith.constant 0 : index
      %c0_631 = arith.constant 0 : index
      %1302 = vector.load %arg1[%c5_629, %1301, %c0_630, %c0_631] : memref<8x16x16x8xf32, #tpu.memory_space<vmem>>, vector<1x1x16x8xf32>
      %1303 = vector.shape_cast %1302 : vector<1x1x16x8xf32> to vector<16x8xf32>
      %1304 = vector.broadcast %1180 : f32 to vector<16x8xf32>
      %1305 = arith.mulf %1303, %1304 : vector<16x8xf32>
      %1306 = arith.addf %1300, %1305 : vector<16x8xf32>
      %c6_632 = arith.constant 6 : index
      %1307 = arith.index_cast %arg8 : i32 to index
      %c0_633 = arith.constant 0 : index
      %c0_634 = arith.constant 0 : index
      %1308 = vector.load %arg1[%c6_632, %1307, %c0_633, %c0_634] : memref<8x16x16x8xf32, #tpu.memory_space<vmem>>, vector<1x1x16x8xf32>
      %1309 = vector.shape_cast %1308 : vector<1x1x16x8xf32> to vector<16x8xf32>
      %1310 = vector.broadcast %1181 : f32 to vector<16x8xf32>
      %1311 = arith.mulf %1309, %1310 : vector<16x8xf32>
      %1312 = arith.addf %1306, %1311 : vector<16x8xf32>
      %c0_635 = arith.constant 0 : index
      %1313 = arith.index_cast %8 : i32 to index
      %c0_636 = arith.constant 0 : index
      %c0_637 = arith.constant 0 : index
      %1314 = vector.load %arg1[%c0_635, %1313, %c0_636, %c0_637] : memref<8x16x16x8xf32, #tpu.memory_space<vmem>>, vector<1x1x16x8xf32>
      %1315 = vector.shape_cast %1314 : vector<1x1x16x8xf32> to vector<16x8xf32>
      %1316 = vector.broadcast %1182 : f32 to vector<16x8xf32>
      %1317 = arith.mulf %1315, %1316 : vector<16x8xf32>
      %1318 = arith.addf %1312, %1317 : vector<16x8xf32>
      %c1_638 = arith.constant 1 : index
      %1319 = arith.index_cast %8 : i32 to index
      %c0_639 = arith.constant 0 : index
      %c0_640 = arith.constant 0 : index
      %1320 = vector.load %arg1[%c1_638, %1319, %c0_639, %c0_640] : memref<8x16x16x8xf32, #tpu.memory_space<vmem>>, vector<1x1x16x8xf32>
      %1321 = vector.shape_cast %1320 : vector<1x1x16x8xf32> to vector<16x8xf32>
      %1322 = vector.broadcast %1183 : f32 to vector<16x8xf32>
      %1323 = arith.mulf %1321, %1322 : vector<16x8xf32>
      %1324 = arith.addf %1318, %1323 : vector<16x8xf32>
      %c2_641 = arith.constant 2 : index
      %1325 = arith.index_cast %8 : i32 to index
      %c0_642 = arith.constant 0 : index
      %c0_643 = arith.constant 0 : index
      %1326 = vector.load %arg1[%c2_641, %1325, %c0_642, %c0_643] : memref<8x16x16x8xf32, #tpu.memory_space<vmem>>, vector<1x1x16x8xf32>
      %1327 = vector.shape_cast %1326 : vector<1x1x16x8xf32> to vector<16x8xf32>
      %1328 = vector.broadcast %1184 : f32 to vector<16x8xf32>
      %1329 = arith.mulf %1327, %1328 : vector<16x8xf32>
      %1330 = arith.addf %1324, %1329 : vector<16x8xf32>
      %c4_644 = arith.constant 4 : index
      %1331 = arith.index_cast %8 : i32 to index
      %c0_645 = arith.constant 0 : index
      %c0_646 = arith.constant 0 : index
      %1332 = vector.load %arg1[%c4_644, %1331, %c0_645, %c0_646] : memref<8x16x16x8xf32, #tpu.memory_space<vmem>>, vector<1x1x16x8xf32>
      %1333 = vector.shape_cast %1332 : vector<1x1x16x8xf32> to vector<16x8xf32>
      %1334 = vector.broadcast %1185 : f32 to vector<16x8xf32>
      %1335 = arith.mulf %1333, %1334 : vector<16x8xf32>
      %1336 = arith.addf %1330, %1335 : vector<16x8xf32>
      %c5_647 = arith.constant 5 : index
      %1337 = arith.index_cast %8 : i32 to index
      %c0_648 = arith.constant 0 : index
      %c0_649 = arith.constant 0 : index
      %1338 = vector.load %arg1[%c5_647, %1337, %c0_648, %c0_649] : memref<8x16x16x8xf32, #tpu.memory_space<vmem>>, vector<1x1x16x8xf32>
      %1339 = vector.shape_cast %1338 : vector<1x1x16x8xf32> to vector<16x8xf32>
      %1340 = vector.broadcast %1186 : f32 to vector<16x8xf32>
      %1341 = arith.mulf %1339, %1340 : vector<16x8xf32>
      %1342 = arith.addf %1336, %1341 : vector<16x8xf32>
      %c6_650 = arith.constant 6 : index
      %1343 = arith.index_cast %8 : i32 to index
      %c0_651 = arith.constant 0 : index
      %c0_652 = arith.constant 0 : index
      %1344 = vector.load %arg1[%c6_650, %1343, %c0_651, %c0_652] : memref<8x16x16x8xf32, #tpu.memory_space<vmem>>, vector<1x1x16x8xf32>
      %1345 = vector.shape_cast %1344 : vector<1x1x16x8xf32> to vector<16x8xf32>
      %1346 = vector.broadcast %1187 : f32 to vector<16x8xf32>
      %1347 = arith.mulf %1345, %1346 : vector<16x8xf32>
      %1348 = arith.addf %1342, %1347 : vector<16x8xf32>
      %1349 = arith.maximumf %1295, %1348 : vector<16x8xf32>
      %c5_653 = arith.constant 5 : index
      %1350 = arith.index_cast %arg8 : i32 to index
      %c0_654 = arith.constant 0 : index
      %c0_655 = arith.constant 0 : index
      %1351 = vector.load %arg1[%c5_653, %1350, %c0_654, %c0_655] : memref<8x16x16x8xf32, #tpu.memory_space<vmem>>, vector<1x1x16x8xf32>
      %1352 = vector.shape_cast %1351 : vector<1x1x16x8xf32> to vector<16x8xf32>
      %1353 = vector.broadcast %1179 : f32 to vector<16x8xf32>
      %1354 = arith.mulf %1352, %1353 : vector<16x8xf32>
      %c6_656 = arith.constant 6 : index
      %1355 = arith.index_cast %arg8 : i32 to index
      %c0_657 = arith.constant 0 : index
      %c0_658 = arith.constant 0 : index
      %1356 = vector.load %arg1[%c6_656, %1355, %c0_657, %c0_658] : memref<8x16x16x8xf32, #tpu.memory_space<vmem>>, vector<1x1x16x8xf32>
      %1357 = vector.shape_cast %1356 : vector<1x1x16x8xf32> to vector<16x8xf32>
      %1358 = vector.broadcast %1180 : f32 to vector<16x8xf32>
      %1359 = arith.mulf %1357, %1358 : vector<16x8xf32>
      %1360 = arith.addf %1354, %1359 : vector<16x8xf32>
      %c7_659 = arith.constant 7 : index
      %1361 = arith.index_cast %arg8 : i32 to index
      %c0_660 = arith.constant 0 : index
      %c0_661 = arith.constant 0 : index
      %1362 = vector.load %arg1[%c7_659, %1361, %c0_660, %c0_661] : memref<8x16x16x8xf32, #tpu.memory_space<vmem>>, vector<1x1x16x8xf32>
      %1363 = vector.shape_cast %1362 : vector<1x1x16x8xf32> to vector<16x8xf32>
      %1364 = vector.broadcast %1181 : f32 to vector<16x8xf32>
      %1365 = arith.mulf %1363, %1364 : vector<16x8xf32>
      %1366 = arith.addf %1360, %1365 : vector<16x8xf32>
      %c1_662 = arith.constant 1 : index
      %1367 = arith.index_cast %8 : i32 to index
      %c0_663 = arith.constant 0 : index
      %c0_664 = arith.constant 0 : index
      %1368 = vector.load %arg1[%c1_662, %1367, %c0_663, %c0_664] : memref<8x16x16x8xf32, #tpu.memory_space<vmem>>, vector<1x1x16x8xf32>
      %1369 = vector.shape_cast %1368 : vector<1x1x16x8xf32> to vector<16x8xf32>
      %1370 = vector.broadcast %1182 : f32 to vector<16x8xf32>
      %1371 = arith.mulf %1369, %1370 : vector<16x8xf32>
      %1372 = arith.addf %1366, %1371 : vector<16x8xf32>
      %c2_665 = arith.constant 2 : index
      %1373 = arith.index_cast %8 : i32 to index
      %c0_666 = arith.constant 0 : index
      %c0_667 = arith.constant 0 : index
      %1374 = vector.load %arg1[%c2_665, %1373, %c0_666, %c0_667] : memref<8x16x16x8xf32, #tpu.memory_space<vmem>>, vector<1x1x16x8xf32>
      %1375 = vector.shape_cast %1374 : vector<1x1x16x8xf32> to vector<16x8xf32>
      %1376 = vector.broadcast %1183 : f32 to vector<16x8xf32>
      %1377 = arith.mulf %1375, %1376 : vector<16x8xf32>
      %1378 = arith.addf %1372, %1377 : vector<16x8xf32>
      %c3_668 = arith.constant 3 : index
      %1379 = arith.index_cast %8 : i32 to index
      %c0_669 = arith.constant 0 : index
      %c0_670 = arith.constant 0 : index
      %1380 = vector.load %arg1[%c3_668, %1379, %c0_669, %c0_670] : memref<8x16x16x8xf32, #tpu.memory_space<vmem>>, vector<1x1x16x8xf32>
      %1381 = vector.shape_cast %1380 : vector<1x1x16x8xf32> to vector<16x8xf32>
      %1382 = vector.broadcast %1184 : f32 to vector<16x8xf32>
      %1383 = arith.mulf %1381, %1382 : vector<16x8xf32>
      %1384 = arith.addf %1378, %1383 : vector<16x8xf32>
      %c5_671 = arith.constant 5 : index
      %1385 = arith.index_cast %8 : i32 to index
      %c0_672 = arith.constant 0 : index
      %c0_673 = arith.constant 0 : index
      %1386 = vector.load %arg1[%c5_671, %1385, %c0_672, %c0_673] : memref<8x16x16x8xf32, #tpu.memory_space<vmem>>, vector<1x1x16x8xf32>
      %1387 = vector.shape_cast %1386 : vector<1x1x16x8xf32> to vector<16x8xf32>
      %1388 = vector.broadcast %1185 : f32 to vector<16x8xf32>
      %1389 = arith.mulf %1387, %1388 : vector<16x8xf32>
      %1390 = arith.addf %1384, %1389 : vector<16x8xf32>
      %c6_674 = arith.constant 6 : index
      %1391 = arith.index_cast %8 : i32 to index
      %c0_675 = arith.constant 0 : index
      %c0_676 = arith.constant 0 : index
      %1392 = vector.load %arg1[%c6_674, %1391, %c0_675, %c0_676] : memref<8x16x16x8xf32, #tpu.memory_space<vmem>>, vector<1x1x16x8xf32>
      %1393 = vector.shape_cast %1392 : vector<1x1x16x8xf32> to vector<16x8xf32>
      %1394 = vector.broadcast %1186 : f32 to vector<16x8xf32>
      %1395 = arith.mulf %1393, %1394 : vector<16x8xf32>
      %1396 = arith.addf %1390, %1395 : vector<16x8xf32>
      %c7_677 = arith.constant 7 : index
      %1397 = arith.index_cast %8 : i32 to index
      %c0_678 = arith.constant 0 : index
      %c0_679 = arith.constant 0 : index
      %1398 = vector.load %arg1[%c7_677, %1397, %c0_678, %c0_679] : memref<8x16x16x8xf32, #tpu.memory_space<vmem>>, vector<1x1x16x8xf32>
      %1399 = vector.shape_cast %1398 : vector<1x1x16x8xf32> to vector<16x8xf32>
      %1400 = vector.broadcast %1187 : f32 to vector<16x8xf32>
      %1401 = arith.mulf %1399, %1400 : vector<16x8xf32>
      %1402 = arith.addf %1396, %1401 : vector<16x8xf32>
      %1403 = arith.maximumf %1349, %1402 : vector<16x8xf32>
      %1404 = vector.broadcast %1188 : f32 to vector<16x8xf32>
      %1405 = arith.addf %1403, %1404 : vector<16x8xf32>
      %cst_680 = arith.constant 0.000000e+00 : f32
      %1406 = vector.broadcast %cst_680 : f32 to vector<16x8xf32>
      %1407 = arith.maximumf %1405, %1406 : vector<16x8xf32>
      %c75_i32 = arith.constant 75 : i32
      %1408 = arith.addi %c75_i32, %arg8 : i32
      %c16_i32_681 = arith.constant 16 : i32
      %1409 = arith.muli %1408, %c16_i32_681 : i32
      %1410 = tpu.assume_multiple %1409, 16 : i32
      %1411 = arith.index_cast %1410 : i32 to index
      %c0_682 = arith.constant 0 : index
      %1412 = vector.load %arg7[%1411, %c0_682] : memref<1440x8xf32, #tpu.memory_space<vmem>>, vector<16x8xf32>
      tpu.vector_store %arg7[%1411, %c0_682], %1407 {strides = array<i32>} : memref<1440x8xf32, #tpu.memory_space<vmem>>, vector<16x8xf32>,
    }
    %c15_i32_0 = arith.constant 15 : i32
    %c0 = arith.constant 0 : index
    %c0_1 = arith.constant 0 : index
    %1 = vector.load %arg4[%c0, %c0_1] : memref<16x1440xf32, #tpu.memory_space<vmem>>, vector<16x1440xf32>
    %c0_2 = arith.constant 0 : index
    %c0_3 = arith.constant 0 : index
    %2 = vector.load %arg7[%c0_2, %c0_3] : memref<1440x8xf32, #tpu.memory_space<vmem>>, vector<1440x8xf32>
    %cst = arith.constant dense<0.000000e+00> : vector<16x8xf32>
    %3 = tpu.matmul %1, %2, %cst {dimension_numbers = #tpu.dot_dimension_numbers<[1], [0], [0], [1], [0, 0, 1, 1], [], []>} : vector<16x1440xf32>, vector<1440x8xf32>, vector<16x8xf32> -> vector<16x8xf32>
    %c0_4 = arith.constant 0 : index
    %c0_5 = arith.constant 0 : index
    %4 = vector.load %arg5[%c0_4, %c0_5] : memref<16x1xf32, #tpu.memory_space<vmem>>, vector<16x1xf32>
    %5 = vector.broadcast %4 : vector<16x1xf32> to vector<16x8xf32>
    %6 = arith.addf %3, %5 : vector<16x8xf32>
    %c0_6 = arith.constant 0 : index
    %c0_7 = arith.constant 0 : index
    %7 = vector.load %arg6[%c0_6, %c0_7] : memref<16x8xf32, #tpu.memory_space<vmem>>, vector<16x8xf32>
    tpu.vector_store %arg6[%c0_6, %c0_7], %6 {strides = array<i32>} : memref<16x8xf32, #tpu.memory_space<vmem>>, vector<16x8xf32>,
    return
  }
  func.func @transform_0(%arg0: i32) -> (i32, i32, i32, i32) {
    %c0_i32 = arith.constant 0 : i32
    %c0_i32_0 = arith.constant 0 : i32
    %c0_i32_1 = arith.constant 0 : i32
    %c0_i32_2 = arith.constant 0 : i32
    return %c0_i32, %c0_i32_0, %c0_i32_1, %arg0 : i32, i32, i32, i32
  }
  func.func @transform_1(%arg0: i32) -> i32 {
    %c0_i32 = arith.constant 0 : i32
    %c0_i32_0 = arith.constant 0 : i32
    return %c0_i32 : i32
  }
  func.func @transform_2(%arg0: i32) -> i32 {
    %c0_i32 = arith.constant 0 : i32
    %c0_i32_0 = arith.constant 0 : i32
    return %c0_i32 : i32
  }
  func.func @transform_3(%arg0: i32) -> (i32, i32) {
    %c0_i32 = arith.constant 0 : i32
    %c0_i32_0 = arith.constant 0 : i32
    %c0_i32_1 = arith.constant 0 : i32
    return %c0_i32, %c0_i32_0 : i32, i32
  }
  func.func @transform_4(%arg0: i32) -> (i32, i32) {
    %c0_i32 = arith.constant 0 : i32
    %c0_i32_0 = arith.constant 0 : i32
    %c0_i32_1 = arith.constant 0 : i32
    return %c0_i32, %c0_i32_0 : i32, i32
  }
  func.func @transform_5(%arg0: i32) -> (i32, i32) {
    %c0_i32 = arith.constant 0 : i32
    %c0_i32_0 = arith.constant 0 : i32
    return %c0_i32, %arg0 : i32, i32
  }
}

</mosaic_0001>

<llo_original>
// kernel: net_forward.1
$region0: #{net_forward.1}
  #allocation0 [shape = 'u32[]', space=smem, size = 0x4, offset = 0x4, fixed_abs, tag = 'smem constant byte address 0x4 - core index']
  #allocation1 [shape = 'u32[144,128]{1,0:T(1,128)}', space=vmem, size = 0x12000, scoped, tag = 'internal scratch']
  #allocation2 [shape = 'f32[1440,8]{1,0:T(8,128)}', space=vmem, size = 0xb4000, scoped, tag = 'scratch operand']
  %s0 = inlined_call_operand.vmem [shape: f32[8,16,16,8], index: 0, kind: input, shape index: {}]
  %s1 = inlined_call_operand.vmem [shape: f32[54], index: 1, kind: input, shape index: {}]
  %s2 = inlined_call_operand.vmem [shape: f32[6], index: 2, kind: input, shape index: {}]
  %s3 = inlined_call_operand.vmem [shape: f32[16,1440], index: 3, kind: input, shape index: {}]
  %s4 = inlined_call_operand.vmem [shape: f32[16,1], index: 4, kind: input, shape index: {}]
  %s5 = inlined_call_operand.vmem [shape: f32[16,8], index: 5, kind: output, shape index: {}]
  %s6 = sld [smem:[#allocation0]]
  $region45: #{net_forward.1} parent=0
    _
  %s8 = ssub.s32 1, %s6
  %s9 = scalar_select 0, %s8, %s6
  $region1: #{net_forward.1} parent=0
    #allocation3 [shape = 'u8[512]{0}', space=smem, size = 0x200, scoped, tag = 'input window, operand 1, single buffered']
    #allocation4 [shape = 's32[1]{0}', space=sflag, size = 0x4, scoped, tag = 'scoped memory for net_forward.1']
    #allocation5 [shape = 'u8[512]{0}', space=smem, size = 0x200, scoped, tag = 'input window, operand 2, single buffered']
    #allocation6 [shape = 's32[1]{0}', space=sflag, size = 0x4, scoped, tag = 'scoped memory for net_forward.1']
    %10 = vsyncpa [#allocation4], 0
    %11 = vsyncpa [#allocation6], 0
    // Predicated region
    $region2: #{net_forward.1} parent=1 // pred_check
      _
    $region3: #{net_forward.1} parent=1 // pred_check_branch
      %13 = sbr.rel (0) target = $region5
    $region4: #{net_forward.1} parent=1 // pred_region
      _
    $region5: #{net_forward.1} parent=1 // pred_fallthru
      _
    // Predicated region
    $region6: #{net_forward.1} parent=1 // pred_check
      _
    $region7: #{net_forward.1} parent=1 // pred_check_branch
      %15 = sbr.rel (0) target = $region9
    $region8: #{net_forward.1} parent=1 // pred_region
      %s17 = ssub.s32 16, 16
      %18 = vsyncadd [#allocation4], %s17
      %s20 = sshll.u32 %s1, 4
      %s21 = int_to_ptr.vmem [resolvable:$true] %s20
      %23 = dma.vmem_to_smem %s21, 16, [#allocation3], [#allocation4]
    $region9: #{net_forward.1} parent=1 // pred_fallthru
      _
    // Predicated region
    $region10: #{net_forward.1} parent=1 // pred_check
      _
    $region11: #{net_forward.1} parent=1 // pred_check_branch
      %25 = sbr.rel (0) target = $region13
    $region12: #{net_forward.1} parent=1 // pred_region
      %s27 = ssub.s32 16, 16
      %28 = vsyncadd [#allocation6], %s27
      %s30 = sshll.u32 %s2, 4
      %s31 = int_to_ptr.vmem [resolvable:$true] %s30
      %33 = dma.vmem_to_smem %s31, 16, [#allocation5], [#allocation6]
    $region13: #{net_forward.1} parent=1 // pred_fallthru
      _
    // Predicated region
    $region14: #{net_forward.1} parent=1 // pred_check
      _
    $region15: #{net_forward.1} parent=1 // pred_check_branch
      %35 = sbr.rel (0) target = $region17
    $region16: #{net_forward.1} parent=1 // pred_region
      _
    $region17: #{net_forward.1} parent=1 // pred_fallthru
      _
    // Predicated region
    $region18: #{net_forward.1} parent=1 // pred_check
      _
    $region19: #{net_forward.1} parent=1 // pred_check_branch
      %37 = sbr.rel (0) target = $region21
    $region20: #{net_forward.1} parent=1 // pred_region
      _
    $region21: #{net_forward.1} parent=1 // pred_fallthru
      _
    // Predicated region
    $region22: #{net_forward.1} parent=1 // pred_check
      _
    $region23: #{net_forward.1} parent=1 // pred_check_branch
      %39 = sbr.rel (0) target = $region25
    $region24: #{net_forward.1} parent=1 // pred_region
      %40 = dma.done [#allocation4], 16
    $region25: #{net_forward.1} parent=1 // pred_fallthru
      _
    // Predicated region
    $region26: #{net_forward.1} parent=1 // pred_check
      _
    $region27: #{net_forward.1} parent=1 // pred_check_branch
      %42 = sbr.rel (0) target = $region29
    $region28: #{net_forward.1} parent=1 // pred_region
      %43 = dma.done [#allocation6], 16
    $region29: #{net_forward.1} parent=1 // pred_fallthru
      _
    %44 = sfence
    loop: start=0, step=1, limit=15
    $region30: #{net_forward.1} parent=1 // loop_pre_header
      _
    $region31: #{net_forward.1} parent=1 // loop_header
      %s46 = sphi 0, %s50
      %p47 = scmp.ge.s32.totalorder %s46, 15
    $region32: #{net_forward.1} parent=1 // loop_header_branch
      %49 = sbr.rel (%p47) target = $region36
    $region33: #{net_forward.1} parent=1 // loop_body
      %s51 = sadd.s32 %s46, 1
      %s52 = sld [smem:[#allocation3]]
      %s53 = sld [smem:[#allocation3 + $0x1]]
      %s54 = sld [smem:[#allocation3 + $0x2]]
      %s55 = sld [smem:[#allocation3 + $0x3]]
      %s56 = sld [smem:[#allocation3 + $0x4]]
      %s57 = sld [smem:[#allocation3 + $0x5]]
      %s58 = sld [smem:[#allocation3 + $0x6]]
      %s59 = sld [smem:[#allocation3 + $0x7]]
      %s60 = sld [smem:[#allocation3 + $0x8]]
      %s61 = sld [smem:[#allocation5]]
      %s62 = smul.u32 %s46, 16
      %s63 = scalar_lea.vmem %s0, %s62
      %v64 = vld [vmem:[%s63] sm:$0xff]
      %v65 = vld [vmem:[%s63 + $0x8] sm:$0xff]
      %v66 = vstv %s52
      %v67 = vmul.f32 %v64, %v66
      %v68 = vmul.f32 %v65, %v66
      %s69 = sadd.s32 %s62, 256
      %s70 = scalar_lea.vmem %s0, %s69
      %v71 = vld [vmem:[%s70] sm:$0xff]
      %v72 = vld [vmem:[%s70 + $0x8] sm:$0xff]
      %v73 = vstv %s53
      %v74 = vmul.f32 %v71, %v73
      %v75 = vmul.f32 %v72, %v73
      %v76 = vadd.f32 %v67, %v74
      %v77 = vadd.f32 %v68, %v75
      %s78 = sadd.s32 %s62, 512
      %s79 = scalar_lea.vmem %s0, %s78
      %v80 = vld [vmem:[%s79] sm:$0xff]
      %v81 = vld [vmem:[%s79 + $0x8] sm:$0xff]
      %v82 = vstv %s54
      %v83 = vmul.f32 %v80, %v82
      %v84 = vmul.f32 %v81, %v82
      %v85 = vadd.f32 %v76, %v83
      %v86 = vadd.f32 %v77, %v84
      %s87 = sadd.s32 %s62, 1024
      %s88 = scalar_lea.vmem %s0, %s87
      %v89 = vld [vmem:[%s88] sm:$0xff]
      %v90 = vld [vmem:[%s88 + $0x8] sm:$0xff]
      %v91 = vstv %s55
      %v92 = vmul.f32 %v89, %v91
      %v93 = vmul.f32 %v90, %v91
      %v94 = vadd.f32 %v85, %v92
      %v95 = vadd.f32 %v86, %v93
      %s96 = sadd.s32 %s62, 1280
      %s97 = scalar_lea.vmem %s0, %s96
      %v98 = vld [vmem:[%s97] sm:$0xff]
      %v99 = vld [vmem:[%s97 + $0x8] sm:$0xff]
      %v100 = vstv %s56
      %v101 = vmul.f32 %v98, %v100
      %v102 = vmul.f32 %v99, %v100
      %v103 = vadd.f32 %v94, %v101
      %v104 = vadd.f32 %v95, %v102
      %s105 = sadd.s32 %s62, 1536
      %s106 = scalar_lea.vmem %s0, %s105
      %v107 = vld [vmem:[%s106] sm:$0xff]
      %v108 = vld [vmem:[%s106 + $0x8] sm:$0xff]
      %v109 = vstv %s57
      %v110 = vmul.f32 %v107, %v109
      %v111 = vmul.f32 %v108, %v109
      %v112 = vadd.f32 %v103, %v110
      %v113 = vadd.f32 %v104, %v111
      %s114 = smul.u32 %s51, 16
      %s115 = scalar_lea.vmem %s0, %s114
      %v116 = vld [vmem:[%s115] sm:$0xff]
      %v117 = vld [vmem:[%s115 + $0x8] sm:$0xff]
      %v118 = vstv %s58
      %v119 = vmul.f32 %v116, %v118
      %v120 = vmul.f32 %v117, %v118
      %v121 = vadd.f32 %v112, %v119
      %v122 = vadd.f32 %v113, %v120
      %s123 = sadd.s32 %s114, 256
      %s124 = scalar_lea.vmem %s0, %s123
      %v125 = vld [vmem:[%s124] sm:$0xff]
      %v126 = vld [vmem:[%s124 + $0x8] sm:$0xff]
      %v127 = vstv %s59
      %v128 = vmul.f32 %v125, %v127
      %v129 = vmul.f32 %v126, %v127
      %v130 = vadd.f32 %v121, %v128
      %v131 = vadd.f32 %v122, %v129
      %s132 = sadd.s32 %s114, 512
      %s133 = scalar_lea.vmem %s0, %s132
      %v134 = vld [vmem:[%s133] sm:$0xff]
      %v135 = vld [vmem:[%s133 + $0x8] sm:$0xff]
      %v136 = vstv %s60
      %v137 = vmul.f32 %v134, %v136
      %v138 = vmul.f32 %v135, %v136
      %v139 = vadd.f32 %v130, %v137
      %v140 = vadd.f32 %v131, %v138
      %v141 = vmul.f32 %v71, %v66
      %v142 = vmul.f32 %v72, %v66
      %v143 = vmul.f32 %v80, %v73
      %v144 = vmul.f32 %v81, %v73
      %v145 = vadd.f32 %v141, %v143
      %v146 = vadd.f32 %v142, %v144
      %s147 = sadd.s32 %s62, 768
      %s148 = scalar_lea.vmem %s0, %s147
      %v149 = vld [vmem:[%s148] sm:$0xff]
      %v150 = vld [vmem:[%s148 + $0x8] sm:$0xff]
      %v151 = vmul.f32 %v149, %v82
      %v152 = vmul.f32 %v150, %v82
      %v153 = vadd.f32 %v145, %v151
      %v154 = vadd.f32 %v146, %v152
      %v155 = vmul.f32 %v98, %v91
      %v156 = vmul.f32 %v99, %v91
      %v157 = vadd.f32 %v153, %v155
      %v158 = vadd.f32 %v154, %v156
      %v159 = vmul.f32 %v107, %v100
      %v160 = vmul.f32 %v108, %v100
      %v161 = vadd.f32 %v157, %v159
      %v162 = vadd.f32 %v158, %v160
      %s163 = sadd.s32 %s62, 1792
      %s164 = scalar_lea.vmem %s0, %s163
      %v165 = vld [vmem:[%s164] sm:$0xff]
      %v166 = vld [vmem:[%s164 + $0x8] sm:$0xff]
      %v167 = vmul.f32 %v165, %v109
      %v168 = vmul.f32 %v166, %v109
      %v169 = vadd.f32 %v161, %v167
      %v170 = vadd.f32 %v162, %v168
      %v171 = vmul.f32 %v125, %v118
      %v172 = vmul.f32 %v126, %v118
      %v173 = vadd.f32 %v169, %v171
      %v174 = vadd.f32 %v170, %v172
      %v175 = vmul.f32 %v134, %v127
      %v176 = vmul.f32 %v135, %v127
      %v177 = vadd.f32 %v173, %v175
      %v178 = vadd.f32 %v174, %v176
      %s179 = sadd.s32 %s114, 768
      %s180 = scalar_lea.vmem %s0, %s179
      %v181 = vld [vmem:[%s180] sm:$0xff]
      %v182 = vld [vmem:[%s180 + $0x8] sm:$0xff]
      %v183 = vmul.f32 %v181, %v136
      %v184 = vmul.f32 %v182, %v136
      %v185 = vadd.f32 %v177, %v183
      %v186 = vadd.f32 %v178, %v184
      %v187 = vmax.f32 %v139, %v185
      %v188 = vmax.f32 %v140, %v186
      %v189 = vmul.f32 %v89, %v66
      %v190 = vmul.f32 %v90, %v66
      %v191 = vmul.f32 %v98, %v73
      %v192 = vmul.f32 %v99, %v73
      %v193 = vadd.f32 %v189, %v191
      %v194 = vadd.f32 %v190, %v192
      %v195 = vmul.f32 %v107, %v82
      %v196 = vmul.f32 %v108, %v82
      %v197 = vadd.f32 %v193, %v195
      %v198 = vadd.f32 %v194, %v196
      %v199 = vmul.f32 %v116, %v91
      %v200 = vmul.f32 %v117, %v91
      %v201 = vadd.f32 %v197, %v199
      %v202 = vadd.f32 %v198, %v200
      %v203 = vmul.f32 %v125, %v100
      %v204 = vmul.f32 %v126, %v100
      %v205 = vadd.f32 %v201, %v203
      %v206 = vadd.f32 %v202, %v204
      %v207 = vmul.f32 %v134, %v109
      %v208 = vmul.f32 %v135, %v109
      %v209 = vadd.f32 %v205, %v207
      %v210 = vadd.f32 %v206, %v208
      %s211 = sadd.s32 %s114, 1024
      %s212 = scalar_lea.vmem %s0, %s211
      %v213 = vld [vmem:[%s212] sm:$0xff]
      %v214 = vld [vmem:[%s212 + $0x8] sm:$0xff]
      %v215 = vmul.f32 %v213, %v118
      %v216 = vmul.f32 %v214, %v118
      %v217 = vadd.f32 %v209, %v215
      %v218 = vadd.f32 %v210, %v216
      %s219 = sadd.s32 %s114, 1280
      %s220 = scalar_lea.vmem %s0, %s219
      %v221 = vld [vmem:[%s220] sm:$0xff]
      %v222 = vld [vmem:[%s220 + $0x8] sm:$0xff]
      %v223 = vmul.f32 %v221, %v127
      %v224 = vmul.f32 %v222, %v127
      %v225 = vadd.f32 %v217, %v223
      %v226 = vadd.f32 %v218, %v224
      %s227 = sadd.s32 %s114, 1536
      %s228 = scalar_lea.vmem %s0, %s227
      %v229 = vld [vmem:[%s228] sm:$0xff]
      %v230 = vld [vmem:[%s228 + $0x8] sm:$0xff]
      %v231 = vmul.f32 %v229, %v136
      %v232 = vmul.f32 %v230, %v136
      %v233 = vadd.f32 %v225, %v231
      %v234 = vadd.f32 %v226, %v232
      %v235 = vmax.f32 %v187, %v233
      %v236 = vmax.f32 %v188, %v234
      %v237 = vmul.f32 %v98, %v66
      %v238 = vmul.f32 %v99, %v66
      %v239 = vmul.f32 %v107, %v73
      %v240 = vmul.f32 %v108, %v73
      %v241 = vadd.f32 %v237, %v239
      %v242 = vadd.f32 %v238, %v240
      %v243 = vmul.f32 %v165, %v82
      %v244 = vmul.f32 %v166, %v82
      %v245 = vadd.f32 %v241, %v243
      %v246 = vadd.f32 %v242, %v244
      %v247 = vmul.f32 %v125, %v91
      %v248 = vmul.f32 %v126, %v91
      %v249 = vadd.f32 %v245, %v247
      %v250 = vadd.f32 %v246, %v248
      %v251 = vmul.f32 %v134, %v100
      %v252 = vmul.f32 %v135, %v100
      %v253 = vadd.f32 %v249, %v251
      %v254 = vadd.f32 %v250, %v252
      %v255 = vmul.f32 %v181, %v109
      %v256 = vmul.f32 %v182, %v109
      %v257 = vadd.f32 %v253, %v255
      %v258 = vadd.f32 %v254, %v256
      %v259 = vmul.f32 %v221, %v118
      %v260 = vmul.f32 %v222, %v118
      %v261 = vadd.f32 %v257, %v259
      %v262 = vadd.f32 %v258, %v260
      %v263 = vmul.f32 %v229, %v127
      %v264 = vmul.f32 %v230, %v127
      %v265 = vadd.f32 %v261, %v263
      %v266 = vadd.f32 %v262, %v264
      %s267 = sadd.s32 %s114, 1792
      %s268 = scalar_lea.vmem %s0, %s267
      %v269 = vld [vmem:[%s268] sm:$0xff]
      %v270 = vld [vmem:[%s268 + $0x8] sm:$0xff]
      %v271 = vmul.f32 %v269, %v136
      %v272 = vmul.f32 %v270, %v136
      %v273 = vadd.f32 %v265, %v271
      %v274 = vadd.f32 %v266, %v272
      %v275 = vmax.f32 %v235, %v273
      %v276 = vmax.f32 %v236, %v274
      %v277 = vstv %s61
      %v278 = vadd.f32 %v275, %v277
      %v279 = vadd.f32 %v276, %v277
      %v280 = vmax.f32 %v278, 0.0
      %v281 = vmax.f32 %v279, 0.0
      %s282 = scalar_lea.vmem [#allocation2], %s62
      %vm283 = vcmask 64512
      %284 = vst.msk [vmem:[%s282] sm:$0xff] %vm283, %v280
      %285 = vst.msk [vmem:[%s282 + $0x8] sm:$0xff] %vm283, %v281
      %s286 = sld [smem:[#allocation3 + $0x9]]
      %s287 = sld [smem:[#allocation3 + $0xa]]
      %s288 = sld [smem:[#allocation3 + $0xb]]
      %s289 = sld [smem:[#allocation3 + $0xc]]
      %s290 = sld [smem:[#allocation3 + $0xd]]
      %s291 = sld [smem:[#allocation3 + $0xe]]
      %s292 = sld [smem:[#allocation3 + $0xf]]
      %s293 = sld [smem:[#allocation3 + $0x10]]
      %s294 = sld [smem:[#allocation3 + $0x11]]
      %s295 = sld [smem:[#allocation5 + $0x1]]
      %v296 = vld [vmem:[%s63] sm:$0xff]
      %v297 = vld [vmem:[%s63 + $0x8] sm:$0xff]
      %v298 = vstv %s286
      %v299 = vmul.f32 %v296, %v298
      %v300 = vmul.f32 %v297, %v298
      %v301 = vld [vmem:[%s70] sm:$0xff]
      %v302 = vld [vmem:[%s70 + $0x8] sm:$0xff]
      %v303 = vstv %s287
      %v304 = vmul.f32 %v301, %v303
      %v305 = vmul.f32 %v302, %v303
      %v306 = vadd.f32 %v299, %v304
      %v307 = vadd.f32 %v300, %v305
      %v308 = vld [vmem:[%s79] sm:$0xff]
      %v309 = vld [vmem:[%s79 + $0x8] sm:$0xff]
      %v310 = vstv %s288
      %v311 = vmul.f32 %v308, %v310
      %v312 = vmul.f32 %v309, %v310
      %v313 = vadd.f32 %v306, %v311
      %v314 = vadd.f32 %v307, %v312
      %v315 = vld [vmem:[%s88] sm:$0xff]
      %v316 = vld [vmem:[%s88 + $0x8] sm:$0xff]
      %v317 = vstv %s289
      %v318 = vmul.f32 %v315, %v317
      %v319 = vmul.f32 %v316, %v317
      %v320 = vadd.f32 %v313, %v318
      %v321 = vadd.f32 %v314, %v319
      %v322 = vld [vmem:[%s97] sm:$0xff]
      %v323 = vld [vmem:[%s97 + $0x8] sm:$0xff]
      %v324 = vstv %s290
      %v325 = vmul.f32 %v322, %v324
      %v326 = vmul.f32 %v323, %v324
      %v327 = vadd.f32 %v320, %v325
      %v328 = vadd.f32 %v321, %v326
      %v329 = vld [vmem:[%s106] sm:$0xff]
      %v330 = vld [vmem:[%s106 + $0x8] sm:$0xff]
      %v331 = vstv %s291
      %v332 = vmul.f32 %v329, %v331
      %v333 = vmul.f32 %v330, %v331
      %v334 = vadd.f32 %v327, %v332
      %v335 = vadd.f32 %v328, %v333
      %v336 = vld [vmem:[%s115] sm:$0xff]
      %v337 = vld [vmem:[%s115 + $0x8] sm:$0xff]
      %v338 = vstv %s292
      %v339 = vmul.f32 %v336, %v338
      %v340 = vmul.f32 %v337, %v338
      %v341 = vadd.f32 %v334, %v339
      %v342 = vadd.f32 %v335, %v340
      %v343 = vld [vmem:[%s124] sm:$0xff]
      %v344 = vld [vmem:[%s124 + $0x8] sm:$0xff]
      %v345 = vstv %s293
      %v346 = vmul.f32 %v343, %v345
      %v347 = vmul.f32 %v344, %v345
      %v348 = vadd.f32 %v341, %v346
      %v349 = vadd.f32 %v342, %v347
      %v350 = vld [vmem:[%s133] sm:$0xff]
      %v351 = vld [vmem:[%s133 + $0x8] sm:$0xff]
      %v352 = vstv %s294
      %v353 = vmul.f32 %v350, %v352
      %v354 = vmul.f32 %v351, %v352
      %v355 = vadd.f32 %v348, %v353
      %v356 = vadd.f32 %v349, %v354
      %v357 = vmul.f32 %v301, %v298
      %v358 = vmul.f32 %v302, %v298
      %v359 = vmul.f32 %v308, %v303
      %v360 = vmul.f32 %v309, %v303
      %v361 = vadd.f32 %v357, %v359
      %v362 = vadd.f32 %v358, %v360
      %v363 = vld [vmem:[%s148] sm:$0xff]
      %v364 = vld [vmem:[%s148 + $0x8] sm:$0xff]
      %v365 = vmul.f32 %v363, %v310
      %v366 = vmul.f32 %v364, %v310
      %v367 = vadd.f32 %v361, %v365
      %v368 = vadd.f32 %v362, %v366
      %v369 = vmul.f32 %v322, %v317
      %v370 = vmul.f32 %v323, %v317
      %v371 = vadd.f32 %v367, %v369
      %v372 = vadd.f32 %v368, %v370
      %v373 = vmul.f32 %v329, %v324
      %v374 = vmul.f32 %v330, %v324
      %v375 = vadd.f32 %v371, %v373
      %v376 = vadd.f32 %v372, %v374
      %v377 = vld [vmem:[%s164] sm:$0xff]
      %v378 = vld [vmem:[%s164 + $0x8] sm:$0xff]
      %v379 = vmul.f32 %v377, %v331
      %v380 = vmul.f32 %v378, %v331
      %v381 = vadd.f32 %v375, %v379
      %v382 = vadd.f32 %v376, %v380
      %v383 = vmul.f32 %v343, %v338
      %v384 = vmul.f32 %v344, %v338
      %v385 = vadd.f32 %v381, %v383
      %v386 = vadd.f32 %v382, %v384
      %v387 = vmul.f32 %v350, %v345
      %v388 = vmul.f32 %v351, %v345
      %v389 = vadd.f32 %v385, %v387
      %v390 = vadd.f32 %v386, %v388
      %v391 = vld [vmem:[%s180] sm:$0xff]
      %v392 = vld [vmem:[%s180 + $0x8] sm:$0xff]
      %v393 = vmul.f32 %v391, %v352
      %v394 = vmul.f32 %v392, %v352
      %v395 = vadd.f32 %v389, %v393
      %v396 = vadd.f32 %v390, %v394
      %v397 = vmax.f32 %v355, %v395
      %v398 = vmax.f32 %v356, %v396
      %v399 = vmul.f32 %v315, %v298
      %v400 = vmul.f32 %v316, %v298
      %v401 = vmul.f32 %v322, %v303
      %v402 = vmul.f32 %v323, %v303
      %v403 = vadd.f32 %v399, %v401
      %v404 = vadd.f32 %v400, %v402
      %v405 = vmul.f32 %v329, %v310
      %v406 = vmul.f32 %v330, %v310
      %v407 = vadd.f32 %v403, %v405
      %v408 = vadd.f32 %v404, %v406
      %v409 = vmul.f32 %v336, %v317
      %v410 = vmul.f32 %v337, %v317
      %v411 = vadd.f32 %v407, %v409
      %v412 = vadd.f32 %v408, %v410
      %v413 = vmul.f32 %v343, %v324
      %v414 = vmul.f32 %v344, %v324
      %v415 = vadd.f32 %v411, %v413
      %v416 = vadd.f32 %v412, %v414
      %v417 = vmul.f32 %v350, %v331
      %v418 = vmul.f32 %v351, %v331
      %v419 = vadd.f32 %v415, %v417
      %v420 = vadd.f32 %v416, %v418
      %v421 = vld [vmem:[%s212] sm:$0xff]
      %v422 = vld [vmem:[%s212 + $0x8] sm:$0xff]
      %v423 = vmul.f32 %v421, %v338
      %v424 = vmul.f32 %v422, %v338
      %v425 = vadd.f32 %v419, %v423
      %v426 = vadd.f32 %v420, %v424
      %v427 = vld [vmem:[%s220] sm:$0xff]
      %v428 = vld [vmem:[%s220 + $0x8] sm:$0xff]
      %v429 = vmul.f32 %v427, %v345
      %v430 = vmul.f32 %v428, %v345
      %v431 = vadd.f32 %v425, %v429
      %v432 = vadd.f32 %v426, %v430
      %v433 = vld [vmem:[%s228] sm:$0xff]
      %v434 = vld [vmem:[%s228 + $0x8] sm:$0xff]
      %v435 = vmul.f32 %v433, %v352
      %v436 = vmul.f32 %v434, %v352
      %v437 = vadd.f32 %v431, %v435
      %v438 = vadd.f32 %v432, %v436
      %v439 = vmax.f32 %v397, %v437
      %v440 = vmax.f32 %v398, %v438
      %v441 = vmul.f32 %v322, %v298
      %v442 = vmul.f32 %v323, %v298
      %v443 = vmul.f32 %v329, %v303
      %v444 = vmul.f32 %v330, %v303
      %v445 = vadd.f32 %v441, %v443
      %v446 = vadd.f32 %v442, %v444
      %v447 = vmul.f32 %v377, %v310
      %v448 = vmul.f32 %v378, %v310
      %v449 = vadd.f32 %v445, %v447
      %v450 = vadd.f32 %v446, %v448
      %v451 = vmul.f32 %v343, %v317
      %v452 = vmul.f32 %v344, %v317
      %v453 = vadd.f32 %v449, %v451
      %v454 = vadd.f32 %v450, %v452
      %v455 = vmul.f32 %v350, %v324
      %v456 = vmul.f32 %v351, %v324
      %v457 = vadd.f32 %v453, %v455
      %v458 = vadd.f32 %v454, %v456
      %v459 = vmul.f32 %v391, %v331
      %v460 = vmul.f32 %v392, %v331
      %v461 = vadd.f32 %v457, %v459
      %v462 = vadd.f32 %v458, %v460
      %v463 = vmul.f32 %v427, %v338
      %v464 = vmul.f32 %v428, %v338
      %v465 = vadd.f32 %v461, %v463
      %v466 = vadd.f32 %v462, %v464
      %v467 = vmul.f32 %v433, %v345
      %v468 = vmul.f32 %v434, %v345
      %v469 = vadd.f32 %v465, %v467
      %v470 = vadd.f32 %v466, %v468
      %v471 = vld [vmem:[%s268] sm:$0xff]
      %v472 = vld [vmem:[%s268 + $0x8] sm:$0xff]
      %v473 = vmul.f32 %v471, %v352
      %v474 = vmul.f32 %v472, %v352
      %v475 = vadd.f32 %v469, %v473
      %v476 = vadd.f32 %v470, %v474
      %v477 = vmax.f32 %v439, %v475
      %v478 = vmax.f32 %v440, %v476
      %v479 = vstv %s295
      %v480 = vadd.f32 %v477, %v479
      %v481 = vadd.f32 %v478, %v479
      %v482 = vmax.f32 %v480, 0.0
      %v483 = vmax.f32 %v481, 0.0
      %s484 = sadd.s32 %s46, 15
      %s485 = smul.u32 %s484, 16
      %s486 = scalar_lea.vmem [#allocation2], %s485
      %487 = vst.msk [vmem:[%s486] sm:$0xff] %vm283, %v482
      %488 = vst.msk [vmem:[%s486 + $0x8] sm:$0xff] %vm283, %v483
      %s489 = sld [smem:[#allocation3 + $0x12]]
      %s490 = sld [smem:[#allocation3 + $0x13]]
      %s491 = sld [smem:[#allocation3 + $0x14]]
      %s492 = sld [smem:[#allocation3 + $0x15]]
      %s493 = sld [smem:[#allocation3 + $0x16]]
      %s494 = sld [smem:[#allocation3 + $0x17]]
      %s495 = sld [smem:[#allocation3 + $0x18]]
      %s496 = sld [smem:[#allocation3 + $0x19]]
      %s497 = sld [smem:[#allocation3 + $0x1a]]
      %s498 = sld [smem:[#allocation5 + $0x2]]
      %v499 = vld [vmem:[%s63] sm:$0xff]
      %v500 = vld [vmem:[%s63 + $0x8] sm:$0xff]
      %v501 = vstv %s489
      %v502 = vmul.f32 %v499, %v501
      %v503 = vmul.f32 %v500, %v501
      %v504 = vld [vmem:[%s70] sm:$0xff]
      %v505 = vld [vmem:[%s70 + $0x8] sm:$0xff]
      %v506 = vstv %s490
      %v507 = vmul.f32 %v504, %v506
      %v508 = vmul.f32 %v505, %v506
      %v509 = vadd.f32 %v502, %v507
      %v510 = vadd.f32 %v503, %v508
      %v511 = vld [vmem:[%s79] sm:$0xff]
      %v512 = vld [vmem:[%s79 + $0x8] sm:$0xff]
      %v513 = vstv %s491
      %v514 = vmul.f32 %v511, %v513
      %v515 = vmul.f32 %v512, %v513
      %v516 = vadd.f32 %v509, %v514
      %v517 = vadd.f32 %v510, %v515
      %v518 = vld [vmem:[%s88] sm:$0xff]
      %v519 = vld [vmem:[%s88 + $0x8] sm:$0xff]
      %v520 = vstv %s492
      %v521 = vmul.f32 %v518, %v520
      %v522 = vmul.f32 %v519, %v520
      %v523 = vadd.f32 %v516, %v521
      %v524 = vadd.f32 %v517, %v522
      %v525 = vld [vmem:[%s97] sm:$0xff]
      %v526 = vld [vmem:[%s97 + $0x8] sm:$0xff]
      %v527 = vstv %s493
      %v528 = vmul.f32 %v525, %v527
      %v529 = vmul.f32 %v526, %v527
      %v530 = vadd.f32 %v523, %v528
      %v531 = vadd.f32 %v524, %v529
      %v532 = vld [vmem:[%s106] sm:$0xff]
      %v533 = vld [vmem:[%s106 + $0x8] sm:$0xff]
      %v534 = vstv %s494
      %v535 = vmul.f32 %v532, %v534
      %v536 = vmul.f32 %v533, %v534
      %v537 = vadd.f32 %v530, %v535
      %v538 = vadd.f32 %v531, %v536
      %v539 = vld [vmem:[%s115] sm:$0xff]
      %v540 = vld [vmem:[%s115 + $0x8] sm:$0xff]
      %v541 = vstv %s495
      %v542 = vmul.f32 %v539, %v541
      %v543 = vmul.f32 %v540, %v541
      %v544 = vadd.f32 %v537, %v542
      %v545 = vadd.f32 %v538, %v543
      %v546 = vld [vmem:[%s124] sm:$0xff]
      %v547 = vld [vmem:[%s124 + $0x8] sm:$0xff]
      %v548 = vstv %s496
      %v549 = vmul.f32 %v546, %v548
      %v550 = vmul.f32 %v547, %v548
      %v551 = vadd.f32 %v544, %v549
      %v552 = vadd.f32 %v545, %v550
      %v553 = vld [vmem:[%s133] sm:$0xff]
      %v554 = vld [vmem:[%s133 + $0x8] sm:$0xff]
      %v555 = vstv %s497
      %v556 = vmul.f32 %v553, %v555
      %v557 = vmul.f32 %v554, %v555
      %v558 = vadd.f32 %v551, %v556
      %v559 = vadd.f32 %v552, %v557
      %v560 = vmul.f32 %v504, %v501
      %v561 = vmul.f32 %v505, %v501
      %v562 = vmul.f32 %v511, %v506
      %v563 = vmul.f32 %v512, %v506
      %v564 = vadd.f32 %v560, %v562
      %v565 = vadd.f32 %v561, %v563
      %v566 = vld [vmem:[%s148] sm:$0xff]
      %v567 = vld [vmem:[%s148 + $0x8] sm:$0xff]
      %v568 = vmul.f32 %v566, %v513
      %v569 = vmul.f32 %v567, %v513
      %v570 = vadd.f32 %v564, %v568
      %v571 = vadd.f32 %v565, %v569
      %v572 = vmul.f32 %v525, %v520
      %v573 = vmul.f32 %v526, %v520
      %v574 = vadd.f32 %v570, %v572
      %v575 = vadd.f32 %v571, %v573
      %v576 = vmul.f32 %v532, %v527
      %v577 = vmul.f32 %v533, %v527
      %v578 = vadd.f32 %v574, %v576
      %v579 = vadd.f32 %v575, %v577
      %v580 = vld [vmem:[%s164] sm:$0xff]
      %v581 = vld [vmem:[%s164 + $0x8] sm:$0xff]
      %v582 = vmul.f32 %v580, %v534
      %v583 = vmul.f32 %v581, %v534
      %v584 = vadd.f32 %v578, %v582
      %v585 = vadd.f32 %v579, %v583
      %v586 = vmul.f32 %v546, %v541
      %v587 = vmul.f32 %v547, %v541
      %v588 = vadd.f32 %v584, %v586
      %v589 = vadd.f32 %v585, %v587
      %v590 = vmul.f32 %v553, %v548
      %v591 = vmul.f32 %v554, %v548
      %v592 = vadd.f32 %v588, %v590
      %v593 = vadd.f32 %v589, %v591
      %v594 = vld [vmem:[%s180] sm:$0xff]
      %v595 = vld [vmem:[%s180 + $0x8] sm:$0xff]
      %v596 = vmul.f32 %v594, %v555
      %v597 = vmul.f32 %v595, %v555
      %v598 = vadd.f32 %v592, %v596
      %v599 = vadd.f32 %v593, %v597
      %v600 = vmax.f32 %v558, %v598
      %v601 = vmax.f32 %v559, %v599
      %v602 = vmul.f32 %v518, %v501
      %v603 = vmul.f32 %v519, %v501
      %v604 = vmul.f32 %v525, %v506
      %v605 = vmul.f32 %v526, %v506
      %v606 = vadd.f32 %v602, %v604
      %v607 = vadd.f32 %v603, %v605
      %v608 = vmul.f32 %v532, %v513
      %v609 = vmul.f32 %v533, %v513
      %v610 = vadd.f32 %v606, %v608
      %v611 = vadd.f32 %v607, %v609
      %v612 = vmul.f32 %v539, %v520
      %v613 = vmul.f32 %v540, %v520
      %v614 = vadd.f32 %v610, %v612
      %v615 = vadd.f32 %v611, %v613
      %v616 = vmul.f32 %v546, %v527
      %v617 = vmul.f32 %v547, %v527
      %v618 = vadd.f32 %v614, %v616
      %v619 = vadd.f32 %v615, %v617
      %v620 = vmul.f32 %v553, %v534
      %v621 = vmul.f32 %v554, %v534
      %v622 = vadd.f32 %v618, %v620
      %v623 = vadd.f32 %v619, %v621
      %v624 = vld [vmem:[%s212] sm:$0xff]
      %v625 = vld [vmem:[%s212 + $0x8] sm:$0xff]
      %v626 = vmul.f32 %v624, %v541
      %v627 = vmul.f32 %v625, %v541
      %v628 = vadd.f32 %v622, %v626
      %v629 = vadd.f32 %v623, %v627
      %v630 = vld [vmem:[%s220] sm:$0xff]
      %v631 = vld [vmem:[%s220 + $0x8] sm:$0xff]
      %v632 = vmul.f32 %v630, %v548
      %v633 = vmul.f32 %v631, %v548
      %v634 = vadd.f32 %v628, %v632
      %v635 = vadd.f32 %v629, %v633
      %v636 = vld [vmem:[%s228] sm:$0xff]
      %v637 = vld [vmem:[%s228 + $0x8] sm:$0xff]
      %v638 = vmul.f32 %v636, %v555
      %v639 = vmul.f32 %v637, %v555
      %v640 = vadd.f32 %v634, %v638
      %v641 = vadd.f32 %v635, %v639
      %v642 = vmax.f32 %v600, %v640
      %v643 = vmax.f32 %v601, %v641
      %v644 = vmul.f32 %v525, %v501
      %v645 = vmul.f32 %v526, %v501
      %v646 = vmul.f32 %v532, %v506
      %v647 = vmul.f32 %v533, %v506
      %v648 = vadd.f32 %v644, %v646
      %v649 = vadd.f32 %v645, %v647
      %v650 = vmul.f32 %v580, %v513
      %v651 = vmul.f32 %v581, %v513
      %v652 = vadd.f32 %v648, %v650
      %v653 = vadd.f32 %v649, %v651
      %v654 = vmul.f32 %v546, %v520
      %v655 = vmul.f32 %v547, %v520
      %v656 = vadd.f32 %v652, %v654
      %v657 = vadd.f32 %v653, %v655
      %v658 = vmul.f32 %v553, %v527
      %v659 = vmul.f32 %v554, %v527
      %v660 = vadd.f32 %v656, %v658
      %v661 = vadd.f32 %v657, %v659
      %v662 = vmul.f32 %v594, %v534
      %v663 = vmul.f32 %v595, %v534
      %v664 = vadd.f32 %v660, %v662
      %v665 = vadd.f32 %v661, %v663
      %v666 = vmul.f32 %v630, %v541
      %v667 = vmul.f32 %v631, %v541
      %v668 = vadd.f32 %v664, %v666
      %v669 = vadd.f32 %v665, %v667
      %v670 = vmul.f32 %v636, %v548
      %v671 = vmul.f32 %v637, %v548
      %v672 = vadd.f32 %v668, %v670
      %v673 = vadd.f32 %v669, %v671
      %v674 = vld [vmem:[%s268] sm:$0xff]
      %v675 = vld [vmem:[%s268 + $0x8] sm:$0xff]
      %v676 = vmul.f32 %v674, %v555
      %v677 = vmul.f32 %v675, %v555
      %v678 = vadd.f32 %v672, %v676
      %v679 = vadd.f32 %v673, %v677
      %v680 = vmax.f32 %v642, %v678
      %v681 = vmax.f32 %v643, %v679
      %v682 = vstv %s498
      %v683 = vadd.f32 %v680, %v682
      %v684 = vadd.f32 %v681, %v682
      %v685 = vmax.f32 %v683, 0.0
      %v686 = vmax.f32 %v684, 0.0
      %s687 = sadd.s32 %s46, 30
      %s688 = smul.u32 %s687, 16
      %s689 = scalar_lea.vmem [#allocation2], %s688
      %690 = vst.msk [vmem:[%s689] sm:$0xff] %vm283, %v685
      %691 = vst.msk [vmem:[%s689 + $0x8] sm:$0xff] %vm283, %v686
      %s692 = sld [smem:[#allocation3 + $0x1b]]
      %s693 = sld [smem:[#allocation3 + $0x1c]]
      %s694 = sld [smem:[#allocation3 + $0x1d]]
      %s695 = sld [smem:[#allocation3 + $0x1e]]
      %s696 = sld [smem:[#allocation3 + $0x1f]]
      %s697 = sld [smem:[#allocation3 + $0x20]]
      %s698 = sld [smem:[#allocation3 + $0x21]]
      %s699 = sld [smem:[#allocation3 + $0x22]]
      %s700 = sld [smem:[#allocation3 + $0x23]]
      %s701 = sld [smem:[#allocation5 + $0x3]]
      %v702 = vld [vmem:[%s63] sm:$0xff]
      %v703 = vld [vmem:[%s63 + $0x8] sm:$0xff]
      %v704 = vstv %s692
      %v705 = vmul.f32 %v702, %v704
      %v706 = vmul.f32 %v703, %v704
      %v707 = vld [vmem:[%s70] sm:$0xff]
      %v708 = vld [vmem:[%s70 + $0x8] sm:$0xff]
      %v709 = vstv %s693
      %v710 = vmul.f32 %v707, %v709
      %v711 = vmul.f32 %v708, %v709
      %v712 = vadd.f32 %v705, %v710
      %v713 = vadd.f32 %v706, %v711
      %v714 = vld [vmem:[%s79] sm:$0xff]
      %v715 = vld [vmem:[%s79 + $0x8] sm:$0xff]
      %v716 = vstv %s694
      %v717 = vmul.f32 %v714, %v716
      %v718 = vmul.f32 %v715, %v716
      %v719 = vadd.f32 %v712, %v717
      %v720 = vadd.f32 %v713, %v718
      %v721 = vld [vmem:[%s88] sm:$0xff]
      %v722 = vld [vmem:[%s88 + $0x8] sm:$0xff]
      %v723 = vstv %s695
      %v724 = vmul.f32 %v721, %v723
      %v725 = vmul.f32 %v722, %v723
      %v726 = vadd.f32 %v719, %v724
      %v727 = vadd.f32 %v720, %v725
      %v728 = vld [vmem:[%s97] sm:$0xff]
      %v729 = vld [vmem:[%s97 + $0x8] sm:$0xff]
      %v730 = vstv %s696
      %v731 = vmul.f32 %v728, %v730
      %v732 = vmul.f32 %v729, %v730
      %v733 = vadd.f32 %v726, %v731
      %v734 = vadd.f32 %v727, %v732
      %v735 = vld [vmem:[%s106] sm:$0xff]
      %v736 = vld [vmem:[%s106 + $0x8] sm:$0xff]
      %v737 = vstv %s697
      %v738 = vmul.f32 %v735, %v737
      %v739 = vmul.f32 %v736, %v737
      %v740 = vadd.f32 %v733, %v738
      %v741 = vadd.f32 %v734, %v739
      %v742 = vld [vmem:[%s115] sm:$0xff]
      %v743 = vld [vmem:[%s115 + $0x8] sm:$0xff]
      %v744 = vstv %s698
      %v745 = vmul.f32 %v742, %v744
      %v746 = vmul.f32 %v743, %v744
      %v747 = vadd.f32 %v740, %v745
      %v748 = vadd.f32 %v741, %v746
      %v749 = vld [vmem:[%s124] sm:$0xff]
      %v750 = vld [vmem:[%s124 + $0x8] sm:$0xff]
      %v751 = vstv %s699
      %v752 = vmul.f32 %v749, %v751
      %v753 = vmul.f32 %v750, %v751
      %v754 = vadd.f32 %v747, %v752
      %v755 = vadd.f32 %v748, %v753
      %v756 = vld [vmem:[%s133] sm:$0xff]
      %v757 = vld [vmem:[%s133 + $0x8] sm:$0xff]
      %v758 = vstv %s700
      %v759 = vmul.f32 %v756, %v758
      %v760 = vmul.f32 %v757, %v758
      %v761 = vadd.f32 %v754, %v759
      %v762 = vadd.f32 %v755, %v760
      %v763 = vmul.f32 %v707, %v704
      %v764 = vmul.f32 %v708, %v704
      %v765 = vmul.f32 %v714, %v709
      %v766 = vmul.f32 %v715, %v709
      %v767 = vadd.f32 %v763, %v765
      %v768 = vadd.f32 %v764, %v766
      %v769 = vld [vmem:[%s148] sm:$0xff]
      %v770 = vld [vmem:[%s148 + $0x8] sm:$0xff]
      %v771 = vmul.f32 %v769, %v716
      %v772 = vmul.f32 %v770, %v716
      %v773 = vadd.f32 %v767, %v771
      %v774 = vadd.f32 %v768, %v772
      %v775 = vmul.f32 %v728, %v723
      %v776 = vmul.f32 %v729, %v723
      %v777 = vadd.f32 %v773, %v775
      %v778 = vadd.f32 %v774, %v776
      %v779 = vmul.f32 %v735, %v730
      %v780 = vmul.f32 %v736, %v730
      %v781 = vadd.f32 %v777, %v779
      %v782 = vadd.f32 %v778, %v780
      %v783 = vld [vmem:[%s164] sm:$0xff]
      %v784 = vld [vmem:[%s164 + $0x8] sm:$0xff]
      %v785 = vmul.f32 %v783, %v737
      %v786 = vmul.f32 %v784, %v737
      %v787 = vadd.f32 %v781, %v785
      %v788 = vadd.f32 %v782, %v786
      %v789 = vmul.f32 %v749, %v744
      %v790 = vmul.f32 %v750, %v744
      %v791 = vadd.f32 %v787, %v789
      %v792 = vadd.f32 %v788, %v790
      %v793 = vmul.f32 %v756, %v751
      %v794 = vmul.f32 %v757, %v751
      %v795 = vadd.f32 %v791, %v793
      %v796 = vadd.f32 %v792, %v794
      %v797 = vld [vmem:[%s180] sm:$0xff]
      %v798 = vld [vmem:[%s180 + $0x8] sm:$0xff]
      %v799 = vmul.f32 %v797, %v758
      %v800 = vmul.f32 %v798, %v758
      %v801 = vadd.f32 %v795, %v799
      %v802 = vadd.f32 %v796, %v800
      %v803 = vmax.f32 %v761, %v801
      %v804 = vmax.f32 %v762, %v802
      %v805 = vmul.f32 %v721, %v704
      %v806 = vmul.f32 %v722, %v704
      %v807 = vmul.f32 %v728, %v709
      %v808 = vmul.f32 %v729, %v709
      %v809 = vadd.f32 %v805, %v807
      %v810 = vadd.f32 %v806, %v808
      %v811 = vmul.f32 %v735, %v716
      %v812 = vmul.f32 %v736, %v716
      %v813 = vadd.f32 %v809, %v811
      %v814 = vadd.f32 %v810, %v812
      %v815 = vmul.f32 %v742, %v723
      %v816 = vmul.f32 %v743, %v723
      %v817 = vadd.f32 %v813, %v815
      %v818 = vadd.f32 %v814, %v816
      %v819 = vmul.f32 %v749, %v730
      %v820 = vmul.f32 %v750, %v730
      %v821 = vadd.f32 %v817, %v819
      %v822 = vadd.f32 %v818, %v820
      %v823 = vmul.f32 %v756, %v737
      %v824 = vmul.f32 %v757, %v737
      %v825 = vadd.f32 %v821, %v823
      %v826 = vadd.f32 %v822, %v824
      %v827 = vld [vmem:[%s212] sm:$0xff]
      %v828 = vld [vmem:[%s212 + $0x8] sm:$0xff]
      %v829 = vmul.f32 %v827, %v744
      %v830 = vmul.f32 %v828, %v744
      %v831 = vadd.f32 %v825, %v829
      %v832 = vadd.f32 %v826, %v830
      %v833 = vld [vmem:[%s220] sm:$0xff]
      %v834 = vld [vmem:[%s220 + $0x8] sm:$0xff]
      %v835 = vmul.f32 %v833, %v751
      %v836 = vmul.f32 %v834, %v751
      %v837 = vadd.f32 %v831, %v835
      %v838 = vadd.f32 %v832, %v836
      %v839 = vld [vmem:[%s228] sm:$0xff]
      %v840 = vld [vmem:[%s228 + $0x8] sm:$0xff]
      %v841 = vmul.f32 %v839, %v758
      %v842 = vmul.f32 %v840, %v758
      %v843 = vadd.f32 %v837, %v841
      %v844 = vadd.f32 %v838, %v842
      %v845 = vmax.f32 %v803, %v843
      %v846 = vmax.f32 %v804, %v844
      %v847 = vmul.f32 %v728, %v704
      %v848 = vmul.f32 %v729, %v704
      %v849 = vmul.f32 %v735, %v709
      %v850 = vmul.f32 %v736, %v709
      %v851 = vadd.f32 %v847, %v849
      %v852 = vadd.f32 %v848, %v850
      %v853 = vmul.f32 %v783, %v716
      %v854 = vmul.f32 %v784, %v716
      %v855 = vadd.f32 %v851, %v853
      %v856 = vadd.f32 %v852, %v854
      %v857 = vmul.f32 %v749, %v723
      %v858 = vmul.f32 %v750, %v723
      %v859 = vadd.f32 %v855, %v857
      %v860 = vadd.f32 %v856, %v858
      %v861 = vmul.f32 %v756, %v730
      %v862 = vmul.f32 %v757, %v730
      %v863 = vadd.f32 %v859, %v861
      %v864 = vadd.f32 %v860, %v862
      %v865 = vmul.f32 %v797, %v737
      %v866 = vmul.f32 %v798, %v737
      %v867 = vadd.f32 %v863, %v865
      %v868 = vadd.f32 %v864, %v866
      %v869 = vmul.f32 %v833, %v744
      %v870 = vmul.f32 %v834, %v744
      %v871 = vadd.f32 %v867, %v869
      %v872 = vadd.f32 %v868, %v870
      %v873 = vmul.f32 %v839, %v751
      %v874 = vmul.f32 %v840, %v751
      %v875 = vadd.f32 %v871, %v873
      %v876 = vadd.f32 %v872, %v874
      %v877 = vld [vmem:[%s268] sm:$0xff]
      %v878 = vld [vmem:[%s268 + $0x8] sm:$0xff]
      %v879 = vmul.f32 %v877, %v758
      %v880 = vmul.f32 %v878, %v758
      %v881 = vadd.f32 %v875, %v879
      %v882 = vadd.f32 %v876, %v880
      %v883 = vmax.f32 %v845, %v881
      %v884 = vmax.f32 %v846, %v882
      %v885 = vstv %s701
      %v886 = vadd.f32 %v883, %v885
      %v887 = vadd.f32 %v884, %v885
      %v888 = vmax.f32 %v886, 0.0
      %v889 = vmax.f32 %v887, 0.0
      %s890 = sadd.s32 %s46, 45
      %s891 = smul.u32 %s890, 16
      %s892 = scalar_lea.vmem [#allocation2], %s891
      %893 = vst.msk [vmem:[%s892] sm:$0xff] %vm283, %v888
      %894 = vst.msk [vmem:[%s892 + $0x8] sm:$0xff] %vm283, %v889
      %s895 = sld [smem:[#allocation3 + $0x24]]
      %s896 = sld [smem:[#allocation3 + $0x25]]
      %s897 = sld [smem:[#allocation3 + $0x26]]
      %s898 = sld [smem:[#allocation3 + $0x27]]
      %s899 = sld [smem:[#allocation3 + $0x28]]
      %s900 = sld [smem:[#allocation3 + $0x29]]
      %s901 = sld [smem:[#allocation3 + $0x2a]]
      %s902 = sld [smem:[#allocation3 + $0x2b]]
      %s903 = sld [smem:[#allocation3 + $0x2c]]
      %s904 = sld [smem:[#allocation5 + $0x4]]
      %v905 = vld [vmem:[%s63] sm:$0xff]
      %v906 = vld [vmem:[%s63 + $0x8] sm:$0xff]
      %v907 = vstv %s895
      %v908 = vmul.f32 %v905, %v907
      %v909 = vmul.f32 %v906, %v907
      %v910 = vld [vmem:[%s70] sm:$0xff]
      %v911 = vld [vmem:[%s70 + $0x8] sm:$0xff]
      %v912 = vstv %s896
      %v913 = vmul.f32 %v910, %v912
      %v914 = vmul.f32 %v911, %v912
      %v915 = vadd.f32 %v908, %v913
      %v916 = vadd.f32 %v909, %v914
      %v917 = vld [vmem:[%s79] sm:$0xff]
      %v918 = vld [vmem:[%s79 + $0x8] sm:$0xff]
      %v919 = vstv %s897
      %v920 = vmul.f32 %v917, %v919
      %v921 = vmul.f32 %v918, %v919
      %v922 = vadd.f32 %v915, %v920
      %v923 = vadd.f32 %v916, %v921
      %v924 = vld [vmem:[%s88] sm:$0xff]
      %v925 = vld [vmem:[%s88 + $0x8] sm:$0xff]
      %v926 = vstv %s898
      %v927 = vmul.f32 %v924, %v926
      %v928 = vmul.f32 %v925, %v926
      %v929 = vadd.f32 %v922, %v927
      %v930 = vadd.f32 %v923, %v928
      %v931 = vld [vmem:[%s97] sm:$0xff]
      %v932 = vld [vmem:[%s97 + $0x8] sm:$0xff]
      %v933 = vstv %s899
      %v934 = vmul.f32 %v931, %v933
      %v935 = vmul.f32 %v932, %v933
      %v936 = vadd.f32 %v929, %v934
      %v937 = vadd.f32 %v930, %v935
      %v938 = vld [vmem:[%s106] sm:$0xff]
      %v939 = vld [vmem:[%s106 + $0x8] sm:$0xff]
      %v940 = vstv %s900
      %v941 = vmul.f32 %v938, %v940
      %v942 = vmul.f32 %v939, %v940
      %v943 = vadd.f32 %v936, %v941
      %v944 = vadd.f32 %v937, %v942
      %v945 = vld [vmem:[%s115] sm:$0xff]
      %v946 = vld [vmem:[%s115 + $0x8] sm:$0xff]
      %v947 = vstv %s901
      %v948 = vmul.f32 %v945, %v947
      %v949 = vmul.f32 %v946, %v947
      %v950 = vadd.f32 %v943, %v948
      %v951 = vadd.f32 %v944, %v949
      %v952 = vld [vmem:[%s124] sm:$0xff]
      %v953 = vld [vmem:[%s124 + $0x8] sm:$0xff]
      %v954 = vstv %s902
      %v955 = vmul.f32 %v952, %v954
      %v956 = vmul.f32 %v953, %v954
      %v957 = vadd.f32 %v950, %v955
      %v958 = vadd.f32 %v951, %v956
      %v959 = vld [vmem:[%s133] sm:$0xff]
      %v960 = vld [vmem:[%s133 + $0x8] sm:$0xff]
      %v961 = vstv %s903
      %v962 = vmul.f32 %v959, %v961
      %v963 = vmul.f32 %v960, %v961
      %v964 = vadd.f32 %v957, %v962
      %v965 = vadd.f32 %v958, %v963
      %v966 = vmul.f32 %v910, %v907
      %v967 = vmul.f32 %v911, %v907
      %v968 = vmul.f32 %v917, %v912
      %v969 = vmul.f32 %v918, %v912
      %v970 = vadd.f32 %v966, %v968
      %v971 = vadd.f32 %v967, %v969
      %v972 = vld [vmem:[%s148] sm:$0xff]
      %v973 = vld [vmem:[%s148 + $0x8] sm:$0xff]
      %v974 = vmul.f32 %v972, %v919
      %v975 = vmul.f32 %v973, %v919
      %v976 = vadd.f32 %v970, %v974
      %v977 = vadd.f32 %v971, %v975
      %v978 = vmul.f32 %v931, %v926
      %v979 = vmul.f32 %v932, %v926
      %v980 = vadd.f32 %v976, %v978
      %v981 = vadd.f32 %v977, %v979
      %v982 = vmul.f32 %v938, %v933
      %v983 = vmul.f32 %v939, %v933
      %v984 = vadd.f32 %v980, %v982
      %v985 = vadd.f32 %v981, %v983
      %v986 = vld [vmem:[%s164] sm:$0xff]
      %v987 = vld [vmem:[%s164 + $0x8] sm:$0xff]
      %v988 = vmul.f32 %v986, %v940
      %v989 = vmul.f32 %v987, %v940
      %v990 = vadd.f32 %v984, %v988
      %v991 = vadd.f32 %v985, %v989
      %v992 = vmul.f32 %v952, %v947
      %v993 = vmul.f32 %v953, %v947
      %v994 = vadd.f32 %v990, %v992
      %v995 = vadd.f32 %v991, %v993
      %v996 = vmul.f32 %v959, %v954
      %v997 = vmul.f32 %v960, %v954
      %v998 = vadd.f32 %v994, %v996
      %v999 = vadd.f32 %v995, %v997
      %v1000 = vld [vmem:[%s180] sm:$0xff]
      %v1001 = vld [vmem:[%s180 + $0x8] sm:$0xff]
      %v1002 = vmul.f32 %v1000, %v961
      %v1003 = vmul.f32 %v1001, %v961
      %v1004 = vadd.f32 %v998, %v1002
      %v1005 = vadd.f32 %v999, %v1003
      %v1006 = vmax.f32 %v964, %v1004
      %v1007 = vmax.f32 %v965, %v1005
      %v1008 = vmul.f32 %v924, %v907
      %v1009 = vmul.f32 %v925, %v907
      %v1010 = vmul.f32 %v931, %v912
      %v1011 = vmul.f32 %v932, %v912
      %v1012 = vadd.f32 %v1008, %v1010
      %v1013 = vadd.f32 %v1009, %v1011
      %v1014 = vmul.f32 %v938, %v919
      %v1015 = vmul.f32 %v939, %v919
      %v1016 = vadd.f32 %v1012, %v1014
      %v1017 = vadd.f32 %v1013, %v1015
      %v1018 = vmul.f32 %v945, %v926
      %v1019 = vmul.f32 %v946, %v926
      %v1020 = vadd.f32 %v1016, %v1018
      %v1021 = vadd.f32 %v1017, %v1019
      %v1022 = vmul.f32 %v952, %v933
      %v1023 = vmul.f32 %v953, %v933
      %v1024 = vadd.f32 %v1020, %v1022
      %v1025 = vadd.f32 %v1021, %v1023
      %v1026 = vmul.f32 %v959, %v940
      %v1027 = vmul.f32 %v960, %v940
      %v1028 = vadd.f32 %v1024, %v1026
      %v1029 = vadd.f32 %v1025, %v1027
      %v1030 = vld [vmem:[%s212] sm:$0xff]
      %v1031 = vld [vmem:[%s212 + $0x8] sm:$0xff]
      %v1032 = vmul.f32 %v1030, %v947
      %v1033 = vmul.f32 %v1031, %v947
      %v1034 = vadd.f32 %v1028, %v1032
      %v1035 = vadd.f32 %v1029, %v1033
      %v1036 = vld [vmem:[%s220] sm:$0xff]
      %v1037 = vld [vmem:[%s220 + $0x8] sm:$0xff]
      %v1038 = vmul.f32 %v1036, %v954
      %v1039 = vmul.f32 %v1037, %v954
      %v1040 = vadd.f32 %v1034, %v1038
      %v1041 = vadd.f32 %v1035, %v1039
      %v1042 = vld [vmem:[%s228] sm:$0xff]
      %v1043 = vld [vmem:[%s228 + $0x8] sm:$0xff]
      %v1044 = vmul.f32 %v1042, %v961
      %v1045 = vmul.f32 %v1043, %v961
      %v1046 = vadd.f32 %v1040, %v1044
      %v1047 = vadd.f32 %v1041, %v1045
      %v1048 = vmax.f32 %v1006, %v1046
      %v1049 = vmax.f32 %v1007, %v1047
      %v1050 = vmul.f32 %v931, %v907
      %v1051 = vmul.f32 %v932, %v907
      %v1052 = vmul.f32 %v938, %v912
      %v1053 = vmul.f32 %v939, %v912
      %v1054 = vadd.f32 %v1050, %v1052
      %v1055 = vadd.f32 %v1051, %v1053
      %v1056 = vmul.f32 %v986, %v919
      %v1057 = vmul.f32 %v987, %v919
      %v1058 = vadd.f32 %v1054, %v1056
      %v1059 = vadd.f32 %v1055, %v1057
      %v1060 = vmul.f32 %v952, %v926
      %v1061 = vmul.f32 %v953, %v926
      %v1062 = vadd.f32 %v1058, %v1060
      %v1063 = vadd.f32 %v1059, %v1061
      %v1064 = vmul.f32 %v959, %v933
      %v1065 = vmul.f32 %v960, %v933
      %v1066 = vadd.f32 %v1062, %v1064
      %v1067 = vadd.f32 %v1063, %v1065
      %v1068 = vmul.f32 %v1000, %v940
      %v1069 = vmul.f32 %v1001, %v940
      %v1070 = vadd.f32 %v1066, %v1068
      %v1071 = vadd.f32 %v1067, %v1069
      %v1072 = vmul.f32 %v1036, %v947
      %v1073 = vmul.f32 %v1037, %v947
      %v1074 = vadd.f32 %v1070, %v1072
      %v1075 = vadd.f32 %v1071, %v1073
      %v1076 = vmul.f32 %v1042, %v954
      %v1077 = vmul.f32 %v1043, %v954
      %v1078 = vadd.f32 %v1074, %v1076
      %v1079 = vadd.f32 %v1075, %v1077
      %v1080 = vld [vmem:[%s268] sm:$0xff]
      %v1081 = vld [vmem:[%s268 + $0x8] sm:$0xff]
      %v1082 = vmul.f32 %v1080, %v961
      %v1083 = vmul.f32 %v1081, %v961
      %v1084 = vadd.f32 %v1078, %v1082
      %v1085 = vadd.f32 %v1079, %v1083
      %v1086 = vmax.f32 %v1048, %v1084
      %v1087 = vmax.f32 %v1049, %v1085
      %v1088 = vstv %s904
      %v1089 = vadd.f32 %v1086, %v1088
      %v1090 = vadd.f32 %v1087, %v1088
      %v1091 = vmax.f32 %v1089, 0.0
      %v1092 = vmax.f32 %v1090, 0.0
      %s1093 = sadd.s32 %s46, 60
      %s1094 = smul.u32 %s1093, 16
      %s1095 = scalar_lea.vmem [#allocation2], %s1094
      %1096 = vst.msk [vmem:[%s1095] sm:$0xff] %vm283, %v1091
      %1097 = vst.msk [vmem:[%s1095 + $0x8] sm:$0xff] %vm283, %v1092
      %s1098 = sld [smem:[#allocation3 + $0x2d]]
      %s1099 = sld [smem:[#allocation3 + $0x2e]]
      %s1100 = sld [smem:[#allocation3 + $0x2f]]
      %s1101 = sld [smem:[#allocation3 + $0x30]]
      %s1102 = sld [smem:[#allocation3 + $0x31]]
      %s1103 = sld [smem:[#allocation3 + $0x32]]
      %s1104 = sld [smem:[#allocation3 + $0x33]]
      %s1105 = sld [smem:[#allocation3 + $0x34]]
      %s1106 = sld [smem:[#allocation3 + $0x35]]
      %s1107 = sld [smem:[#allocation5 + $0x5]]
      %v1108 = vld [vmem:[%s63] sm:$0xff]
      %v1109 = vld [vmem:[%s63 + $0x8] sm:$0xff]
      %v1110 = vstv %s1098
      %v1111 = vmul.f32 %v1108, %v1110
      %v1112 = vmul.f32 %v1109, %v1110
      %v1113 = vld [vmem:[%s70] sm:$0xff]
      %v1114 = vld [vmem:[%s70 + $0x8] sm:$0xff]
      %v1115 = vstv %s1099
      %v1116 = vmul.f32 %v1113, %v1115
      %v1117 = vmul.f32 %v1114, %v1115
      %v1118 = vadd.f32 %v1111, %v1116
      %v1119 = vadd.f32 %v1112, %v1117
      %v1120 = vld [vmem:[%s79] sm:$0xff]
      %v1121 = vld [vmem:[%s79 + $0x8] sm:$0xff]
      %v1122 = vstv %s1100
      %v1123 = vmul.f32 %v1120, %v1122
      %v1124 = vmul.f32 %v1121, %v1122
      %v1125 = vadd.f32 %v1118, %v1123
      %v1126 = vadd.f32 %v1119, %v1124
      %v1127 = vld [vmem:[%s88] sm:$0xff]
      %v1128 = vld [vmem:[%s88 + $0x8] sm:$0xff]
      %v1129 = vstv %s1101
      %v1130 = vmul.f32 %v1127, %v1129
      %v1131 = vmul.f32 %v1128, %v1129
      %v1132 = vadd.f32 %v1125, %v1130
      %v1133 = vadd.f32 %v1126, %v1131
      %v1134 = vld [vmem:[%s97] sm:$0xff]
      %v1135 = vld [vmem:[%s97 + $0x8] sm:$0xff]
      %v1136 = vstv %s1102
      %v1137 = vmul.f32 %v1134, %v1136
      %v1138 = vmul.f32 %v1135, %v1136
      %v1139 = vadd.f32 %v1132, %v1137
      %v1140 = vadd.f32 %v1133, %v1138
      %v1141 = vld [vmem:[%s106] sm:$0xff]
      %v1142 = vld [vmem:[%s106 + $0x8] sm:$0xff]
      %v1143 = vstv %s1103
      %v1144 = vmul.f32 %v1141, %v1143
      %v1145 = vmul.f32 %v1142, %v1143
      %v1146 = vadd.f32 %v1139, %v1144
      %v1147 = vadd.f32 %v1140, %v1145
      %v1148 = vld [vmem:[%s115] sm:$0xff]
      %v1149 = vld [vmem:[%s115 + $0x8] sm:$0xff]
      %v1150 = vstv %s1104
      %v1151 = vmul.f32 %v1148, %v1150
      %v1152 = vmul.f32 %v1149, %v1150
      %v1153 = vadd.f32 %v1146, %v1151
      %v1154 = vadd.f32 %v1147, %v1152
      %v1155 = vld [vmem:[%s124] sm:$0xff]
      %v1156 = vld [vmem:[%s124 + $0x8] sm:$0xff]
      %v1157 = vstv %s1105
      %v1158 = vmul.f32 %v1155, %v1157
      %v1159 = vmul.f32 %v1156, %v1157
      %v1160 = vadd.f32 %v1153, %v1158
      %v1161 = vadd.f32 %v1154, %v1159
      %v1162 = vld [vmem:[%s133] sm:$0xff]
      %v1163 = vld [vmem:[%s133 + $0x8] sm:$0xff]
      %v1164 = vstv %s1106
      %v1165 = vmul.f32 %v1162, %v1164
      %v1166 = vmul.f32 %v1163, %v1164
      %v1167 = vadd.f32 %v1160, %v1165
      %v1168 = vadd.f32 %v1161, %v1166
      %v1169 = vmul.f32 %v1113, %v1110
      %v1170 = vmul.f32 %v1114, %v1110
      %v1171 = vmul.f32 %v1120, %v1115
      %v1172 = vmul.f32 %v1121, %v1115
      %v1173 = vadd.f32 %v1169, %v1171
      %v1174 = vadd.f32 %v1170, %v1172
      %v1175 = vld [vmem:[%s148] sm:$0xff]
      %v1176 = vld [vmem:[%s148 + $0x8] sm:$0xff]
      %v1177 = vmul.f32 %v1175, %v1122
      %v1178 = vmul.f32 %v1176, %v1122
      %v1179 = vadd.f32 %v1173, %v1177
      %v1180 = vadd.f32 %v1174, %v1178
      %v1181 = vmul.f32 %v1134, %v1129
      %v1182 = vmul.f32 %v1135, %v1129
      %v1183 = vadd.f32 %v1179, %v1181
      %v1184 = vadd.f32 %v1180, %v1182
      %v1185 = vmul.f32 %v1141, %v1136
      %v1186 = vmul.f32 %v1142, %v1136
      %v1187 = vadd.f32 %v1183, %v1185
      %v1188 = vadd.f32 %v1184, %v1186
      %v1189 = vld [vmem:[%s164] sm:$0xff]
      %v1190 = vld [vmem:[%s164 + $0x8] sm:$0xff]
      %v1191 = vmul.f32 %v1189, %v1143
      %v1192 = vmul.f32 %v1190, %v1143
      %v1193 = vadd.f32 %v1187, %v1191
      %v1194 = vadd.f32 %v1188, %v1192
      %v1195 = vmul.f32 %v1155, %v1150
      %v1196 = vmul.f32 %v1156, %v1150
      %v1197 = vadd.f32 %v1193, %v1195
      %v1198 = vadd.f32 %v1194, %v1196
      %v1199 = vmul.f32 %v1162, %v1157
      %v1200 = vmul.f32 %v1163, %v1157
      %v1201 = vadd.f32 %v1197, %v1199
      %v1202 = vadd.f32 %v1198, %v1200
      %v1203 = vld [vmem:[%s180] sm:$0xff]
      %v1204 = vld [vmem:[%s180 + $0x8] sm:$0xff]
      %v1205 = vmul.f32 %v1203, %v1164
      %v1206 = vmul.f32 %v1204, %v1164
      %v1207 = vadd.f32 %v1201, %v1205
      %v1208 = vadd.f32 %v1202, %v1206
      %v1209 = vmax.f32 %v1167, %v1207
      %v1210 = vmax.f32 %v1168, %v1208
      %v1211 = vmul.f32 %v1127, %v1110
      %v1212 = vmul.f32 %v1128, %v1110
      %v1213 = vmul.f32 %v1134, %v1115
      %v1214 = vmul.f32 %v1135, %v1115
      %v1215 = vadd.f32 %v1211, %v1213
      %v1216 = vadd.f32 %v1212, %v1214
      %v1217 = vmul.f32 %v1141, %v1122
      %v1218 = vmul.f32 %v1142, %v1122
      %v1219 = vadd.f32 %v1215, %v1217
      %v1220 = vadd.f32 %v1216, %v1218
      %v1221 = vmul.f32 %v1148, %v1129
      %v1222 = vmul.f32 %v1149, %v1129
      %v1223 = vadd.f32 %v1219, %v1221
      %v1224 = vadd.f32 %v1220, %v1222
      %v1225 = vmul.f32 %v1155, %v1136
      %v1226 = vmul.f32 %v1156, %v1136
      %v1227 = vadd.f32 %v1223, %v1225
      %v1228 = vadd.f32 %v1224, %v1226
      %v1229 = vmul.f32 %v1162, %v1143
      %v1230 = vmul.f32 %v1163, %v1143
      %v1231 = vadd.f32 %v1227, %v1229
      %v1232 = vadd.f32 %v1228, %v1230
      %v1233 = vld [vmem:[%s212] sm:$0xff]
      %v1234 = vld [vmem:[%s212 + $0x8] sm:$0xff]
      %v1235 = vmul.f32 %v1233, %v1150
      %v1236 = vmul.f32 %v1234, %v1150
      %v1237 = vadd.f32 %v1231, %v1235
      %v1238 = vadd.f32 %v1232, %v1236
      %v1239 = vld [vmem:[%s220] sm:$0xff]
      %v1240 = vld [vmem:[%s220 + $0x8] sm:$0xff]
      %v1241 = vmul.f32 %v1239, %v1157
      %v1242 = vmul.f32 %v1240, %v1157
      %v1243 = vadd.f32 %v1237, %v1241
      %v1244 = vadd.f32 %v1238, %v1242
      %v1245 = vld [vmem:[%s228] sm:$0xff]
      %v1246 = vld [vmem:[%s228 + $0x8] sm:$0xff]
      %v1247 = vmul.f32 %v1245, %v1164
      %v1248 = vmul.f32 %v1246, %v1164
      %v1249 = vadd.f32 %v1243, %v1247
      %v1250 = vadd.f32 %v1244, %v1248
      %v1251 = vmax.f32 %v1209, %v1249
      %v1252 = vmax.f32 %v1210, %v1250
      %v1253 = vmul.f32 %v1134, %v1110
      %v1254 = vmul.f32 %v1135, %v1110
      %v1255 = vmul.f32 %v1141, %v1115
      %v1256 = vmul.f32 %v1142, %v1115
      %v1257 = vadd.f32 %v1253, %v1255
      %v1258 = vadd.f32 %v1254, %v1256
      %v1259 = vmul.f32 %v1189, %v1122
      %v1260 = vmul.f32 %v1190, %v1122
      %v1261 = vadd.f32 %v1257, %v1259
      %v1262 = vadd.f32 %v1258, %v1260
      %v1263 = vmul.f32 %v1155, %v1129
      %v1264 = vmul.f32 %v1156, %v1129
      %v1265 = vadd.f32 %v1261, %v1263
      %v1266 = vadd.f32 %v1262, %v1264
      %v1267 = vmul.f32 %v1162, %v1136
      %v1268 = vmul.f32 %v1163, %v1136
      %v1269 = vadd.f32 %v1265, %v1267
      %v1270 = vadd.f32 %v1266, %v1268
      %v1271 = vmul.f32 %v1203, %v1143
      %v1272 = vmul.f32 %v1204, %v1143
      %v1273 = vadd.f32 %v1269, %v1271
      %v1274 = vadd.f32 %v1270, %v1272
      %v1275 = vmul.f32 %v1239, %v1150
      %v1276 = vmul.f32 %v1240, %v1150
      %v1277 = vadd.f32 %v1273, %v1275
      %v1278 = vadd.f32 %v1274, %v1276
      %v1279 = vmul.f32 %v1245, %v1157
      %v1280 = vmul.f32 %v1246, %v1157
      %v1281 = vadd.f32 %v1277, %v1279
      %v1282 = vadd.f32 %v1278, %v1280
      %v1283 = vld [vmem:[%s268] sm:$0xff]
      %v1284 = vld [vmem:[%s268 + $0x8] sm:$0xff]
      %v1285 = vmul.f32 %v1283, %v1164
      %v1286 = vmul.f32 %v1284, %v1164
      %v1287 = vadd.f32 %v1281, %v1285
      %v1288 = vadd.f32 %v1282, %v1286
      %v1289 = vmax.f32 %v1251, %v1287
      %v1290 = vmax.f32 %v1252, %v1288
      %v1291 = vstv %s1107
      %v1292 = vadd.f32 %v1289, %v1291
      %v1293 = vadd.f32 %v1290, %v1291
      %v1294 = vmax.f32 %v1292, 0.0
      %v1295 = vmax.f32 %v1293, 0.0
      %s1296 = sadd.s32 %s46, 75
      %s1297 = smul.u32 %s1296, 16
      %s1298 = scalar_lea.vmem [#allocation2], %s1297
      %1299 = vst.msk [vmem:[%s1298] sm:$0xff] %vm283, %v1294
      %1300 = vst.msk [vmem:[%s1298 + $0x8] sm:$0xff] %vm283, %v1295
    $region34: #{net_forward.1} parent=1 // loop_footer
      %s50 = sadd.s32 1, %s46
    $region35: #{net_forward.1} parent=1 // loop_footer_branch
      %45 = sbr.rel target = $region31
    $region36: #{net_forward.1} parent=1 // loop_exit
      _
    %v1301 = vld [vmem:[%s3] sm:$0xff]
    %v1302 = vld [vmem:[%s3 + $0x8] sm:$0xff]
    %v1303 = vld [vmem:[%s3 + $0x10] sm:$0xff]
    %v1304 = vld [vmem:[%s3 + $0x18] sm:$0xff]
    %v1305 = vld [vmem:[%s3 + $0x20] sm:$0xff]
    %v1306 = vld [vmem:[%s3 + $0x28] sm:$0xff]
    %v1307 = vld [vmem:[%s3 + $0x30] sm:$0xff]
    %v1308 = vld [vmem:[%s3 + $0x38] sm:$0xff]
    %v1309 = vld [vmem:[%s3 + $0x40] sm:$0xff]
    %v1310 = vld [vmem:[%s3 + $0x48] sm:$0xff]
    %v1311 = vld [vmem:[%s3 + $0x50] sm:$0xff]
    %v1312 = vld [vmem:[%s3 + $0x58] sm:$0xff]
    %v1313 = vld [vmem:[%s3 + $0x60] sm:$0xff]
    %v1314 = vld [vmem:[%s3 + $0x68] sm:$0xff]
    %v1315 = vld [vmem:[%s3 + $0x70] sm:$0xff]
    %v1316 = vld [vmem:[%s3 + $0x78] sm:$0xff]
    %v1317 = vld [vmem:[%s3 + $0x80] sm:$0xff]
    %v1318 = vld [vmem:[%s3 + $0x88] sm:$0xff]
    %v1319 = vld [vmem:[%s3 + $0x90] sm:$0xff]
    %v1320 = vld [vmem:[%s3 + $0x98] sm:$0xff]
    %v1321 = vld [vmem:[%s3 + $0xa0] sm:$0xff]
    %v1322 = vld [vmem:[%s3 + $0xa8] sm:$0xff]
    %v1323 = vld [vmem:[%s3 + $0xb0] sm:$0xff]
    %v1324 = vld [vmem:[%s3 + $0xb8] sm:$0xff]
    %v1325 = vld [vmem:[#allocation2] sm:$0xff]
    %v1326 = vld [vmem:[#allocation2 + $0x8] sm:$0xff]
    %v1327 = vld [vmem:[#allocation2 + $0x10] sm:$0xff]
    %v1328 = vld [vmem:[#allocation2 + $0x18] sm:$0xff]
    %v1329 = vld [vmem:[#allocation2 + $0x20] sm:$0xff]
    %v1330 = vld [vmem:[#allocation2 + $0x28] sm:$0xff]
    %v1331 = vld [vmem:[#allocation2 + $0x30] sm:$0xff]
    %v1332 = vld [vmem:[#allocation2 + $0x38] sm:$0xff]
    %v1333 = vld [vmem:[#allocation2 + $0x40] sm:$0xff]
    %v1334 = vld [vmem:[#allocation2 + $0x48] sm:$0xff]
    %v1335 = vld [vmem:[#allocation2 + $0x50] sm:$0xff]
    %v1336 = vld [vmem:[#allocation2 + $0x58] sm:$0xff]
    %v1337 = vld [vmem:[#allocation2 + $0x60] sm:$0xff]
    %v1338 = vld [vmem:[#allocation2 + $0x68] sm:$0xff]
    %v1339 = vld [vmem:[#allocation2 + $0x70] sm:$0xff]
    %v1340 = vld [vmem:[#allocation2 + $0x78] sm:$0xff]
    %v1341 = vld [vmem:[#allocation2 + $0x80] sm:$0xff]
    %v1342 = vld [vmem:[#allocation2 + $0x88] sm:$0xff]
    %v1343 = vld [vmem:[#allocation2 + $0x90] sm:$0xff]
    %v1344 = vld [vmem:[#allocation2 + $0x98] sm:$0xff]
    %v1345 = vld [vmem:[#allocation2 + $0xa0] sm:$0xff]
    %v1346 = vld [vmem:[#allocation2 + $0xa8] sm:$0xff]
    %v1347 = vld [vmem:[#allocation2 + $0xb0] sm:$0xff]
    %v1348 = vld [vmem:[#allocation2 + $0xb8] sm:$0xff]
    %v1349 = vld [vmem:[#allocation2 + $0xc0] sm:$0xff]
    %v1350 = vld [vmem:[#allocation2 + $0xc8] sm:$0xff]
    %v1351 = vld [vmem:[#allocation2 + $0xd0] sm:$0xff]
    %v1352 = vld [vmem:[#allocation2 + $0xd8] sm:$0xff]
    %v1353 = vld [vmem:[#allocation2 + $0xe0] sm:$0xff]
    %v1354 = vld [vmem:[#allocation2 + $0xe8] sm:$0xff]
    %v1355 = vld [vmem:[#allocation2 + $0xf0] sm:$0xff]
    %v1356 = vld [vmem:[#allocation2 + $0xf8] sm:$0xff]
    %v1357 = vld [vmem:[#allocation2 + $0x100] sm:$0xff]
    %v1358 = vld [vmem:[#allocation2 + $0x108] sm:$0xff]
    %v1359 = vld [vmem:[#allocation2 + $0x110] sm:$0xff]
    %v1360 = vld [vmem:[#allocation2 + $0x118] sm:$0xff]
    %v1361 = vld [vmem:[#allocation2 + $0x120] sm:$0xff]
    %v1362 = vld [vmem:[#allocation2 + $0x128] sm:$0xff]
    %v1363 = vld [vmem:[#allocation2 + $0x130] sm:$0xff]
    %v1364 = vld [vmem:[#allocation2 + $0x138] sm:$0xff]
    %v1365 = vld [vmem:[#allocation2 + $0x140] sm:$0xff]
    %v1366 = vld [vmem:[#allocation2 + $0x148] sm:$0xff]
    %v1367 = vld [vmem:[#allocation2 + $0x150] sm:$0xff]
    %v1368 = vld [vmem:[#allocation2 + $0x158] sm:$0xff]
    %v1369 = vld [vmem:[#allocation2 + $0x160] sm:$0xff]
    %v1370 = vld [vmem:[#allocation2 + $0x168] sm:$0xff]
    %v1371 = vld [vmem:[#allocation2 + $0x170] sm:$0xff]
    %v1372 = vld [vmem:[#allocation2 + $0x178] sm:$0xff]
    %v1373 = vld [vmem:[#allocation2 + $0x180] sm:$0xff]
    %v1374 = vld [vmem:[#allocation2 + $0x188] sm:$0xff]
    %v1375 = vld [vmem:[#allocation2 + $0x190] sm:$0xff]
    %v1376 = vld [vmem:[#allocation2 + $0x198] sm:$0xff]
    %v1377 = vld [vmem:[#allocation2 + $0x1a0] sm:$0xff]
    %v1378 = vld [vmem:[#allocation2 + $0x1a8] sm:$0xff]
    %v1379 = vld [vmem:[#allocation2 + $0x1b0] sm:$0xff]
    %v1380 = vld [vmem:[#allocation2 + $0x1b8] sm:$0xff]
    %v1381 = vld [vmem:[#allocation2 + $0x1c0] sm:$0xff]
    %v1382 = vld [vmem:[#allocation2 + $0x1c8] sm:$0xff]
    %v1383 = vld [vmem:[#allocation2 + $0x1d0] sm:$0xff]
    %v1384 = vld [vmem:[#allocation2 + $0x1d8] sm:$0xff]
    %v1385 = vld [vmem:[#allocation2 + $0x1e0] sm:$0xff]
    %v1386 = vld [vmem:[#allocation2 + $0x1e8] sm:$0xff]
    %v1387 = vld [vmem:[#allocation2 + $0x1f0] sm:$0xff]
    %v1388 = vld [vmem:[#allocation2 + $0x1f8] sm:$0xff]
    %v1389 = vld [vmem:[#allocation2 + $0x200] sm:$0xff]
    %v1390 = vld [vmem:[#allocation2 + $0x208] sm:$0xff]
    %v1391 = vld [vmem:[#allocation2 + $0x210] sm:$0xff]
    %v1392 = vld [vmem:[#allocation2 + $0x218] sm:$0xff]
    %v1393 = vld [vmem:[#allocation2 + $0x220] sm:$0xff]
    %v1394 = vld [vmem:[#allocation2 + $0x228] sm:$0xff]
    %v1395 = vld [vmem:[#allocation2 + $0x230] sm:$0xff]
    %v1396 = vld [vmem:[#allocation2 + $0x238] sm:$0xff]
    %v1397 = vld [vmem:[#allocation2 + $0x240] sm:$0xff]
    %v1398 = vld [vmem:[#allocation2 + $0x248] sm:$0xff]
    %v1399 = vld [vmem:[#allocation2 + $0x250] sm:$0xff]
    %v1400 = vld [vmem:[#allocation2 + $0x258] sm:$0xff]
    %v1401 = vld [vmem:[#allocation2 + $0x260] sm:$0xff]
    %v1402 = vld [vmem:[#allocation2 + $0x268] sm:$0xff]
    %v1403 = vld [vmem:[#allocation2 + $0x270] sm:$0xff]
    %v1404 = vld [vmem:[#allocation2 + $0x278] sm:$0xff]
    %v1405 = vld [vmem:[#allocation2 + $0x280] sm:$0xff]
    %v1406 = vld [vmem:[#allocation2 + $0x288] sm:$0xff]
    %v1407 = vld [vmem:[#allocation2 + $0x290] sm:$0xff]
    %v1408 = vld [vmem:[#allocation2 + $0x298] sm:$0xff]
    %v1409 = vld [vmem:[#allocation2 + $0x2a0] sm:$0xff]
    %v1410 = vld [vmem:[#allocation2 + $0x2a8] sm:$0xff]
    %v1411 = vld [vmem:[#allocation2 + $0x2b0] sm:$0xff]
    %v1412 = vld [vmem:[#allocation2 + $0x2b8] sm:$0xff]
    %v1413 = vld [vmem:[#allocation2 + $0x2c0] sm:$0xff]
    %v1414 = vld [vmem:[#allocation2 + $0x2c8] sm:$0xff]
    %v1415 = vld [vmem:[#allocation2 + $0x2d0] sm:$0xff]
    %v1416 = vld [vmem:[#allocation2 + $0x2d8] sm:$0xff]
    %v1417 = vld [vmem:[#allocation2 + $0x2e0] sm:$0xff]
    %v1418 = vld [vmem:[#allocation2 + $0x2e8] sm:$0xff]
    %v1419 = vld [vmem:[#allocation2 + $0x2f0] sm:$0xff]
    %v1420 = vld [vmem:[#allocation2 + $0x2f8] sm:$0xff]
    %v1421 = vld [vmem:[#allocation2 + $0x300] sm:$0xff]
    %v1422 = vld [vmem:[#allocation2 + $0x308] sm:$0xff]
    %v1423 = vld [vmem:[#allocation2 + $0x310] sm:$0xff]
    %v1424 = vld [vmem:[#allocation2 + $0x318] sm:$0xff]
    %v1425 = vld [vmem:[#allocation2 + $0x320] sm:$0xff]
    %v1426 = vld [vmem:[#allocation2 + $0x328] sm:$0xff]
    %v1427 = vld [vmem:[#allocation2 + $0x330] sm:$0xff]
    %v1428 = vld [vmem:[#allocation2 + $0x338] sm:$0xff]
    %v1429 = vld [vmem:[#allocation2 + $0x340] sm:$0xff]
    %v1430 = vld [vmem:[#allocation2 + $0x348] sm:$0xff]
    %v1431 = vld [vmem:[#allocation2 + $0x350] sm:$0xff]
    %v1432 = vld [vmem:[#allocation2 + $0x358] sm:$0xff]
    %v1433 = vld [vmem:[#allocation2 + $0x360] sm:$0xff]
    %v1434 = vld [vmem:[#allocation2 + $0x368] sm:$0xff]
    %v1435 = vld [vmem:[#allocation2 + $0x370] sm:$0xff]
    %v1436 = vld [vmem:[#allocation2 + $0x378] sm:$0xff]
    %v1437 = vld [vmem:[#allocation2 + $0x380] sm:$0xff]
    %v1438 = vld [vmem:[#allocation2 + $0x388] sm:$0xff]
    %v1439 = vld [vmem:[#allocation2 + $0x390] sm:$0xff]
    %v1440 = vld [vmem:[#allocation2 + $0x398] sm:$0xff]
    %v1441 = vld [vmem:[#allocation2 + $0x3a0] sm:$0xff]
    %v1442 = vld [vmem:[#allocation2 + $0x3a8] sm:$0xff]
    %v1443 = vld [vmem:[#allocation2 + $0x3b0] sm:$0xff]
    %v1444 = vld [vmem:[#allocation2 + $0x3b8] sm:$0xff]
    %v1445 = vld [vmem:[#allocation2 + $0x3c0] sm:$0xff]
    %v1446 = vld [vmem:[#allocation2 + $0x3c8] sm:$0xff]
    %v1447 = vld [vmem:[#allocation2 + $0x3d0] sm:$0xff]
    %v1448 = vld [vmem:[#allocation2 + $0x3d8] sm:$0xff]
    %v1449 = vld [vmem:[#allocation2 + $0x3e0] sm:$0xff]
    %v1450 = vld [vmem:[#allocation2 + $0x3e8] sm:$0xff]
    %v1451 = vld [vmem:[#allocation2 + $0x3f0] sm:$0xff]
    %v1452 = vld [vmem:[#allocation2 + $0x3f8] sm:$0xff]
    %v1453 = vld [vmem:[#allocation2 + $0x400] sm:$0xff]
    %v1454 = vld [vmem:[#allocation2 + $0x408] sm:$0xff]
    %v1455 = vld [vmem:[#allocation2 + $0x410] sm:$0xff]
    %v1456 = vld [vmem:[#allocation2 + $0x418] sm:$0xff]
    %v1457 = vld [vmem:[#allocation2 + $0x420] sm:$0xff]
    %v1458 = vld [vmem:[#allocation2 + $0x428] sm:$0xff]
    %v1459 = vld [vmem:[#allocation2 + $0x430] sm:$0xff]
    %v1460 = vld [vmem:[#allocation2 + $0x438] sm:$0xff]
    %v1461 = vld [vmem:[#allocation2 + $0x440] sm:$0xff]
    %v1462 = vld [vmem:[#allocation2 + $0x448] sm:$0xff]
    %v1463 = vld [vmem:[#allocation2 + $0x450] sm:$0xff]
    %v1464 = vld [vmem:[#allocation2 + $0x458] sm:$0xff]
    %v1465 = vld [vmem:[#allocation2 + $0x460] sm:$0xff]
    %v1466 = vld [vmem:[#allocation2 + $0x468] sm:$0xff]
    %v1467 = vld [vmem:[#allocation2 + $0x470] sm:$0xff]
    %v1468 = vld [vmem:[#allocation2 + $0x478] sm:$0xff]
    %v1469 = vld [vmem:[#allocation2 + $0x480] sm:$0xff]
    %v1470 = vld [vmem:[#allocation2 + $0x488] sm:$0xff]
    %v1471 = vld [vmem:[#allocation2 + $0x490] sm:$0xff]
    %v1472 = vld [vmem:[#allocation2 + $0x498] sm:$0xff]
    %v1473 = vld [vmem:[#allocation2 + $0x4a0] sm:$0xff]
    %v1474 = vld [vmem:[#allocation2 + $0x4a8] sm:$0xff]
    %v1475 = vld [vmem:[#allocation2 + $0x4b0] sm:$0xff]
    %v1476 = vld [vmem:[#allocation2 + $0x4b8] sm:$0xff]
    %v1477 = vld [vmem:[#allocation2 + $0x4c0] sm:$0xff]
    %v1478 = vld [vmem:[#allocation2 + $0x4c8] sm:$0xff]
    %v1479 = vld [vmem:[#allocation2 + $0x4d0] sm:$0xff]
    %v1480 = vld [vmem:[#allocation2 + $0x4d8] sm:$0xff]
    %v1481 = vld [vmem:[#allocation2 + $0x4e0] sm:$0xff]
    %v1482 = vld [vmem:[#allocation2 + $0x4e8] sm:$0xff]
    %v1483 = vld [vmem:[#allocation2 + $0x4f0] sm:$0xff]
    %v1484 = vld [vmem:[#allocation2 + $0x4f8] sm:$0xff]
    %v1485 = vld [vmem:[#allocation2 + $0x500] sm:$0xff]
    %v1486 = vld [vmem:[#allocation2 + $0x508] sm:$0xff]
    %v1487 = vld [vmem:[#allocation2 + $0x510] sm:$0xff]
    %v1488 = vld [vmem:[#allocation2 + $0x518] sm:$0xff]
    %v1489 = vld [vmem:[#allocation2 + $0x520] sm:$0xff]
    %v1490 = vld [vmem:[#allocation2 + $0x528] sm:$0xff]
    %v1491 = vld [vmem:[#allocation2 + $0x530] sm:$0xff]
    %v1492 = vld [vmem:[#allocation2 + $0x538] sm:$0xff]
    %v1493 = vld [vmem:[#allocation2 + $0x540] sm:$0xff]
    %v1494 = vld [vmem:[#allocation2 + $0x548] sm:$0xff]
    %v1495 = vld [vmem:[#allocation2 + $0x550] sm:$0xff]
    %v1496 = vld [vmem:[#allocation2 + $0x558] sm:$0xff]
    %v1497 = vld [vmem:[#allocation2 + $0x560] sm:$0xff]
    %v1498 = vld [vmem:[#allocation2 + $0x568] sm:$0xff]
    %v1499 = vld [vmem:[#allocation2 + $0x570] sm:$0xff]
    %v1500 = vld [vmem:[#allocation2 + $0x578] sm:$0xff]
    %v1501 = vld [vmem:[#allocation2 + $0x580] sm:$0xff]
    %v1502 = vld [vmem:[#allocation2 + $0x588] sm:$0xff]
    %v1503 = vld [vmem:[#allocation2 + $0x590] sm:$0xff]
    %v1504 = vld [vmem:[#allocation2 + $0x598] sm:$0xff]
    %v1505 = vld [vmem:[%s4] sm:$0xff]
    %v1506 = vld [vmem:[%s4 + $0x8] sm:$0xff]
    %1508 = vset.pattern.permute.xlu0 0
    %1509 = vperm.xlu0 %1508, %v1505
    %v1510 = vpop.permute.xlu0 %1509
    %1513 = vset.pattern.permute.xlu0 0
    %1514 = vperm.xlu0 %1513, %v1506
    %v1515 = vpop.permute.xlu0 %1514
    %vm1517 = vcmask 261120
    %v1519 = vsel %vm1517, %v1312, 0
    %v1522 = vsel %vm1517, %v1324, 0
    %1524 = vmatprep.subr.mxu0 0.0
    %1525 = vmatpush1.msra.mxu0 %v1325
    %1526 = vmatprep.subr.mxu0 0.0
    %1527 = vmatpush1.msra.mxu0 %v1326
    %1528 = vmatprep.subr.mxu0 0.0
    %1529 = vmatpush1.msra.mxu0 %v1327
    %1530 = vmatprep.subr.mxu0 0.0
    %1531 = vmatpush1.msra.mxu0 %v1328
    %1532 = vmatprep.subr.mxu0 0.0
    %1533 = vmatpush1.msra.mxu0 %v1329
    %1534 = vmatprep.subr.mxu0 0.0
    %1535 = vmatpush1.msra.mxu0 %v1330
    %1536 = vmatprep.subr.mxu0 0.0
    %1537 = vmatpush1.msra.mxu0 %v1331
    %1538 = vmatprep.subr.mxu0 0.0
    %1539 = vmatpush1.msra.mxu0 %v1332
    %1540 = vmatprep.subr.mxu0 0.0
    %1541 = vmatpush1.msra.mxu0 %v1333
    %1542 = vmatprep.subr.mxu0 0.0
    %1543 = vmatpush1.msra.mxu0 %v1334
    %1544 = vmatprep.subr.mxu0 0.0
    %1545 = vmatpush1.msra.mxu0 %v1335
    %1546 = vmatprep.subr.mxu0 0.0
    %1547 = vmatpush1.msra.mxu0 %v1336
    %1548 = vmatprep.subr.mxu0 0.0
    %1549 = vmatpush1.msra.mxu0 %v1337
    %1550 = vmatprep.subr.mxu0 0.0
    %1551 = vmatpush1.msra.mxu0 %v1338
    %1552 = vmatprep.subr.mxu0 0.0
    %1553 = vmatpush1.msra.mxu0 %v1339
    %1554 = vmatprep.subr.mxu0 0.0
    %1555 = vmatpush1.msra.mxu0 %v1340
    %1556 = vmatprep.subr.mxu0 0.0
    %1557 = vmatpush1.msra.mxu0 %v1341
    %1558 = vmatprep.subr.mxu0 0.0
    %1559 = vmatpush1.msra.mxu0 %v1342
    %1560 = vmatprep.subr.mxu0 0.0
    %1561 = vmatpush1.msra.mxu0 %v1343
    %1562 = vmatprep.subr.mxu0 0.0
    %1563 = vmatpush1.msra.mxu0 %v1344
    %1564 = vmatprep.subr.mxu0 0.0
    %1565 = vmatpush1.msra.mxu0 %v1345
    %1566 = vmatprep.subr.mxu0 0.0
    %1567 = vmatpush1.msra.mxu0 %v1346
    %1568 = vmatprep.subr.mxu0 0.0
    %1569 = vmatpush1.msra.mxu0 %v1347
    %1570 = vmatprep.subr.mxu0 0.0
    %1571 = vmatpush1.msra.mxu0 %v1348
    %1572 = vmatprep.subr.mxu0 0.0
    %1573 = vmatpush1.msra.mxu0 %v1349
    %1574 = vmatprep.subr.mxu0 0.0
    %1575 = vmatpush1.msra.mxu0 %v1350
    %1576 = vmatprep.subr.mxu0 0.0
    %1577 = vmatpush1.msra.mxu0 %v1351
    %1578 = vmatprep.subr.mxu0 0.0
    %1579 = vmatpush1.msra.mxu0 %v1352
    %1580 = vmatprep.subr.mxu0 0.0
    %1581 = vmatpush1.msra.mxu0 %v1353
    %1582 = vmatprep.subr.mxu0 0.0
    %1583 = vmatpush1.msra.mxu0 %v1354
    %1584 = vmatprep.subr.mxu0 0.0
    %1585 = vmatpush1.msra.mxu0 %v1355
    %1586 = vmatprep.subr.mxu0 0.0
    %1587 = vmatpush1.msra.mxu0 %v1356
    %1588 = vmatprep.mubr.f32.mxu0 %v1302
    %1589 = vmatmul.mubr.f32.gmra.mrb[0].mxu0 %v1301
    %v1590 = vpop.f32.mrb[0].mxu0
    %v1591 = vadd.f32 %v1510, %v1590
    %v1592 = vpop.f32.mrb[0].mxu0
    %1593 = vmatprep.mubr.f32.mxu0 %v1314
    %1594 = vmatmul.mubr.f32.gmra.mrb[0].mxu0 %v1313
    %v1595 = vpop.f32.mrb[0].mxu0
    %v1596 = vadd.f32 %v1515, %v1595
    %v1597 = vpop.f32.mrb[0].mxu0
    %1598 = vdwg.mxu0
    %1599 = vmatprep.subr.mxu0 0.0
    %1600 = vmatpush1.msra.mxu0 %v1357
    %1601 = vmatprep.subr.mxu0 0.0
    %1602 = vmatpush1.msra.mxu0 %v1358
    %1603 = vmatprep.subr.mxu0 0.0
    %1604 = vmatpush1.msra.mxu0 %v1359
    %1605 = vmatprep.subr.mxu0 0.0
    %1606 = vmatpush1.msra.mxu0 %v1360
    %1607 = vmatprep.subr.mxu0 0.0
    %1608 = vmatpush1.msra.mxu0 %v1361
    %1609 = vmatprep.subr.mxu0 0.0
    %1610 = vmatpush1.msra.mxu0 %v1362
    %1611 = vmatprep.subr.mxu0 0.0
    %1612 = vmatpush1.msra.mxu0 %v1363
    %1613 = vmatprep.subr.mxu0 0.0
    %1614 = vmatpush1.msra.mxu0 %v1364
    %1615 = vmatprep.subr.mxu0 0.0
    %1616 = vmatpush1.msra.mxu0 %v1365
    %1617 = vmatprep.subr.mxu0 0.0
    %1618 = vmatpush1.msra.mxu0 %v1366
    %1619 = vmatprep.subr.mxu0 0.0
    %1620 = vmatpush1.msra.mxu0 %v1367
    %1621 = vmatprep.subr.mxu0 0.0
    %1622 = vmatpush1.msra.mxu0 %v1368
    %1623 = vmatprep.subr.mxu0 0.0
    %1624 = vmatpush1.msra.mxu0 %v1369
    %1625 = vmatprep.subr.mxu0 0.0
    %1626 = vmatpush1.msra.mxu0 %v1370
    %1627 = vmatprep.subr.mxu0 0.0
    %1628 = vmatpush1.msra.mxu0 %v1371
    %1629 = vmatprep.subr.mxu0 0.0
    %1630 = vmatpush1.msra.mxu0 %v1372
    %1631 = vmatprep.subr.mxu0 0.0
    %1632 = vmatpush1.msra.mxu0 %v1373
    %1633 = vmatprep.subr.mxu0 0.0
    %1634 = vmatpush1.msra.mxu0 %v1374
    %1635 = vmatprep.subr.mxu0 0.0
    %1636 = vmatpush1.msra.mxu0 %v1375
    %1637 = vmatprep.subr.mxu0 0.0
    %1638 = vmatpush1.msra.mxu0 %v1376
    %1639 = vmatprep.subr.mxu0 0.0
    %1640 = vmatpush1.msra.mxu0 %v1377
    %1641 = vmatprep.subr.mxu0 0.0
    %1642 = vmatpush1.msra.mxu0 %v1378
    %1643 = vmatprep.subr.mxu0 0.0
    %1644 = vmatpush1.msra.mxu0 %v1379
    %1645 = vmatprep.subr.mxu0 0.0
    %1646 = vmatpush1.msra.mxu0 %v1380
    %1647 = vmatprep.subr.mxu0 0.0
    %1648 = vmatpush1.msra.mxu0 %v1381
    %1649 = vmatprep.subr.mxu0 0.0
    %1650 = vmatpush1.msra.mxu0 %v1382
    %1651 = vmatprep.subr.mxu0 0.0
    %1652 = vmatpush1.msra.mxu0 %v1383
    %1653 = vmatprep.subr.mxu0 0.0
    %1654 = vmatpush1.msra.mxu0 %v1384
    %1655 = vmatprep.subr.mxu0 0.0
    %1656 = vmatpush1.msra.mxu0 %v1385
    %1657 = vmatprep.subr.mxu0 0.0
    %1658 = vmatpush1.msra.mxu0 %v1386
    %1659 = vmatprep.subr.mxu0 0.0
    %1660 = vmatpush1.msra.mxu0 %v1387
    %1661 = vmatprep.subr.mxu0 0.0
    %1662 = vmatpush1.msra.mxu0 %v1388
    %1663 = vmatprep.mubr.f32.mxu0 %v1304
    %1664 = vmatmul.mubr.f32.gmra.mrb[0].mxu0 %v1303
    %v1665 = vpop.f32.mrb[0].mxu0
    %v1666 = vadd.f32 %v1591, %v1665
    %v1667 = vpop.f32.mrb[0].mxu0
    %1668 = vmatprep.mubr.f32.mxu0 %v1316
    %1669 = vmatmul.mubr.f32.gmra.mrb[0].mxu0 %v1315
    %v1670 = vpop.f32.mrb[0].mxu0
    %v1671 = vadd.f32 %v1596, %v1670
    %v1672 = vpop.f32.mrb[0].mxu0
    %1673 = vdwg.mxu0
    %1674 = vmatprep.subr.mxu0 0.0
    %1675 = vmatpush1.msra.mxu0 %v1389
    %1676 = vmatprep.subr.mxu0 0.0
    %1677 = vmatpush1.msra.mxu0 %v1390
    %1678 = vmatprep.subr.mxu0 0.0
    %1679 = vmatpush1.msra.mxu0 %v1391
    %1680 = vmatprep.subr.mxu0 0.0
    %1681 = vmatpush1.msra.mxu0 %v1392
    %1682 = vmatprep.subr.mxu0 0.0
    %1683 = vmatpush1.msra.mxu0 %v1393
    %1684 = vmatprep.subr.mxu0 0.0
    %1685 = vmatpush1.msra.mxu0 %v1394
    %1686 = vmatprep.subr.mxu0 0.0
    %1687 = vmatpush1.msra.mxu0 %v1395
    %1688 = vmatprep.subr.mxu0 0.0
    %1689 = vmatpush1.msra.mxu0 %v1396
    %1690 = vmatprep.subr.mxu0 0.0
    %1691 = vmatpush1.msra.mxu0 %v1397
    %1692 = vmatprep.subr.mxu0 0.0
    %1693 = vmatpush1.msra.mxu0 %v1398
    %1694 = vmatprep.subr.mxu0 0.0
    %1695 = vmatpush1.msra.mxu0 %v1399
    %1696 = vmatprep.subr.mxu0 0.0
    %1697 = vmatpush1.msra.mxu0 %v1400
    %1698 = vmatprep.subr.mxu0 0.0
    %1699 = vmatpush1.msra.mxu0 %v1401
    %1700 = vmatprep.subr.mxu0 0.0
    %1701 = vmatpush1.msra.mxu0 %v1402
    %1702 = vmatprep.subr.mxu0 0.0
    %1703 = vmatpush1.msra.mxu0 %v1403
    %1704 = vmatprep.subr.mxu0 0.0
    %1705 = vmatpush1.msra.mxu0 %v1404
    %1706 = vmatprep.subr.mxu0 0.0
    %1707 = vmatpush1.msra.mxu0 %v1405
    %1708 = vmatprep.subr.mxu0 0.0
    %1709 = vmatpush1.msra.mxu0 %v1406
    %1710 = vmatprep.subr.mxu0 0.0
    %1711 = vmatpush1.msra.mxu0 %v1407
    %1712 = vmatprep.subr.mxu0 0.0
    %1713 = vmatpush1.msra.mxu0 %v1408
    %1714 = vmatprep.subr.mxu0 0.0
    %1715 = vmatpush1.msra.mxu0 %v1409
    %1716 = vmatprep.subr.mxu0 0.0
    %1717 = vmatpush1.msra.mxu0 %v1410
    %1718 = vmatprep.subr.mxu0 0.0
    %1719 = vmatpush1.msra.mxu0 %v1411
    %1720 = vmatprep.subr.mxu0 0.0
    %1721 = vmatpush1.msra.mxu0 %v1412
    %1722 = vmatprep.subr.mxu0 0.0
    %1723 = vmatpush1.msra.mxu0 %v1413
    %1724 = vmatprep.subr.mxu0 0.0
    %1725 = vmatpush1.msra.mxu0 %v1414
    %1726 = vmatprep.subr.mxu0 0.0
    %1727 = vmatpush1.msra.mxu0 %v1415
    %1728 = vmatprep.subr.mxu0 0.0
    %1729 = vmatpush1.msra.mxu0 %v1416
    %1730 = vmatprep.subr.mxu0 0.0
    %1731 = vmatpush1.msra.mxu0 %v1417
    %1732 = vmatprep.subr.mxu0 0.0
    %1733 = vmatpush1.msra.mxu0 %v1418
    %1734 = vmatprep.subr.mxu0 0.0
    %1735 = vmatpush1.msra.mxu0 %v1419
    %1736 = vmatprep.subr.mxu0 0.0
    %1737 = vmatpush1.msra.mxu0 %v1420
    %1738 = vmatprep.mubr.f32.mxu0 %v1306
    %1739 = vmatmul.mubr.f32.gmra.mrb[0].mxu0 %v1305
    %v1740 = vpop.f32.mrb[0].mxu0
    %v1741 = vadd.f32 %v1666, %v1740
    %v1742 = vpop.f32.mrb[0].mxu0
    %1743 = vmatprep.mubr.f32.mxu0 %v1318
    %1744 = vmatmul.mubr.f32.gmra.mrb[0].mxu0 %v1317
    %v1745 = vpop.f32.mrb[0].mxu0
    %v1746 = vadd.f32 %v1671, %v1745
    %v1747 = vpop.f32.mrb[0].mxu0
    %1748 = vdwg.mxu0
    %1749 = vmatprep.subr.mxu0 0.0
    %1750 = vmatpush1.msra.mxu0 %v1421
    %1751 = vmatprep.subr.mxu0 0.0
    %1752 = vmatpush1.msra.mxu0 %v1422
    %1753 = vmatprep.subr.mxu0 0.0
    %1754 = vmatpush1.msra.mxu0 %v1423
    %1755 = vmatprep.subr.mxu0 0.0
    %1756 = vmatpush1.msra.mxu0 %v1424
    %1757 = vmatprep.subr.mxu0 0.0
    %1758 = vmatpush1.msra.mxu0 %v1425
    %1759 = vmatprep.subr.mxu0 0.0
    %1760 = vmatpush1.msra.mxu0 %v1426
    %1761 = vmatprep.subr.mxu0 0.0
    %1762 = vmatpush1.msra.mxu0 %v1427
    %1763 = vmatprep.subr.mxu0 0.0
    %1764 = vmatpush1.msra.mxu0 %v1428
    %1765 = vmatprep.subr.mxu0 0.0
    %1766 = vmatpush1.msra.mxu0 %v1429
    %1767 = vmatprep.subr.mxu0 0.0
    %1768 = vmatpush1.msra.mxu0 %v1430
    %1769 = vmatprep.subr.mxu0 0.0
    %1770 = vmatpush1.msra.mxu0 %v1431
    %1771 = vmatprep.subr.mxu0 0.0
    %1772 = vmatpush1.msra.mxu0 %v1432
    %1773 = vmatprep.subr.mxu0 0.0
    %1774 = vmatpush1.msra.mxu0 %v1433
    %1775 = vmatprep.subr.mxu0 0.0
    %1776 = vmatpush1.msra.mxu0 %v1434
    %1777 = vmatprep.subr.mxu0 0.0
    %1778 = vmatpush1.msra.mxu0 %v1435
    %1779 = vmatprep.subr.mxu0 0.0
    %1780 = vmatpush1.msra.mxu0 %v1436
    %1781 = vmatprep.subr.mxu0 0.0
    %1782 = vmatpush1.msra.mxu0 %v1437
    %1783 = vmatprep.subr.mxu0 0.0
    %1784 = vmatpush1.msra.mxu0 %v1438
    %1785 = vmatprep.subr.mxu0 0.0
    %1786 = vmatpush1.msra.mxu0 %v1439
    %1787 = vmatprep.subr.mxu0 0.0
    %1788 = vmatpush1.msra.mxu0 %v1440
    %1789 = vmatprep.subr.mxu0 0.0
    %1790 = vmatpush1.msra.mxu0 %v1441
    %1791 = vmatprep.subr.mxu0 0.0
    %1792 = vmatpush1.msra.mxu0 %v1442
    %1793 = vmatprep.subr.mxu0 0.0
    %1794 = vmatpush1.msra.mxu0 %v1443
    %1795 = vmatprep.subr.mxu0 0.0
    %1796 = vmatpush1.msra.mxu0 %v1444
    %1797 = vmatprep.subr.mxu0 0.0
    %1798 = vmatpush1.msra.mxu0 %v1445
    %1799 = vmatprep.subr.mxu0 0.0
    %1800 = vmatpush1.msra.mxu0 %v1446
    %1801 = vmatprep.subr.mxu0 0.0
    %1802 = vmatpush1.msra.mxu0 %v1447
    %1803 = vmatprep.subr.mxu0 0.0
    %1804 = vmatpush1.msra.mxu0 %v1448
    %1805 = vmatprep.subr.mxu0 0.0
    %1806 = vmatpush1.msra.mxu0 %v1449
    %1807 = vmatprep.subr.mxu0 0.0
    %1808 = vmatpush1.msra.mxu0 %v1450
    %1809 = vmatprep.subr.mxu0 0.0
    %1810 = vmatpush1.msra.mxu0 %v1451
    %1811 = vmatprep.subr.mxu0 0.0
    %1812 = vmatpush1.msra.mxu0 %v1452
    %1813 = vmatprep.mubr.f32.mxu0 %v1308
    %1814 = vmatmul.mubr.f32.gmra.mrb[0].mxu0 %v1307
    %v1815 = vpop.f32.mrb[0].mxu0
    %v1816 = vadd.f32 %v1741, %v1815
    %v1817 = vpop.f32.mrb[0].mxu0
    %1818 = vmatprep.mubr.f32.mxu0 %v1320
    %1819 = vmatmul.mubr.f32.gmra.mrb[0].mxu0 %v1319
    %v1820 = vpop.f32.mrb[0].mxu0
    %v1821 = vadd.f32 %v1746, %v1820
    %v1822 = vpop.f32.mrb[0].mxu0
    %1823 = vdwg.mxu0
    %1824 = vmatprep.subr.mxu0 0.0
    %1825 = vmatpush1.msra.mxu0 %v1453
    %1826 = vmatprep.subr.mxu0 0.0
    %1827 = vmatpush1.msra.mxu0 %v1454
    %1828 = vmatprep.subr.mxu0 0.0
    %1829 = vmatpush1.msra.mxu0 %v1455
    %1830 = vmatprep.subr.mxu0 0.0
    %1831 = vmatpush1.msra.mxu0 %v1456
    %1832 = vmatprep.subr.mxu0 0.0
    %1833 = vmatpush1.msra.mxu0 %v1457
    %1834 = vmatprep.subr.mxu0 0.0
    %1835 = vmatpush1.msra.mxu0 %v1458
    %1836 = vmatprep.subr.mxu0 0.0
    %1837 = vmatpush1.msra.mxu0 %v1459
    %1838 = vmatprep.subr.mxu0 0.0
    %1839 = vmatpush1.msra.mxu0 %v1460
    %1840 = vmatprep.subr.mxu0 0.0
    %1841 = vmatpush1.msra.mxu0 %v1461
    %1842 = vmatprep.subr.mxu0 0.0
    %1843 = vmatpush1.msra.mxu0 %v1462
    %1844 = vmatprep.subr.mxu0 0.0
    %1845 = vmatpush1.msra.mxu0 %v1463
    %1846 = vmatprep.subr.mxu0 0.0
    %1847 = vmatpush1.msra.mxu0 %v1464
    %1848 = vmatprep.subr.mxu0 0.0
    %1849 = vmatpush1.msra.mxu0 %v1465
    %1850 = vmatprep.subr.mxu0 0.0
    %1851 = vmatpush1.msra.mxu0 %v1466
    %1852 = vmatprep.subr.mxu0 0.0
    %1853 = vmatpush1.msra.mxu0 %v1467
    %1854 = vmatprep.subr.mxu0 0.0
    %1855 = vmatpush1.msra.mxu0 %v1468
    %1856 = vmatprep.subr.mxu0 0.0
    %1857 = vmatpush1.msra.mxu0 %v1469
    %1858 = vmatprep.subr.mxu0 0.0
    %1859 = vmatpush1.msra.mxu0 %v1470
    %1860 = vmatprep.subr.mxu0 0.0
    %1861 = vmatpush1.msra.mxu0 %v1471
    %1862 = vmatprep.subr.mxu0 0.0
    %1863 = vmatpush1.msra.mxu0 %v1472
    %1864 = vmatprep.subr.mxu0 0.0
    %1865 = vmatpush1.msra.mxu0 %v1473
    %1866 = vmatprep.subr.mxu0 0.0
    %1867 = vmatpush1.msra.mxu0 %v1474
    %1868 = vmatprep.subr.mxu0 0.0
    %1869 = vmatpush1.msra.mxu0 %v1475
    %1870 = vmatprep.subr.mxu0 0.0
    %1871 = vmatpush1.msra.mxu0 %v1476
    %1872 = vmatprep.subr.mxu0 0.0
    %1873 = vmatpush1.msra.mxu0 %v1477
    %1874 = vmatprep.subr.mxu0 0.0
    %1875 = vmatpush1.msra.mxu0 %v1478
    %1876 = vmatprep.subr.mxu0 0.0
    %1877 = vmatpush1.msra.mxu0 %v1479
    %1878 = vmatprep.subr.mxu0 0.0
    %1879 = vmatpush1.msra.mxu0 %v1480
    %1880 = vmatprep.subr.mxu0 0.0
    %1881 = vmatpush1.msra.mxu0 %v1481
    %1882 = vmatprep.subr.mxu0 0.0
    %1883 = vmatpush1.msra.mxu0 %v1482
    %1884 = vmatprep.subr.mxu0 0.0
    %1885 = vmatpush1.msra.mxu0 %v1483
    %1886 = vmatprep.subr.mxu0 0.0
    %1887 = vmatpush1.msra.mxu0 %v1484
    %1888 = vmatprep.mubr.f32.mxu0 %v1310
    %1889 = vmatmul.mubr.f32.gmra.mrb[0].mxu0 %v1309
    %v1890 = vpop.f32.mrb[0].mxu0
    %v1891 = vadd.f32 %v1816, %v1890
    %v1892 = vpop.f32.mrb[0].mxu0
    %1893 = vmatprep.mubr.f32.mxu0 %v1322
    %1894 = vmatmul.mubr.f32.gmra.mrb[0].mxu0 %v1321
    %v1895 = vpop.f32.mrb[0].mxu0
    %v1896 = vadd.f32 %v1821, %v1895
    %v1897 = vpop.f32.mrb[0].mxu0
    %1898 = vdwg.mxu0
    %1899 = vmatprep.subr.mxu0 0.0
    %1900 = vmatpush1.msra.mxu0 %v1485
    %1901 = vmatprep.subr.mxu0 0.0
    %1902 = vmatpush1.msra.mxu0 %v1486
    %1903 = vmatprep.subr.mxu0 0.0
    %1904 = vmatpush1.msra.mxu0 %v1487
    %1905 = vmatprep.subr.mxu0 0.0
    %1906 = vmatpush1.msra.mxu0 %v1488
    %1907 = vmatprep.subr.mxu0 0.0
    %1908 = vmatpush1.msra.mxu0 %v1489
    %1909 = vmatprep.subr.mxu0 0.0
    %1910 = vmatpush1.msra.mxu0 %v1490
    %1911 = vmatprep.subr.mxu0 0.0
    %1912 = vmatpush1.msra.mxu0 %v1491
    %1913 = vmatprep.subr.mxu0 0.0
    %1914 = vmatpush1.msra.mxu0 %v1492
    %1915 = vmatprep.subr.mxu0 0.0
    %1916 = vmatpush1.msra.mxu0 %v1493
    %1917 = vmatprep.subr.mxu0 0.0
    %1918 = vmatpush1.msra.mxu0 %v1494
    %1919 = vmatprep.subr.mxu0 0.0
    %1920 = vmatpush1.msra.mxu0 %v1495
    %1921 = vmatprep.subr.mxu0 0.0
    %1922 = vmatpush1.msra.mxu0 %v1496
    %1923 = vmatprep.subr.mxu0 0.0
    %1924 = vmatpush1.msra.mxu0 %v1497
    %1925 = vmatprep.subr.mxu0 0.0
    %1926 = vmatpush1.msra.mxu0 %v1498
    %1927 = vmatprep.subr.mxu0 0.0
    %1928 = vmatpush1.msra.mxu0 %v1499
    %1929 = vmatprep.subr.mxu0 0.0
    %1930 = vmatpush1.msra.mxu0 %v1500
    %1931 = vmatprep.subr.mxu0 0.0
    %1932 = vmatpush1.msra.mxu0 %v1501
    %1933 = vmatprep.subr.mxu0 0.0
    %1934 = vmatpush1.msra.mxu0 %v1502
    %1935 = vmatprep.subr.mxu0 0.0
    %1936 = vmatpush1.msra.mxu0 %v1503
    %1937 = vmatprep.subr.mxu0 0.0
    %1938 = vmatpush1.msra.mxu0 %v1504
    %1939 = vmatprep.subr.mxu0 0.0
    %1940 = vmatpush1.msra.mxu0 0.0
    %1941 = vmatprep.subr.mxu0 0.0
    %1942 = vmatpush1.msra.mxu0 0.0
    %1943 = vmatprep.subr.mxu0 0.0
    %1944 = vmatpush1.msra.mxu0 0.0
    %1945 = vmatprep.subr.mxu0 0.0
    %1946 = vmatpush1.msra.mxu0 0.0
    %1947 = vmatprep.subr.mxu0 0.0
    %1948 = vmatpush1.msra.mxu0 0.0
    %1949 = vmatprep.subr.mxu0 0.0
    %1950 = vmatpush1.msra.mxu0 0.0
    %1951 = vmatprep.subr.mxu0 0.0
    %1952 = vmatpush1.msra.mxu0 0.0
    %1953 = vmatprep.subr.mxu0 0.0
    %1954 = vmatpush1.msra.mxu0 0.0
    %1955 = vmatprep.subr.mxu0 0.0
    %1956 = vmatpush1.msra.mxu0 0.0
    %1957 = vmatprep.subr.mxu0 0.0
    %1958 = vmatpush1.msra.mxu0 0.0
    %1959 = vmatprep.subr.mxu0 0.0
    %1960 = vmatpush1.msra.mxu0 0.0
    %1961 = vmatprep.subr.mxu0 0.0
    %1962 = vmatpush1.msra.mxu0 0.0
    %1963 = vmatprep.mubr.f32.mxu0 %v1519
    %1964 = vmatmul.mubr.f32.gmra.mrb[0].mxu0 %v1311
    %v1965 = vpop.f32.mrb[0].mxu0
    %v1966 = vadd.f32 %v1891, %v1965
    %v1967 = vpop.f32.mrb[0].mxu0
    %1968 = vmatprep.mubr.f32.mxu0 %v1522
    %1969 = vmatmul.mubr.f32.gmra.mrb[0].mxu0 %v1323
    %v1970 = vpop.f32.mrb[0].mxu0
    %v1971 = vadd.f32 %v1896, %v1970
    %v1972 = vpop.f32.mrb[0].mxu0
    %1973 = vdwg.mxu0
    %vm1974 = vcmask 64512
    %1975 = vst.msk [vmem:[%s5] sm:$0xff] %vm1974, %v1966
    %1976 = vst.msk [vmem:[%s5 + $0x8] sm:$0xff] %vm1974, %v1971
    // Predicated region
    $region37: #{net_forward.1} parent=1 // pred_check
      _
    $region38: #{net_forward.1} parent=1 // pred_check_branch
      %1978 = sbr.rel (0) target = $region40
    $region39: #{net_forward.1} parent=1 // pred_region
      _
    $region40: #{net_forward.1} parent=1 // pred_fallthru
      _
    // Predicated region
    $region41: #{net_forward.1} parent=1 // pred_check
      _
    $region42: #{net_forward.1} parent=1 // pred_check_branch
      %1980 = sbr.rel (0) target = $region44
    $region43: #{net_forward.1} parent=1 // pred_region
      _
    $region44: #{net_forward.1} parent=1 // pred_fallthru
      _
    %1981 = vsyncpa [#allocation4], 1
    %1982 = vsyncpa [#allocation6], 1

</llo_original>
